<compile_context>
chip_gen: v7x
topology: tpu7x:2x2x1
jax: 0.10.0
libtpu: 0.0.40
codegen_flags: <defaults>
</compile_context>

<pallas_src>
import numpy as np
import jax
import jax.numpy as jnp
from jax import lax
from jax.experimental import pallas as pl
from jax.experimental.pallas import tpu as pltpu

LANE = 128       # lane tile for the small conv stages (cout <= 128: grid of 1)
TN_PROJ = 1024   # lane tile for the 2048-channel projection stage (grid of 2)


# -------------------- Pallas kernels --------------------

def _conv_bias_relu_kernel(p_ref, w_ref, b_ref, o_ref):
    # p: (Mpad, K) im2col patches; w: (K, TN) weights with BN scale folded in;
    # b: (1, TN) folded BN bias.  conv(bias=False)+BN+ReLU fused as one matmul.
    y = jnp.dot(p_ref[...], w_ref[...], preferred_element_type=jnp.float32)
    o_ref[...] = jnp.maximum(y + b_ref[...], 0.0)


def _proj_gap_kernel(p_ref, w_ref, b_ref, m_ref, o_ref):
    # Fused final 1x1 conv + BN + ReLU + global average pool.
    # m: (1, Mpad) row with 1/M on valid spatial rows and 0 on zero-padded
    # rows, so ReLU(bias) garbage on padded rows never pollutes the mean.
    y = jnp.dot(p_ref[...], w_ref[...], preferred_element_type=jnp.float32)
    y = jnp.maximum(y + b_ref[...], 0.0)
    # Spatial reduction as an MXU dot (keeps it off the cross-sublane XLU).
    o_ref[...] = jnp.dot(m_ref[...], y, preferred_element_type=jnp.float32)


# -------------------- wrappers --------------------

def _im2col(x, kh, kw, stride, pad):
    """x: (H, W, C) -> patches (Ho*Wo, kh*kw*C), ordered (kh, kw, C)."""
    H, W, C = x.shape
    xp = jnp.pad(x, ((pad, pad), (pad, pad), (0, 0)))
    Ho = (H + 2 * pad - kh) // stride + 1
    Wo = (W + 2 * pad - kw) // stride + 1
    cols = []
    for i in range(kh):
        for j in range(kw):
            cols.append(xp[i:i + stride * Ho:stride,
                           j:j + stride * Wo:stride, :])
    patches = jnp.concatenate(cols, axis=-1).reshape(Ho * Wo, kh * kw * C)
    return patches, Ho, Wo


def conv_bn_relu(x, params, stride=1, pad=0):
    """BasicConv2d: conv(bias=False) + BatchNorm(eps=1e-3) + ReLU (BN folded)."""
    w, bias = params                 # w: (kh, kw, Cin, Cout), scale pre-folded
    kh, kw, cin, cout = w.shape
    patches, Ho, Wo = _im2col(x, kh, kw, stride, pad)
    M, K = patches.shape
    Mpad = -(-M // 8) * 8
    Npad = -(-cout // LANE) * LANE
    patches = jnp.pad(patches, ((0, Mpad - M), (0, 0)))
    w_mat = jnp.pad(w.reshape(K, cout), ((0, 0), (0, Npad - cout)))
    b_mat = jnp.pad(bias.reshape(1, cout), ((0, 0), (0, Npad - cout)))

    out = pl.pallas_call(
        _conv_bias_relu_kernel,
        out_shape=jax.ShapeDtypeStruct((Mpad, Npad), jnp.float32),
        grid_spec=pltpu.PrefetchScalarGridSpec(
            num_scalar_prefetch=0,
            grid=(Npad // LANE,),                # 1 step for all small convs
            in_specs=[
                pl.BlockSpec((Mpad, K), lambda j: (0, 0)),
                pl.BlockSpec((K, LANE), lambda j: (0, j)),
                pl.BlockSpec((1, LANE), lambda j: (0, j)),
            ],
            out_specs=pl.BlockSpec((Mpad, LANE), lambda j: (0, j)),
        ),
        compiler_params=pltpu.CompilerParams(
            dimension_semantics=("parallel",)),
    )(patches, w_mat, b_mat)
    return out[:M, :cout].reshape(Ho, Wo, cout)


def proj_gap(x, params, tn=TN_PROJ):
    """Fused 1x1 projection conv + BN + ReLU + AdaptiveAvgPool2d(1) -> (Cout,)."""
    w, bias = params                 # w: (1, 1, Cin, Cout)
    _, _, cin, cout = w.shape
    H, W, C = x.shape
    M = H * W
    Mpad = -(-M // 8) * 8
    Npad = -(-cout // tn) * tn
    patches = jnp.pad(x.reshape(M, C), ((0, Mpad - M), (0, 0)))
    w_mat = jnp.pad(w.reshape(cin, cout), ((0, 0), (0, Npad - cout)))
    b_mat = jnp.pad(bias.reshape(1, cout), ((0, 0), (0, Npad - cout)))
    # scaled mask row: 1/M on valid rows, 0 on padded rows (constant under jit)
    mask = ((jnp.arange(Mpad) < M).astype(jnp.float32) / M).reshape(1, Mpad)

    out = pl.pallas_call(
        _proj_gap_kernel,
        out_shape=jax.ShapeDtypeStruct((1, Npad), jnp.float32),
        grid_spec=pltpu.PrefetchScalarGridSpec(
            num_scalar_prefetch=0,
            grid=(Npad // tn,),                  # 2 parallel steps (v7x: 2 TCs)
            in_specs=[
                pl.BlockSpec((Mpad, cin), lambda j: (0, 0)),
                pl.BlockSpec((cin, tn), lambda j: (0, j)),
                pl.BlockSpec((1, tn), lambda j: (0, j)),
                pl.BlockSpec((1, Mpad), lambda j: (0, 0)),
            ],
            out_specs=pl.BlockSpec((1, tn), lambda j: (0, j)),
        ),
        compiler_params=pltpu.CompilerParams(
            dimension_semantics=("parallel",)),
    )(patches, w_mat, b_mat, mask)
    return out[0, :cout]


# Pooling glue (tiny, not a hot path): plain lax.reduce_window.
def max_pool_3x3_s2(x):
    return lax.reduce_window(x, -jnp.inf, lax.max, (3, 3, 1), (2, 2, 1), "VALID")


def avg_pool_3x3_s1_p1(x):
    s = lax.reduce_window(x, 0.0, lax.add, (3, 3, 1), (1, 1, 1),
                          ((1, 1), (1, 1), (0, 0)))
    return s / 9.0  # count_include_pad=True, as in torch AvgPool2d default


# -------------------- parameters --------------------

def make_conv_bn(key, kh, kw, cin, cout):
    k1, k2, k3, k4, k5 = jax.random.split(key, 5)
    w = jax.random.normal(k1, (kh, kw, cin, cout), jnp.float32)
    w = w * (1.0 / np.sqrt(kh * kw * cin))
    gamma = 1.0 + 0.1 * jax.random.normal(k2, (cout,), jnp.float32)
    beta = 0.1 * jax.random.normal(k3, (cout,), jnp.float32)
    mean = 0.1 * jax.random.normal(k4, (cout,), jnp.float32)
    var = jnp.abs(jax.random.normal(k5, (cout,), jnp.float32)) + 0.5
    eps = 1e-3                       # BatchNorm2d(eps=0.001) in BasicConv2d
    scale = gamma / jnp.sqrt(var + eps)
    bias = beta - mean * scale
    # Fold BN scale into the conv weights: conv+BN == patches @ (w*scale) + bias
    return (w * scale, bias)


def make_params(key):
    ks = jax.random.split(key, 10)
    # three shared-input 1x1 branch convs merged along the output-channel axis
    b1 = make_conv_bn(ks[2], 1, 1, 16, 8)
    b2 = make_conv_bn(ks[3], 1, 1, 16, 6)
    b3 = make_conv_bn(ks[5], 1, 1, 16, 8)
    return {
        "conv1":    make_conv_bn(ks[0], 3, 3, 3, 8),     # stem, stride 2
        "conv2":    make_conv_bn(ks[1], 3, 3, 8, 16),    # stem, pad 1
        "b123_1x1": (jnp.concatenate([b1[0], b2[0], b3[0]], axis=-1),
                     jnp.concatenate([b1[1], b2[1], b3[1]], axis=-1)),
        "b2_5x5":   make_conv_bn(ks[4], 5, 5, 6, 8),
        "b3_3x3a":  make_conv_bn(ks[6], 3, 3, 8, 12),
        "b3_3x3b":  make_conv_bn(ks[7], 3, 3, 12, 12),
        "b4_1x1":   make_conv_bn(ks[8], 1, 1, 16, 4),
        "proj":     make_conv_bn(ks[9], 1, 1, 32, 2048),  # final 2048-ch stage
    }


# -------------------- forward --------------------

def inception_features(img_u8, params):
    # TODO(synk): PIL resize(299)/centercrop(299) and pretrained inception_v3
    # weights have no Pallas equivalent; normalization + synthetic trunk only.
    x = img_u8.astype(jnp.float32) / 255.0
    mean = jnp.array([0.485, 0.456, 0.406], jnp.float32)
    std = jnp.array([0.229, 0.224, 0.225], jnp.float32)
    x = (x - mean) / std

    # stem
    x = conv_bn_relu(x, params["conv1"], stride=2, pad=0)   # 15x15x8
    x = conv_bn_relu(x, params["conv2"], stride=1, pad=1)   # 15x15x16
    x = max_pool_3x3_s2(x)                                  # 7x7x16

    # inception mixed block (InceptionA-style, 4 branches)
    # the three 1x1 convs on the shared input run as one fused matmul (22 ch)
    b123 = conv_bn_relu(x, params["b123_1x1"], 1, 0)        # 7x7x22
    b1 = b123[..., 0:8]
    b2 = conv_bn_relu(b123[..., 8:14], params["b2_5x5"], 1, 2)
    b3 = conv_bn_relu(b123[..., 14:22], params["b3_3x3a"], 1, 1)
    b3 = conv_bn_relu(b3, params["b3_3x3b"], 1, 1)
    b4 = avg_pool_3x3_s1_p1(x)
    b4 = conv_bn_relu(b4, params["b4_1x1"], 1, 0)
    x = jnp.concatenate([b1, b2, b3, b4], axis=-1)          # 7x7x32

    # fused final 2048-channel 1x1 conv + global average pool (feat.squeeze())
    feat = proj_gap(x, params["proj"])                      # (2048,)
    return feat


if __name__ == "__main__":
    key = jax.random.PRNGKey(0)
    k_img, k_par = jax.random.split(key)
    img = jax.random.randint(k_img, (32, 32, 3), 0, 256, dtype=jnp.int32)
    img = img.astype(jnp.uint8)                              # HWC uint8 image
    params = make_params(k_par)

    feat = jax.jit(inception_features)(img, params)
    feat = jax.block_until_ready(feat)

    assert feat.shape == (2048,), f"Invalid feature shape {feat.shape}"
    assert feat.dtype == jnp.float32
    assert bool(jnp.all(jnp.isfinite(feat)))
    print("KERNEL_OK")
</pallas_src>

<mosaic_0001>
module attributes {stable_mosaic.version = 11 : i64} {
  func.func @_conv_bias_relu_kernel(%arg0: i32, %arg1: memref<232x27xf32, #tpu.memory_space<vmem>>, %arg2: memref<27x128xf32, #tpu.memory_space<vmem>>, %arg3: memref<1x128xf32, #tpu.memory_space<vmem>>, %arg4: memref<232x128xf32, #tpu.memory_space<vmem>>) attributes {dimension_semantics = [#tpu.dimension_semantics<parallel>], iteration_bounds = array<i64: 1>, scalar_prefetch = 0 : i64, scratch_operands = 0 : i64, tpu.core_type = #tpu.core_type<tc>, window_params = [{pipeline_mode = #tpu.pipeline_mode<synchronous>, transform_indices = @transform_0, window_bounds = array<i64: 232, 27>}, {transform_indices = @transform_1, window_bounds = array<i64: 27, 128>}, {transform_indices = @transform_2, window_bounds = array<i64: 1, 128>}, {transform_indices = @transform_3, window_bounds = array<i64: 232, 128>}]} {
    %c0 = arith.constant 0 : index
    %c0_0 = arith.constant 0 : index
    %0 = vector.load %arg1[%c0, %c0_0] : memref<232x27xf32, #tpu.memory_space<vmem>>, vector<232x27xf32>
    %c0_1 = arith.constant 0 : index
    %c0_2 = arith.constant 0 : index
    %1 = vector.load %arg2[%c0_1, %c0_2] : memref<27x128xf32, #tpu.memory_space<vmem>>, vector<27x128xf32>
    %cst = arith.constant dense<0.000000e+00> : vector<232x128xf32>
    %2 = tpu.matmul %0, %1, %cst {dimension_numbers = #tpu.dot_dimension_numbers<[1], [0], [0], [1], [0, 0, 1, 1], [], []>} : vector<232x27xf32>, vector<27x128xf32>, vector<232x128xf32> -> vector<232x128xf32>
    %c0_3 = arith.constant 0 : index
    %c0_4 = arith.constant 0 : index
    %3 = vector.load %arg3[%c0_3, %c0_4] : memref<1x128xf32, #tpu.memory_space<vmem>>, vector<1x128xf32>
    %4 = vector.broadcast %3 : vector<1x128xf32> to vector<232x128xf32>
    %5 = arith.addf %2, %4 : vector<232x128xf32>
    %cst_5 = arith.constant 0.000000e+00 : f32
    %6 = vector.broadcast %cst_5 : f32 to vector<232x128xf32>
    %7 = arith.maximumf %5, %6 : vector<232x128xf32>
    %c0_6 = arith.constant 0 : index
    %c0_7 = arith.constant 0 : index
    %8 = vector.load %arg4[%c0_6, %c0_7] : memref<232x128xf32, #tpu.memory_space<vmem>>, vector<232x128xf32>
    tpu.vector_store %arg4[%c0_6, %c0_7], %7 {strides = array<i32>} : memref<232x128xf32, #tpu.memory_space<vmem>>, vector<232x128xf32>,
    return
  }
  func.func @transform_0(%arg0: i32) -> (i32, i32) {
    %c0_i32 = arith.constant 0 : i32
    %c0_i32_0 = arith.constant 0 : i32
    %c0_i32_1 = arith.constant 0 : i32
    return %c0_i32, %c0_i32_0 : i32, i32
  }
  func.func @transform_1(%arg0: i32) -> (i32, i32) {
    %c0_i32 = arith.constant 0 : i32
    %c0_i32_0 = arith.constant 0 : i32
    return %c0_i32, %arg0 : i32, i32
  }
  func.func @transform_2(%arg0: i32) -> (i32, i32) {
    %c0_i32 = arith.constant 0 : i32
    %c0_i32_0 = arith.constant 0 : i32
    return %c0_i32, %arg0 : i32, i32
  }
  func.func @transform_3(%arg0: i32) -> (i32, i32) {
    %c0_i32 = arith.constant 0 : i32
    %c0_i32_0 = arith.constant 0 : i32
    return %c0_i32, %arg0 : i32, i32
  }
}

module attributes {stable_mosaic.version = 11 : i64} {
  func.func @_conv_bias_relu_kernel(%arg0: i32, %arg1: memref<232x72xf32, #tpu.memory_space<vmem>>, %arg2: memref<72x128xf32, #tpu.memory_space<vmem>>, %arg3: memref<1x128xf32, #tpu.memory_space<vmem>>, %arg4: memref<232x128xf32, #tpu.memory_space<vmem>>) attributes {dimension_semantics = [#tpu.dimension_semantics<parallel>], iteration_bounds = array<i64: 1>, scalar_prefetch = 0 : i64, scratch_operands = 0 : i64, tpu.core_type = #tpu.core_type<tc>, window_params = [{pipeline_mode = #tpu.pipeline_mode<synchronous>, transform_indices = @transform_0, window_bounds = array<i64: 232, 72>}, {transform_indices = @transform_1, window_bounds = array<i64: 72, 128>}, {transform_indices = @transform_2, window_bounds = array<i64: 1, 128>}, {transform_indices = @transform_3, window_bounds = array<i64: 232, 128>}]} {
    %c0 = arith.constant 0 : index
    %c0_0 = arith.constant 0 : index
    %0 = vector.load %arg1[%c0, %c0_0] : memref<232x72xf32, #tpu.memory_space<vmem>>, vector<232x72xf32>
    %c0_1 = arith.constant 0 : index
    %c0_2 = arith.constant 0 : index
    %1 = vector.load %arg2[%c0_1, %c0_2] : memref<72x128xf32, #tpu.memory_space<vmem>>, vector<72x128xf32>
    %cst = arith.constant dense<0.000000e+00> : vector<232x128xf32>
    %2 = tpu.matmul %0, %1, %cst {dimension_numbers = #tpu.dot_dimension_numbers<[1], [0], [0], [1], [0, 0, 1, 1], [], []>} : vector<232x72xf32>, vector<72x128xf32>, vector<232x128xf32> -> vector<232x128xf32>
    %c0_3 = arith.constant 0 : index
    %c0_4 = arith.constant 0 : index
    %3 = vector.load %arg3[%c0_3, %c0_4] : memref<1x128xf32, #tpu.memory_space<vmem>>, vector<1x128xf32>
    %4 = vector.broadcast %3 : vector<1x128xf32> to vector<232x128xf32>
    %5 = arith.addf %2, %4 : vector<232x128xf32>
    %cst_5 = arith.constant 0.000000e+00 : f32
    %6 = vector.broadcast %cst_5 : f32 to vector<232x128xf32>
    %7 = arith.maximumf %5, %6 : vector<232x128xf32>
    %c0_6 = arith.constant 0 : index
    %c0_7 = arith.constant 0 : index
    %8 = vector.load %arg4[%c0_6, %c0_7] : memref<232x128xf32, #tpu.memory_space<vmem>>, vector<232x128xf32>
    tpu.vector_store %arg4[%c0_6, %c0_7], %7 {strides = array<i32>} : memref<232x128xf32, #tpu.memory_space<vmem>>, vector<232x128xf32>,
    return
  }
  func.func @transform_0(%arg0: i32) -> (i32, i32) {
    %c0_i32 = arith.constant 0 : i32
    %c0_i32_0 = arith.constant 0 : i32
    %c0_i32_1 = arith.constant 0 : i32
    return %c0_i32, %c0_i32_0 : i32, i32
  }
  func.func @transform_1(%arg0: i32) -> (i32, i32) {
    %c0_i32 = arith.constant 0 : i32
    %c0_i32_0 = arith.constant 0 : i32
    return %c0_i32, %arg0 : i32, i32
  }
  func.func @transform_2(%arg0: i32) -> (i32, i32) {
    %c0_i32 = arith.constant 0 : i32
    %c0_i32_0 = arith.constant 0 : i32
    return %c0_i32, %arg0 : i32, i32
  }
  func.func @transform_3(%arg0: i32) -> (i32, i32) {
    %c0_i32 = arith.constant 0 : i32
    %c0_i32_0 = arith.constant 0 : i32
    return %c0_i32, %arg0 : i32, i32
  }
}

module attributes {stable_mosaic.version = 11 : i64} {
  func.func @_conv_bias_relu_kernel(%arg0: i32, %arg1: memref<56x16xf32, #tpu.memory_space<vmem>>, %arg2: memref<16x128xf32, #tpu.memory_space<vmem>>, %arg3: memref<1x128xf32, #tpu.memory_space<vmem>>, %arg4: memref<56x128xf32, #tpu.memory_space<vmem>>) attributes {dimension_semantics = [#tpu.dimension_semantics<parallel>], iteration_bounds = array<i64: 1>, scalar_prefetch = 0 : i64, scratch_operands = 0 : i64, tpu.core_type = #tpu.core_type<tc>, window_params = [{pipeline_mode = #tpu.pipeline_mode<synchronous>, transform_indices = @transform_0, window_bounds = array<i64: 56, 16>}, {transform_indices = @transform_1, window_bounds = array<i64: 16, 128>}, {transform_indices = @transform_2, window_bounds = array<i64: 1, 128>}, {transform_indices = @transform_3, window_bounds = array<i64: 56, 128>}]} {
    %c0 = arith.constant 0 : index
    %c0_0 = arith.constant 0 : index
    %0 = vector.load %arg1[%c0, %c0_0] : memref<56x16xf32, #tpu.memory_space<vmem>>, vector<56x16xf32>
    %c0_1 = arith.constant 0 : index
    %c0_2 = arith.constant 0 : index
    %1 = vector.load %arg2[%c0_1, %c0_2] : memref<16x128xf32, #tpu.memory_space<vmem>>, vector<16x128xf32>
    %cst = arith.constant dense<0.000000e+00> : vector<56x128xf32>
    %2 = tpu.matmul %0, %1, %cst {dimension_numbers = #tpu.dot_dimension_numbers<[1], [0], [0], [1], [0, 0, 1, 1], [], []>} : vector<56x16xf32>, vector<16x128xf32>, vector<56x128xf32> -> vector<56x128xf32>
    %c0_3 = arith.constant 0 : index
    %c0_4 = arith.constant 0 : index
    %3 = vector.load %arg3[%c0_3, %c0_4] : memref<1x128xf32, #tpu.memory_space<vmem>>, vector<1x128xf32>
    %4 = vector.broadcast %3 : vector<1x128xf32> to vector<56x128xf32>
    %5 = arith.addf %2, %4 : vector<56x128xf32>
    %cst_5 = arith.constant 0.000000e+00 : f32
    %6 = vector.broadcast %cst_5 : f32 to vector<56x128xf32>
    %7 = arith.maximumf %5, %6 : vector<56x128xf32>
    %c0_6 = arith.constant 0 : index
    %c0_7 = arith.constant 0 : index
    %8 = vector.load %arg4[%c0_6, %c0_7] : memref<56x128xf32, #tpu.memory_space<vmem>>, vector<56x128xf32>
    tpu.vector_store %arg4[%c0_6, %c0_7], %7 {strides = array<i32>} : memref<56x128xf32, #tpu.memory_space<vmem>>, vector<56x128xf32>,
    return
  }
  func.func @transform_0(%arg0: i32) -> (i32, i32) {
    %c0_i32 = arith.constant 0 : i32
    %c0_i32_0 = arith.constant 0 : i32
    %c0_i32_1 = arith.constant 0 : i32
    return %c0_i32, %c0_i32_0 : i32, i32
  }
  func.func @transform_1(%arg0: i32) -> (i32, i32) {
    %c0_i32 = arith.constant 0 : i32
    %c0_i32_0 = arith.constant 0 : i32
    return %c0_i32, %arg0 : i32, i32
  }
  func.func @transform_2(%arg0: i32) -> (i32, i32) {
    %c0_i32 = arith.constant 0 : i32
    %c0_i32_0 = arith.constant 0 : i32
    return %c0_i32, %arg0 : i32, i32
  }
  func.func @transform_3(%arg0: i32) -> (i32, i32) {
    %c0_i32 = arith.constant 0 : i32
    %c0_i32_0 = arith.constant 0 : i32
    return %c0_i32, %arg0 : i32, i32
  }
}

module attributes {stable_mosaic.version = 11 : i64} {
  func.func @_conv_bias_relu_kernel(%arg0: i32, %arg1: memref<56x150xf32, #tpu.memory_space<vmem>>, %arg2: memref<150x128xf32, #tpu.memory_space<vmem>>, %arg3: memref<1x128xf32, #tpu.memory_space<vmem>>, %arg4: memref<56x128xf32, #tpu.memory_space<vmem>>) attributes {dimension_semantics = [#tpu.dimension_semantics<parallel>], iteration_bounds = array<i64: 1>, scalar_prefetch = 0 : i64, scratch_operands = 0 : i64, tpu.core_type = #tpu.core_type<tc>, window_params = [{pipeline_mode = #tpu.pipeline_mode<synchronous>, transform_indices = @transform_0, window_bounds = array<i64: 56, 150>}, {transform_indices = @transform_1, window_bounds = array<i64: 150, 128>}, {transform_indices = @transform_2, window_bounds = array<i64: 1, 128>}, {transform_indices = @transform_3, window_bounds = array<i64: 56, 128>}]} {
    %c0 = arith.constant 0 : index
    %c0_0 = arith.constant 0 : index
    %0 = vector.load %arg1[%c0, %c0_0] : memref<56x150xf32, #tpu.memory_space<vmem>>, vector<56x150xf32>
    %c0_1 = arith.constant 0 : index
    %c0_2 = arith.constant 0 : index
    %1 = vector.load %arg2[%c0_1, %c0_2] : memref<150x128xf32, #tpu.memory_space<vmem>>, vector<150x128xf32>
    %cst = arith.constant dense<0.000000e+00> : vector<56x128xf32>
    %2 = tpu.matmul %0, %1, %cst {dimension_numbers = #tpu.dot_dimension_numbers<[1], [0], [0], [1], [0, 0, 1, 1], [], []>} : vector<56x150xf32>, vector<150x128xf32>, vector<56x128xf32> -> vector<56x128xf32>
    %c0_3 = arith.constant 0 : index
    %c0_4 = arith.constant 0 : index
    %3 = vector.load %arg3[%c0_3, %c0_4] : memref<1x128xf32, #tpu.memory_space<vmem>>, vector<1x128xf32>
    %4 = vector.broadcast %3 : vector<1x128xf32> to vector<56x128xf32>
    %5 = arith.addf %2, %4 : vector<56x128xf32>
    %cst_5 = arith.constant 0.000000e+00 : f32
    %6 = vector.broadcast %cst_5 : f32 to vector<56x128xf32>
    %7 = arith.maximumf %5, %6 : vector<56x128xf32>
    %c0_6 = arith.constant 0 : index
    %c0_7 = arith.constant 0 : index
    %8 = vector.load %arg4[%c0_6, %c0_7] : memref<56x128xf32, #tpu.memory_space<vmem>>, vector<56x128xf32>
    tpu.vector_store %arg4[%c0_6, %c0_7], %7 {strides = array<i32>} : memref<56x128xf32, #tpu.memory_space<vmem>>, vector<56x128xf32>,
    return
  }
  func.func @transform_0(%arg0: i32) -> (i32, i32) {
    %c0_i32 = arith.constant 0 : i32
    %c0_i32_0 = arith.constant 0 : i32
    %c0_i32_1 = arith.constant 0 : i32
    return %c0_i32, %c0_i32_0 : i32, i32
  }
  func.func @transform_1(%arg0: i32) -> (i32, i32) {
    %c0_i32 = arith.constant 0 : i32
    %c0_i32_0 = arith.constant 0 : i32
    return %c0_i32, %arg0 : i32, i32
  }
  func.func @transform_2(%arg0: i32) -> (i32, i32) {
    %c0_i32 = arith.constant 0 : i32
    %c0_i32_0 = arith.constant 0 : i32
    return %c0_i32, %arg0 : i32, i32
  }
  func.func @transform_3(%arg0: i32) -> (i32, i32) {
    %c0_i32 = arith.constant 0 : i32
    %c0_i32_0 = arith.constant 0 : i32
    return %c0_i32, %arg0 : i32, i32
  }
}

module attributes {stable_mosaic.version = 11 : i64} {
  func.func @_conv_bias_relu_kernel(%arg0: i32, %arg1: memref<56x72xf32, #tpu.memory_space<vmem>>, %arg2: memref<72x128xf32, #tpu.memory_space<vmem>>, %arg3: memref<1x128xf32, #tpu.memory_space<vmem>>, %arg4: memref<56x128xf32, #tpu.memory_space<vmem>>) attributes {dimension_semantics = [#tpu.dimension_semantics<parallel>], iteration_bounds = array<i64: 1>, scalar_prefetch = 0 : i64, scratch_operands = 0 : i64, tpu.core_type = #tpu.core_type<tc>, window_params = [{pipeline_mode = #tpu.pipeline_mode<synchronous>, transform_indices = @transform_0, window_bounds = array<i64: 56, 72>}, {transform_indices = @transform_1, window_bounds = array<i64: 72, 128>}, {transform_indices = @transform_2, window_bounds = array<i64: 1, 128>}, {transform_indices = @transform_3, window_bounds = array<i64: 56, 128>}]} {
    %c0 = arith.constant 0 : index
    %c0_0 = arith.constant 0 : index
    %0 = vector.load %arg1[%c0, %c0_0] : memref<56x72xf32, #tpu.memory_space<vmem>>, vector<56x72xf32>
    %c0_1 = arith.constant 0 : index
    %c0_2 = arith.constant 0 : index
    %1 = vector.load %arg2[%c0_1, %c0_2] : memref<72x128xf32, #tpu.memory_space<vmem>>, vector<72x128xf32>
    %cst = arith.constant dense<0.000000e+00> : vector<56x128xf32>
    %2 = tpu.matmul %0, %1, %cst {dimension_numbers = #tpu.dot_dimension_numbers<[1], [0], [0], [1], [0, 0, 1, 1], [], []>} : vector<56x72xf32>, vector<72x128xf32>, vector<56x128xf32> -> vector<56x128xf32>
    %c0_3 = arith.constant 0 : index
    %c0_4 = arith.constant 0 : index
    %3 = vector.load %arg3[%c0_3, %c0_4] : memref<1x128xf32, #tpu.memory_space<vmem>>, vector<1x128xf32>
    %4 = vector.broadcast %3 : vector<1x128xf32> to vector<56x128xf32>
    %5 = arith.addf %2, %4 : vector<56x128xf32>
    %cst_5 = arith.constant 0.000000e+00 : f32
    %6 = vector.broadcast %cst_5 : f32 to vector<56x128xf32>
    %7 = arith.maximumf %5, %6 : vector<56x128xf32>
    %c0_6 = arith.constant 0 : index
    %c0_7 = arith.constant 0 : index
    %8 = vector.load %arg4[%c0_6, %c0_7] : memref<56x128xf32, #tpu.memory_space<vmem>>, vector<56x128xf32>
    tpu.vector_store %arg4[%c0_6, %c0_7], %7 {strides = array<i32>} : memref<56x128xf32, #tpu.memory_space<vmem>>, vector<56x128xf32>,
    return
  }
  func.func @transform_0(%arg0: i32) -> (i32, i32) {
    %c0_i32 = arith.constant 0 : i32
    %c0_i32_0 = arith.constant 0 : i32
    %c0_i32_1 = arith.constant 0 : i32
    return %c0_i32, %c0_i32_0 : i32, i32
  }
  func.func @transform_1(%arg0: i32) -> (i32, i32) {
    %c0_i32 = arith.constant 0 : i32
    %c0_i32_0 = arith.constant 0 : i32
    return %c0_i32, %arg0 : i32, i32
  }
  func.func @transform_2(%arg0: i32) -> (i32, i32) {
    %c0_i32 = arith.constant 0 : i32
    %c0_i32_0 = arith.constant 0 : i32
    return %c0_i32, %arg0 : i32, i32
  }
  func.func @transform_3(%arg0: i32) -> (i32, i32) {
    %c0_i32 = arith.constant 0 : i32
    %c0_i32_0 = arith.constant 0 : i32
    return %c0_i32, %arg0 : i32, i32
  }
}

module attributes {stable_mosaic.version = 11 : i64} {
  func.func @_conv_bias_relu_kernel(%arg0: i32, %arg1: memref<56x108xf32, #tpu.memory_space<vmem>>, %arg2: memref<108x128xf32, #tpu.memory_space<vmem>>, %arg3: memref<1x128xf32, #tpu.memory_space<vmem>>, %arg4: memref<56x128xf32, #tpu.memory_space<vmem>>) attributes {dimension_semantics = [#tpu.dimension_semantics<parallel>], iteration_bounds = array<i64: 1>, scalar_prefetch = 0 : i64, scratch_operands = 0 : i64, tpu.core_type = #tpu.core_type<tc>, window_params = [{pipeline_mode = #tpu.pipeline_mode<synchronous>, transform_indices = @transform_0, window_bounds = array<i64: 56, 108>}, {transform_indices = @transform_1, window_bounds = array<i64: 108, 128>}, {transform_indices = @transform_2, window_bounds = array<i64: 1, 128>}, {transform_indices = @transform_3, window_bounds = array<i64: 56, 128>}]} {
    %c0 = arith.constant 0 : index
    %c0_0 = arith.constant 0 : index
    %0 = vector.load %arg1[%c0, %c0_0] : memref<56x108xf32, #tpu.memory_space<vmem>>, vector<56x108xf32>
    %c0_1 = arith.constant 0 : index
    %c0_2 = arith.constant 0 : index
    %1 = vector.load %arg2[%c0_1, %c0_2] : memref<108x128xf32, #tpu.memory_space<vmem>>, vector<108x128xf32>
    %cst = arith.constant dense<0.000000e+00> : vector<56x128xf32>
    %2 = tpu.matmul %0, %1, %cst {dimension_numbers = #tpu.dot_dimension_numbers<[1], [0], [0], [1], [0, 0, 1, 1], [], []>} : vector<56x108xf32>, vector<108x128xf32>, vector<56x128xf32> -> vector<56x128xf32>
    %c0_3 = arith.constant 0 : index
    %c0_4 = arith.constant 0 : index
    %3 = vector.load %arg3[%c0_3, %c0_4] : memref<1x128xf32, #tpu.memory_space<vmem>>, vector<1x128xf32>
    %4 = vector.broadcast %3 : vector<1x128xf32> to vector<56x128xf32>
    %5 = arith.addf %2, %4 : vector<56x128xf32>
    %cst_5 = arith.constant 0.000000e+00 : f32
    %6 = vector.broadcast %cst_5 : f32 to vector<56x128xf32>
    %7 = arith.maximumf %5, %6 : vector<56x128xf32>
    %c0_6 = arith.constant 0 : index
    %c0_7 = arith.constant 0 : index
    %8 = vector.load %arg4[%c0_6, %c0_7] : memref<56x128xf32, #tpu.memory_space<vmem>>, vector<56x128xf32>
    tpu.vector_store %arg4[%c0_6, %c0_7], %7 {strides = array<i32>} : memref<56x128xf32, #tpu.memory_space<vmem>>, vector<56x128xf32>,
    return
  }
  func.func @transform_0(%arg0: i32) -> (i32, i32) {
    %c0_i32 = arith.constant 0 : i32
    %c0_i32_0 = arith.constant 0 : i32
    %c0_i32_1 = arith.constant 0 : i32
    return %c0_i32, %c0_i32_0 : i32, i32
  }
  func.func @transform_1(%arg0: i32) -> (i32, i32) {
    %c0_i32 = arith.constant 0 : i32
    %c0_i32_0 = arith.constant 0 : i32
    return %c0_i32, %arg0 : i32, i32
  }
  func.func @transform_2(%arg0: i32) -> (i32, i32) {
    %c0_i32 = arith.constant 0 : i32
    %c0_i32_0 = arith.constant 0 : i32
    return %c0_i32, %arg0 : i32, i32
  }
  func.func @transform_3(%arg0: i32) -> (i32, i32) {
    %c0_i32 = arith.constant 0 : i32
    %c0_i32_0 = arith.constant 0 : i32
    return %c0_i32, %arg0 : i32, i32
  }
}

module attributes {stable_mosaic.version = 11 : i64} {
  func.func @_proj_gap_kernel(%arg0: i32, %arg1: memref<56x32xf32, #tpu.memory_space<vmem>>, %arg2: memref<32x1024xf32, #tpu.memory_space<vmem>>, %arg3: memref<1x1024xf32, #tpu.memory_space<vmem>>, %arg4: memref<1x56xf32, #tpu.memory_space<vmem>>, %arg5: memref<1x1024xf32, #tpu.memory_space<vmem>>) attributes {dimension_semantics = [#tpu.dimension_semantics<parallel>], iteration_bounds = array<i64: 2>, scalar_prefetch = 0 : i64, scratch_operands = 0 : i64, tpu.core_type = #tpu.core_type<tc>, window_params = [{pipeline_mode = #tpu.pipeline_mode<synchronous>, transform_indices = @transform_0, window_bounds = array<i64: 56, 32>}, {transform_indices = @transform_1, window_bounds = array<i64: 32, 1024>}, {transform_indices = @transform_2, window_bounds = array<i64: 1, 1024>}, {pipeline_mode = #tpu.pipeline_mode<synchronous>, transform_indices = @transform_3, window_bounds = array<i64: 1, 56>}, {transform_indices = @transform_4, window_bounds = array<i64: 1, 1024>}]} {
    %c0 = arith.constant 0 : index
    %c0_0 = arith.constant 0 : index
    %0 = vector.load %arg1[%c0, %c0_0] : memref<56x32xf32, #tpu.memory_space<vmem>>, vector<56x32xf32>
    %c0_1 = arith.constant 0 : index
    %c0_2 = arith.constant 0 : index
    %1 = vector.load %arg2[%c0_1, %c0_2] : memref<32x1024xf32, #tpu.memory_space<vmem>>, vector<32x1024xf32>
    %cst = arith.constant dense<0.000000e+00> : vector<56x1024xf32>
    %2 = tpu.matmul %0, %1, %cst {dimension_numbers = #tpu.dot_dimension_numbers<[1], [0], [0], [1], [0, 0, 1, 1], [], []>} : vector<56x32xf32>, vector<32x1024xf32>, vector<56x1024xf32> -> vector<56x1024xf32>
    %c0_3 = arith.constant 0 : index
    %c0_4 = arith.constant 0 : index
    %3 = vector.load %arg3[%c0_3, %c0_4] : memref<1x1024xf32, #tpu.memory_space<vmem>>, vector<1x1024xf32>
    %4 = vector.broadcast %3 : vector<1x1024xf32> to vector<56x1024xf32>
    %5 = arith.addf %2, %4 : vector<56x1024xf32>
    %cst_5 = arith.constant 0.000000e+00 : f32
    %6 = vector.broadcast %cst_5 : f32 to vector<56x1024xf32>
    %7 = arith.maximumf %5, %6 : vector<56x1024xf32>
    %c0_6 = arith.constant 0 : index
    %c0_7 = arith.constant 0 : index
    %8 = vector.load %arg4[%c0_6, %c0_7] : memref<1x56xf32, #tpu.memory_space<vmem>>, vector<1x56xf32>
    %cst_8 = arith.constant dense<0.000000e+00> : vector<1x1024xf32>
    %9 = tpu.matmul %8, %7, %cst_8 {dimension_numbers = #tpu.dot_dimension_numbers<[1], [0], [0], [1], [0, 0, 1, 1], [], []>} : vector<1x56xf32>, vector<56x1024xf32>, vector<1x1024xf32> -> vector<1x1024xf32>
    %c0_9 = arith.constant 0 : index
    %c0_10 = arith.constant 0 : index
    %10 = vector.load %arg5[%c0_9, %c0_10] : memref<1x1024xf32, #tpu.memory_space<vmem>>, vector<1x1024xf32>
    tpu.vector_store %arg5[%c0_9, %c0_10], %9 {strides = array<i32>} : memref<1x1024xf32, #tpu.memory_space<vmem>>, vector<1x1024xf32>,
    return
  }
  func.func @transform_0(%arg0: i32) -> (i32, i32) {
    %c0_i32 = arith.constant 0 : i32
    %c0_i32_0 = arith.constant 0 : i32
    %c0_i32_1 = arith.constant 0 : i32
    return %c0_i32, %c0_i32_0 : i32, i32
  }
  func.func @transform_1(%arg0: i32) -> (i32, i32) {
    %c0_i32 = arith.constant 0 : i32
    %c0_i32_0 = arith.constant 0 : i32
    return %c0_i32, %arg0 : i32, i32
  }
  func.func @transform_2(%arg0: i32) -> (i32, i32) {
    %c0_i32 = arith.constant 0 : i32
    %c0_i32_0 = arith.constant 0 : i32
    return %c0_i32, %arg0 : i32, i32
  }
  func.func @transform_3(%arg0: i32) -> (i32, i32) {
    %c0_i32 = arith.constant 0 : i32
    %c0_i32_0 = arith.constant 0 : i32
    %c0_i32_1 = arith.constant 0 : i32
    return %c0_i32, %c0_i32_0 : i32, i32
  }
  func.func @transform_4(%arg0: i32) -> (i32, i32) {
    %c0_i32 = arith.constant 0 : i32
    %c0_i32_0 = arith.constant 0 : i32
    return %c0_i32, %arg0 : i32, i32
  }
}

</mosaic_0001>

<llo_original>
// kernel: inception_features.8
$region0: #{inception_features.8}
  #allocation0 [shape = 'u32[]', space=smem, size = 0x4, offset = 0x4, fixed_abs, tag = 'smem constant byte address 0x4 - core index']
  #allocation1 [shape = 'u32[144,128]{1,0:T(1,128)}', space=vmem, size = 0x12000, scoped, tag = 'internal scratch']
  %s0 = inlined_call_operand.vmem [shape: f32[232,27], index: 0, kind: input, shape index: {}]
  %s1 = inlined_call_operand.vmem [shape: f32[27,128], index: 1, kind: input, shape index: {}]
  %s2 = inlined_call_operand.vmem [shape: f32[1,128], index: 2, kind: input, shape index: {}]
  %s3 = inlined_call_operand.vmem [shape: f32[232,128], index: 3, kind: output, shape index: {}]
  %s4 = sld [smem:[#allocation0]]
  $region22: #{inception_features.8} parent=0
    _
  %s6 = ssub.s32 1, %s4
  %s7 = scalar_select 0, %s6, %s4
  // Predicated region
  $region2: #{inception_features.8} parent=0 // pred_check
    _
  $region3: #{inception_features.8} parent=0 // pred_check_branch
    %9 = sbr.rel (0) target = $region5
  $region4: #{inception_features.8} parent=0 // pred_region
    _
  $region5: #{inception_features.8} parent=0 // pred_fallthru
    _
  // Predicated region
  $region6: #{inception_features.8} parent=0 // pred_check
    _
  $region7: #{inception_features.8} parent=0 // pred_check_branch
    %11 = sbr.rel (0) target = $region9
  $region8: #{inception_features.8} parent=0 // pred_region
    _
  $region9: #{inception_features.8} parent=0 // pred_fallthru
    _
  // Predicated region
  $region10: #{inception_features.8} parent=0 // pred_check
    _
  $region11: #{inception_features.8} parent=0 // pred_check_branch
    %13 = sbr.rel (0) target = $region13
  $region12: #{inception_features.8} parent=0 // pred_region
    _
  $region13: #{inception_features.8} parent=0 // pred_fallthru
    _
  %v14 = vld [vmem:[%s0] sm:$0xff]
  %v15 = vld [vmem:[%s0 + $0x8] sm:$0xff]
  %v16 = vld [vmem:[%s0 + $0x10] sm:$0xff]
  %v17 = vld [vmem:[%s0 + $0x18] sm:$0xff]
  %v18 = vld [vmem:[%s0 + $0x20] sm:$0xff]
  %v19 = vld [vmem:[%s0 + $0x28] sm:$0xff]
  %v20 = vld [vmem:[%s0 + $0x30] sm:$0xff]
  %v21 = vld [vmem:[%s0 + $0x38] sm:$0xff]
  %v22 = vld [vmem:[%s0 + $0x40] sm:$0xff]
  %v23 = vld [vmem:[%s0 + $0x48] sm:$0xff]
  %v24 = vld [vmem:[%s0 + $0x50] sm:$0xff]
  %v25 = vld [vmem:[%s0 + $0x58] sm:$0xff]
  %v26 = vld [vmem:[%s0 + $0x60] sm:$0xff]
  %v27 = vld [vmem:[%s0 + $0x68] sm:$0xff]
  %v28 = vld [vmem:[%s0 + $0x70] sm:$0xff]
  %v29 = vld [vmem:[%s0 + $0x78] sm:$0xff]
  %v30 = vld [vmem:[%s0 + $0x80] sm:$0xff]
  %v31 = vld [vmem:[%s0 + $0x88] sm:$0xff]
  %v32 = vld [vmem:[%s0 + $0x90] sm:$0xff]
  %v33 = vld [vmem:[%s0 + $0x98] sm:$0xff]
  %v34 = vld [vmem:[%s0 + $0xa0] sm:$0xff]
  %v35 = vld [vmem:[%s0 + $0xa8] sm:$0xff]
  %v36 = vld [vmem:[%s0 + $0xb0] sm:$0xff]
  %v37 = vld [vmem:[%s0 + $0xb8] sm:$0xff]
  %v38 = vld [vmem:[%s0 + $0xc0] sm:$0xff]
  %v39 = vld [vmem:[%s0 + $0xc8] sm:$0xff]
  %v40 = vld [vmem:[%s0 + $0xd0] sm:$0xff]
  %v41 = vld [vmem:[%s0 + $0xd8] sm:$0xff]
  %v42 = vld [vmem:[%s0 + $0xe0] sm:$0xff]
  %v43 = vld [vmem:[%s1] sm:$0xff]
  %v44 = vld [vmem:[%s1 + $0x8] sm:$0xff]
  %v45 = vld [vmem:[%s1 + $0x10] sm:$0xff]
  %v46 = vld [vmem:[%s1 + $0x18] sm:$0x7]
  %v47 = vld [vmem:[%s2] sm:$0x1]
  %v49 = vlaneseq
  %v50 = vshrl.u32 %v49, 7
  %v51 = vsub.s32 0, %v50
  %v52 = vrot.slane %v47, %v51
  %vm54 = vcmask 220160
  %v56 = vsel %vm54, %v14, 0
  %v59 = vsel %vm54, %v15, 0
  %v62 = vsel %vm54, %v16, 0
  %v65 = vsel %vm54, %v17, 0
  %v68 = vsel %vm54, %v18, 0
  %v71 = vsel %vm54, %v19, 0
  %v74 = vsel %vm54, %v20, 0
  %v77 = vsel %vm54, %v21, 0
  %v80 = vsel %vm54, %v22, 0
  %v83 = vsel %vm54, %v23, 0
  %v86 = vsel %vm54, %v24, 0
  %v89 = vsel %vm54, %v25, 0
  %v92 = vsel %vm54, %v26, 0
  %v95 = vsel %vm54, %v27, 0
  %v98 = vsel %vm54, %v28, 0
  %v101 = vsel %vm54, %v29, 0
  %v104 = vsel %vm54, %v30, 0
  %v107 = vsel %vm54, %v31, 0
  %v110 = vsel %vm54, %v32, 0
  %v113 = vsel %vm54, %v33, 0
  %v116 = vsel %vm54, %v34, 0
  %v119 = vsel %vm54, %v35, 0
  %v122 = vsel %vm54, %v36, 0
  %v125 = vsel %vm54, %v37, 0
  %v128 = vsel %vm54, %v38, 0
  %v131 = vsel %vm54, %v39, 0
  %v134 = vsel %vm54, %v40, 0
  %v137 = vsel %vm54, %v41, 0
  %v140 = vsel %vm54, %v42, 0
  %vm142 = vcmask 1042432
  %v144 = vsel %vm142, %v46, 0
  %146 = vmatprep.subr.mxu0 0.0
  %147 = vmatpush1.msra.mxu0 %v43
  %148 = vmatprep.subr.mxu0 0.0
  %149 = vmatpush1.msra.mxu0 %v44
  %150 = vmatprep.subr.mxu0 0.0
  %151 = vmatpush1.msra.mxu0 %v45
  %152 = vmatprep.subr.mxu0 0.0
  %153 = vmatpush1.msra.mxu0 %v144
  %154 = vmatprep.subr.mxu0 0.0
  %155 = vmatpush1.msra.mxu0 0.0
  %156 = vmatprep.subr.mxu0 0.0
  %157 = vmatpush1.msra.mxu0 0.0
  %158 = vmatprep.subr.mxu0 0.0
  %159 = vmatpush1.msra.mxu0 0.0
  %160 = vmatprep.subr.mxu0 0.0
  %161 = vmatpush1.msra.mxu0 0.0
  %162 = vmatprep.subr.mxu0 0.0
  %163 = vmatpush1.msra.mxu0 0.0
  %164 = vmatprep.subr.mxu0 0.0
  %165 = vmatpush1.msra.mxu0 0.0
  %166 = vmatprep.subr.mxu0 0.0
  %167 = vmatpush1.msra.mxu0 0.0
  %168 = vmatprep.subr.mxu0 0.0
  %169 = vmatpush1.msra.mxu0 0.0
  %170 = vmatprep.subr.mxu0 0.0
  %171 = vmatpush1.msra.mxu0 0.0
  %172 = vmatprep.subr.mxu0 0.0
  %173 = vmatpush1.msra.mxu0 0.0
  %174 = vmatprep.subr.mxu0 0.0
  %175 = vmatpush1.msra.mxu0 0.0
  %176 = vmatprep.subr.mxu0 0.0
  %177 = vmatpush1.msra.mxu0 0.0
  %178 = vmatprep.subr.mxu0 0.0
  %179 = vmatpush1.msra.mxu0 0.0
  %180 = vmatprep.subr.mxu0 0.0
  %181 = vmatpush1.msra.mxu0 0.0
  %182 = vmatprep.subr.mxu0 0.0
  %183 = vmatpush1.msra.mxu0 0.0
  %184 = vmatprep.subr.mxu0 0.0
  %185 = vmatpush1.msra.mxu0 0.0
  %186 = vmatprep.subr.mxu0 0.0
  %187 = vmatpush1.msra.mxu0 0.0
  %188 = vmatprep.subr.mxu0 0.0
  %189 = vmatpush1.msra.mxu0 0.0
  %190 = vmatprep.subr.mxu0 0.0
  %191 = vmatpush1.msra.mxu0 0.0
  %192 = vmatprep.subr.mxu0 0.0
  %193 = vmatpush1.msra.mxu0 0.0
  %194 = vmatprep.subr.mxu0 0.0
  %195 = vmatpush1.msra.mxu0 0.0
  %196 = vmatprep.subr.mxu0 0.0
  %197 = vmatpush1.msra.mxu0 0.0
  %198 = vmatprep.subr.mxu0 0.0
  %199 = vmatpush1.msra.mxu0 0.0
  %200 = vmatprep.subr.mxu0 0.0
  %201 = vmatpush1.msra.mxu0 0.0
  %202 = vmatprep.subr.mxu0 0.0
  %203 = vmatpush1.msra.mxu0 0.0
  %204 = vmatprep.subr.mxu0 0.0
  %205 = vmatpush1.msra.mxu0 0.0
  %206 = vmatprep.subr.mxu0 0.0
  %207 = vmatpush1.msra.mxu0 0.0
  %208 = vmatprep.subr.mxu0 0.0
  %209 = vmatpush1.msra.mxu0 0.0
  %210 = vmatprep.mubr.f32.mxu0 0.0
  %211 = vmatmul.mubr.f32.gmra.mrb[0].mxu0 %v56
  %v212 = vpop.f32.mrb[0].mxu0
  %v213 = vadd.f32 %v52, %v212
  %v214 = vpop.f32.mrb[0].mxu0
  %215 = vmatprep.mubr.f32.mxu0 0.0
  %216 = vmatmul.mubr.f32.gmra.mrb[0].mxu0 %v59
  %v217 = vpop.f32.mrb[0].mxu0
  %v218 = vadd.f32 %v52, %v217
  %v219 = vpop.f32.mrb[0].mxu0
  %220 = vmatprep.mubr.f32.mxu0 0.0
  %221 = vmatmul.mubr.f32.gmra.mrb[0].mxu0 %v62
  %v222 = vpop.f32.mrb[0].mxu0
  %v223 = vadd.f32 %v52, %v222
  %v224 = vpop.f32.mrb[0].mxu0
  %225 = vmatprep.mubr.f32.mxu0 0.0
  %226 = vmatmul.mubr.f32.gmra.mrb[0].mxu0 %v65
  %v227 = vpop.f32.mrb[0].mxu0
  %v228 = vadd.f32 %v52, %v227
  %v229 = vpop.f32.mrb[0].mxu0
  %230 = vmatprep.mubr.f32.mxu0 0.0
  %231 = vmatmul.mubr.f32.gmra.mrb[0].mxu0 %v68
  %v232 = vpop.f32.mrb[0].mxu0
  %v233 = vadd.f32 %v52, %v232
  %v234 = vpop.f32.mrb[0].mxu0
  %235 = vmatprep.mubr.f32.mxu0 0.0
  %236 = vmatmul.mubr.f32.gmra.mrb[0].mxu0 %v71
  %v237 = vpop.f32.mrb[0].mxu0
  %v238 = vadd.f32 %v52, %v237
  %v239 = vpop.f32.mrb[0].mxu0
  %240 = vmatprep.mubr.f32.mxu0 0.0
  %241 = vmatmul.mubr.f32.gmra.mrb[0].mxu0 %v74
  %v242 = vpop.f32.mrb[0].mxu0
  %v243 = vadd.f32 %v52, %v242
  %v244 = vpop.f32.mrb[0].mxu0
  %245 = vmatprep.mubr.f32.mxu0 0.0
  %246 = vmatmul.mubr.f32.gmra.mrb[0].mxu0 %v77
  %v247 = vpop.f32.mrb[0].mxu0
  %v248 = vadd.f32 %v52, %v247
  %v249 = vpop.f32.mrb[0].mxu0
  %250 = vmatprep.mubr.f32.mxu0 0.0
  %251 = vmatmul.mubr.f32.gmra.mrb[0].mxu0 %v80
  %v252 = vpop.f32.mrb[0].mxu0
  %v253 = vadd.f32 %v52, %v252
  %v254 = vpop.f32.mrb[0].mxu0
  %255 = vmatprep.mubr.f32.mxu0 0.0
  %256 = vmatmul.mubr.f32.gmra.mrb[0].mxu0 %v83
  %v257 = vpop.f32.mrb[0].mxu0
  %v258 = vadd.f32 %v52, %v257
  %v259 = vpop.f32.mrb[0].mxu0
  %260 = vmatprep.mubr.f32.mxu0 0.0
  %261 = vmatmul.mubr.f32.gmra.mrb[0].mxu0 %v86
  %v262 = vpop.f32.mrb[0].mxu0
  %v263 = vadd.f32 %v52, %v262
  %v264 = vpop.f32.mrb[0].mxu0
  %265 = vmatprep.mubr.f32.mxu0 0.0
  %266 = vmatmul.mubr.f32.gmra.mrb[0].mxu0 %v89
  %v267 = vpop.f32.mrb[0].mxu0
  %v268 = vadd.f32 %v52, %v267
  %v269 = vpop.f32.mrb[0].mxu0
  %270 = vmatprep.mubr.f32.mxu0 0.0
  %271 = vmatmul.mubr.f32.gmra.mrb[0].mxu0 %v92
  %v272 = vpop.f32.mrb[0].mxu0
  %v273 = vadd.f32 %v52, %v272
  %v274 = vpop.f32.mrb[0].mxu0
  %275 = vmatprep.mubr.f32.mxu0 0.0
  %276 = vmatmul.mubr.f32.gmra.mrb[0].mxu0 %v95
  %v277 = vpop.f32.mrb[0].mxu0
  %v278 = vadd.f32 %v52, %v277
  %v279 = vpop.f32.mrb[0].mxu0
  %280 = vmatprep.mubr.f32.mxu0 0.0
  %281 = vmatmul.mubr.f32.gmra.mrb[0].mxu0 %v98
  %v282 = vpop.f32.mrb[0].mxu0
  %v283 = vadd.f32 %v52, %v282
  %v284 = vpop.f32.mrb[0].mxu0
  %285 = vmatprep.mubr.f32.mxu0 0.0
  %286 = vmatmul.mubr.f32.gmra.mrb[0].mxu0 %v101
  %v287 = vpop.f32.mrb[0].mxu0
  %v288 = vadd.f32 %v52, %v287
  %v289 = vpop.f32.mrb[0].mxu0
  %290 = vmatprep.mubr.f32.mxu0 0.0
  %291 = vmatmul.mubr.f32.gmra.mrb[0].mxu0 %v104
  %v292 = vpop.f32.mrb[0].mxu0
  %v293 = vadd.f32 %v52, %v292
  %v294 = vpop.f32.mrb[0].mxu0
  %295 = vmatprep.mubr.f32.mxu0 0.0
  %296 = vmatmul.mubr.f32.gmra.mrb[0].mxu0 %v107
  %v297 = vpop.f32.mrb[0].mxu0
  %v298 = vadd.f32 %v52, %v297
  %v299 = vpop.f32.mrb[0].mxu0
  %300 = vmatprep.mubr.f32.mxu0 0.0
  %301 = vmatmul.mubr.f32.gmra.mrb[0].mxu0 %v110
  %v302 = vpop.f32.mrb[0].mxu0
  %v303 = vadd.f32 %v52, %v302
  %v304 = vpop.f32.mrb[0].mxu0
  %305 = vmatprep.mubr.f32.mxu0 0.0
  %306 = vmatmul.mubr.f32.gmra.mrb[0].mxu0 %v113
  %v307 = vpop.f32.mrb[0].mxu0
  %v308 = vadd.f32 %v52, %v307
  %v309 = vpop.f32.mrb[0].mxu0
  %310 = vmatprep.mubr.f32.mxu0 0.0
  %311 = vmatmul.mubr.f32.gmra.mrb[0].mxu0 %v116
  %v312 = vpop.f32.mrb[0].mxu0
  %v313 = vadd.f32 %v52, %v312
  %v314 = vpop.f32.mrb[0].mxu0
  %315 = vmatprep.mubr.f32.mxu0 0.0
  %316 = vmatmul.mubr.f32.gmra.mrb[0].mxu0 %v119
  %v317 = vpop.f32.mrb[0].mxu0
  %v318 = vadd.f32 %v52, %v317
  %v319 = vpop.f32.mrb[0].mxu0
  %320 = vmatprep.mubr.f32.mxu0 0.0
  %321 = vmatmul.mubr.f32.gmra.mrb[0].mxu0 %v122
  %v322 = vpop.f32.mrb[0].mxu0
  %v323 = vadd.f32 %v52, %v322
  %v324 = vpop.f32.mrb[0].mxu0
  %325 = vmatprep.mubr.f32.mxu0 0.0
  %326 = vmatmul.mubr.f32.gmra.mrb[0].mxu0 %v125
  %v327 = vpop.f32.mrb[0].mxu0
  %v328 = vadd.f32 %v52, %v327
  %v329 = vpop.f32.mrb[0].mxu0
  %330 = vmatprep.mubr.f32.mxu0 0.0
  %331 = vmatmul.mubr.f32.gmra.mrb[0].mxu0 %v128
  %v332 = vpop.f32.mrb[0].mxu0
  %v333 = vadd.f32 %v52, %v332
  %v334 = vpop.f32.mrb[0].mxu0
  %335 = vmatprep.mubr.f32.mxu0 0.0
  %336 = vmatmul.mubr.f32.gmra.mrb[0].mxu0 %v131
  %v337 = vpop.f32.mrb[0].mxu0
  %v338 = vadd.f32 %v52, %v337
  %v339 = vpop.f32.mrb[0].mxu0
  %340 = vmatprep.mubr.f32.mxu0 0.0
  %341 = vmatmul.mubr.f32.gmra.mrb[0].mxu0 %v134
  %v342 = vpop.f32.mrb[0].mxu0
  %v343 = vadd.f32 %v52, %v342
  %v344 = vpop.f32.mrb[0].mxu0
  %345 = vmatprep.mubr.f32.mxu0 0.0
  %346 = vmatmul.mubr.f32.gmra.mrb[0].mxu0 %v137
  %v347 = vpop.f32.mrb[0].mxu0
  %v348 = vadd.f32 %v52, %v347
  %v349 = vpop.f32.mrb[0].mxu0
  %350 = vmatprep.mubr.f32.mxu0 0.0
  %351 = vmatmul.mubr.f32.gmra.mrb[0].mxu0 %v140
  %v352 = vpop.f32.mrb[0].mxu0
  %v353 = vadd.f32 %v52, %v352
  %v354 = vpop.f32.mrb[0].mxu0
  %355 = vdwg.mxu0
  %v356 = vmax.f32 %v213, 0.0
  %v357 = vmax.f32 %v218, 0.0
  %v358 = vmax.f32 %v223, 0.0
  %v359 = vmax.f32 %v228, 0.0
  %v360 = vmax.f32 %v233, 0.0
  %v361 = vmax.f32 %v238, 0.0
  %v362 = vmax.f32 %v243, 0.0
  %v363 = vmax.f32 %v248, 0.0
  %v364 = vmax.f32 %v253, 0.0
  %v365 = vmax.f32 %v258, 0.0
  %v366 = vmax.f32 %v263, 0.0
  %v367 = vmax.f32 %v268, 0.0
  %v368 = vmax.f32 %v273, 0.0
  %v369 = vmax.f32 %v278, 0.0
  %v370 = vmax.f32 %v283, 0.0
  %v371 = vmax.f32 %v288, 0.0
  %v372 = vmax.f32 %v293, 0.0
  %v373 = vmax.f32 %v298, 0.0
  %v374 = vmax.f32 %v303, 0.0
  %v375 = vmax.f32 %v308, 0.0
  %v376 = vmax.f32 %v313, 0.0
  %v377 = vmax.f32 %v318, 0.0
  %v378 = vmax.f32 %v323, 0.0
  %v379 = vmax.f32 %v328, 0.0
  %v380 = vmax.f32 %v333, 0.0
  %v381 = vmax.f32 %v338, 0.0
  %v382 = vmax.f32 %v343, 0.0
  %v383 = vmax.f32 %v348, 0.0
  %v384 = vmax.f32 %v353, 0.0
  %385 = vst [vmem:[%s3] sm:$0xff] %v356
  %386 = vst [vmem:[%s3 + $0x8] sm:$0xff] %v357
  %387 = vst [vmem:[%s3 + $0x10] sm:$0xff] %v358
  %388 = vst [vmem:[%s3 + $0x18] sm:$0xff] %v359
  %389 = vst [vmem:[%s3 + $0x20] sm:$0xff] %v360
  %390 = vst [vmem:[%s3 + $0x28] sm:$0xff] %v361
  %391 = vst [vmem:[%s3 + $0x30] sm:$0xff] %v362
  %392 = vst [vmem:[%s3 + $0x38] sm:$0xff] %v363
  %393 = vst [vmem:[%s3 + $0x40] sm:$0xff] %v364
  %394 = vst [vmem:[%s3 + $0x48] sm:$0xff] %v365
  %395 = vst [vmem:[%s3 + $0x50] sm:$0xff] %v366
  %396 = vst [vmem:[%s3 + $0x58] sm:$0xff] %v367
  %397 = vst [vmem:[%s3 + $0x60] sm:$0xff] %v368
  %398 = vst [vmem:[%s3 + $0x68] sm:$0xff] %v369
  %399 = vst [vmem:[%s3 + $0x70] sm:$0xff] %v370
  %400 = vst [vmem:[%s3 + $0x78] sm:$0xff] %v371
  %401 = vst [vmem:[%s3 + $0x80] sm:$0xff] %v372
  %402 = vst [vmem:[%s3 + $0x88] sm:$0xff] %v373
  %403 = vst [vmem:[%s3 + $0x90] sm:$0xff] %v374
  %404 = vst [vmem:[%s3 + $0x98] sm:$0xff] %v375
  %405 = vst [vmem:[%s3 + $0xa0] sm:$0xff] %v376
  %406 = vst [vmem:[%s3 + $0xa8] sm:$0xff] %v377
  %407 = vst [vmem:[%s3 + $0xb0] sm:$0xff] %v378
  %408 = vst [vmem:[%s3 + $0xb8] sm:$0xff] %v379
  %409 = vst [vmem:[%s3 + $0xc0] sm:$0xff] %v380
  %410 = vst [vmem:[%s3 + $0xc8] sm:$0xff] %v381
  %411 = vst [vmem:[%s3 + $0xd0] sm:$0xff] %v382
  %412 = vst [vmem:[%s3 + $0xd8] sm:$0xff] %v383
  %413 = vst [vmem:[%s3 + $0xe0] sm:$0xff] %v384
  // Predicated region
  $region14: #{inception_features.8} parent=0 // pred_check
    _
  $region15: #{inception_features.8} parent=0 // pred_check_branch
    %415 = sbr.rel (0) target = $region17
  $region16: #{inception_features.8} parent=0 // pred_region
    _
  $region17: #{inception_features.8} parent=0 // pred_fallthru
    _
  // Predicated region
  $region18: #{inception_features.8} parent=0 // pred_check
    _
  $region19: #{inception_features.8} parent=0 // pred_check_branch
    %417 = sbr.rel (0) target = $region21
  $region20: #{inception_features.8} parent=0 // pred_region
    _
  $region21: #{inception_features.8} parent=0 // pred_fallthru
    _

// kernel: inception_features.9
$region0: #{inception_features.9}
  #allocation0 [shape = 'u32[]', space=smem, size = 0x4, offset = 0x4, fixed_abs, tag = 'smem constant byte address 0x4 - core index']
  #allocation1 [shape = 'u32[144,128]{1,0:T(1,128)}', space=vmem, size = 0x12000, scoped, tag = 'internal scratch']
  %s0 = inlined_call_operand.vmem [shape: f32[232,72], index: 0, kind: input, shape index: {}]
  %s1 = inlined_call_operand.vmem [shape: f32[72,128], index: 1, kind: input, shape index: {}]
  %s2 = inlined_call_operand.vmem [shape: f32[1,128], index: 2, kind: input, shape index: {}]
  %s3 = inlined_call_operand.vmem [shape: f32[232,128], index: 3, kind: output, shape index: {}]
  %s4 = sld [smem:[#allocation0]]
  $region22: #{inception_features.9} parent=0
    _
  %s6 = ssub.s32 1, %s4
  %s7 = scalar_select 0, %s6, %s4
  // Predicated region
  $region2: #{inception_features.9} parent=0 // pred_check
    _
  $region3: #{inception_features.9} parent=0 // pred_check_branch
    %9 = sbr.rel (0) target = $region5
  $region4: #{inception_features.9} parent=0 // pred_region
    _
  $region5: #{inception_features.9} parent=0 // pred_fallthru
    _
  // Predicated region
  $region6: #{inception_features.9} parent=0 // pred_check
    _
  $region7: #{inception_features.9} parent=0 // pred_check_branch
    %11 = sbr.rel (0) target = $region9
  $region8: #{inception_features.9} parent=0 // pred_region
    _
  $region9: #{inception_features.9} parent=0 // pred_fallthru
    _
  // Predicated region
  $region10: #{inception_features.9} parent=0 // pred_check
    _
  $region11: #{inception_features.9} parent=0 // pred_check_branch
    %13 = sbr.rel (0) target = $region13
  $region12: #{inception_features.9} parent=0 // pred_region
    _
  $region13: #{inception_features.9} parent=0 // pred_fallthru
    _
  %v14 = vld [vmem:[%s0] sm:$0xff]
  %v15 = vld [vmem:[%s0 + $0x8] sm:$0xff]
  %v16 = vld [vmem:[%s0 + $0x10] sm:$0xff]
  %v17 = vld [vmem:[%s0 + $0x18] sm:$0xff]
  %v18 = vld [vmem:[%s0 + $0x20] sm:$0xff]
  %v19 = vld [vmem:[%s0 + $0x28] sm:$0xff]
  %v20 = vld [vmem:[%s0 + $0x30] sm:$0xff]
  %v21 = vld [vmem:[%s0 + $0x38] sm:$0xff]
  %v22 = vld [vmem:[%s0 + $0x40] sm:$0xff]
  %v23 = vld [vmem:[%s0 + $0x48] sm:$0xff]
  %v24 = vld [vmem:[%s0 + $0x50] sm:$0xff]
  %v25 = vld [vmem:[%s0 + $0x58] sm:$0xff]
  %v26 = vld [vmem:[%s0 + $0x60] sm:$0xff]
  %v27 = vld [vmem:[%s0 + $0x68] sm:$0xff]
  %v28 = vld [vmem:[%s0 + $0x70] sm:$0xff]
  %v29 = vld [vmem:[%s0 + $0x78] sm:$0xff]
  %v30 = vld [vmem:[%s0 + $0x80] sm:$0xff]
  %v31 = vld [vmem:[%s0 + $0x88] sm:$0xff]
  %v32 = vld [vmem:[%s0 + $0x90] sm:$0xff]
  %v33 = vld [vmem:[%s0 + $0x98] sm:$0xff]
  %v34 = vld [vmem:[%s0 + $0xa0] sm:$0xff]
  %v35 = vld [vmem:[%s0 + $0xa8] sm:$0xff]
  %v36 = vld [vmem:[%s0 + $0xb0] sm:$0xff]
  %v37 = vld [vmem:[%s0 + $0xb8] sm:$0xff]
  %v38 = vld [vmem:[%s0 + $0xc0] sm:$0xff]
  %v39 = vld [vmem:[%s0 + $0xc8] sm:$0xff]
  %v40 = vld [vmem:[%s0 + $0xd0] sm:$0xff]
  %v41 = vld [vmem:[%s0 + $0xd8] sm:$0xff]
  %v42 = vld [vmem:[%s0 + $0xe0] sm:$0xff]
  %v43 = vld [vmem:[%s1] sm:$0xff]
  %v44 = vld [vmem:[%s1 + $0x8] sm:$0xff]
  %v45 = vld [vmem:[%s1 + $0x10] sm:$0xff]
  %v46 = vld [vmem:[%s1 + $0x18] sm:$0xff]
  %v47 = vld [vmem:[%s1 + $0x20] sm:$0xff]
  %v48 = vld [vmem:[%s1 + $0x28] sm:$0xff]
  %v49 = vld [vmem:[%s1 + $0x30] sm:$0xff]
  %v50 = vld [vmem:[%s1 + $0x38] sm:$0xff]
  %v51 = vld [vmem:[%s1 + $0x40] sm:$0xff]
  %v52 = vld [vmem:[%s2] sm:$0x1]
  %v54 = vlaneseq
  %v55 = vshrl.u32 %v54, 7
  %v56 = vsub.s32 0, %v55
  %v57 = vrot.slane %v52, %v56
  %vm59 = vcmask 588800
  %v61 = vsel %vm59, %v14, 0
  %v64 = vsel %vm59, %v15, 0
  %v67 = vsel %vm59, %v16, 0
  %v70 = vsel %vm59, %v17, 0
  %v73 = vsel %vm59, %v18, 0
  %v76 = vsel %vm59, %v19, 0
  %v79 = vsel %vm59, %v20, 0
  %v82 = vsel %vm59, %v21, 0
  %v85 = vsel %vm59, %v22, 0
  %v88 = vsel %vm59, %v23, 0
  %v91 = vsel %vm59, %v24, 0
  %v94 = vsel %vm59, %v25, 0
  %v97 = vsel %vm59, %v26, 0
  %v100 = vsel %vm59, %v27, 0
  %v103 = vsel %vm59, %v28, 0
  %v106 = vsel %vm59, %v29, 0
  %v109 = vsel %vm59, %v30, 0
  %v112 = vsel %vm59, %v31, 0
  %v115 = vsel %vm59, %v32, 0
  %v118 = vsel %vm59, %v33, 0
  %v121 = vsel %vm59, %v34, 0
  %v124 = vsel %vm59, %v35, 0
  %v127 = vsel %vm59, %v36, 0
  %v130 = vsel %vm59, %v37, 0
  %v133 = vsel %vm59, %v38, 0
  %v136 = vsel %vm59, %v39, 0
  %v139 = vsel %vm59, %v40, 0
  %v142 = vsel %vm59, %v41, 0
  %v145 = vsel %vm59, %v42, 0
  %147 = vmatprep.subr.mxu0 0.0
  %148 = vmatpush1.msra.mxu0 %v43
  %149 = vmatprep.subr.mxu0 0.0
  %150 = vmatpush1.msra.mxu0 %v44
  %151 = vmatprep.subr.mxu0 0.0
  %152 = vmatpush1.msra.mxu0 %v45
  %153 = vmatprep.subr.mxu0 0.0
  %154 = vmatpush1.msra.mxu0 %v46
  %155 = vmatprep.subr.mxu0 0.0
  %156 = vmatpush1.msra.mxu0 %v47
  %157 = vmatprep.subr.mxu0 0.0
  %158 = vmatpush1.msra.mxu0 %v48
  %159 = vmatprep.subr.mxu0 0.0
  %160 = vmatpush1.msra.mxu0 %v49
  %161 = vmatprep.subr.mxu0 0.0
  %162 = vmatpush1.msra.mxu0 %v50
  %163 = vmatprep.subr.mxu0 0.0
  %164 = vmatpush1.msra.mxu0 %v51
  %165 = vmatprep.subr.mxu0 0.0
  %166 = vmatpush1.msra.mxu0 0.0
  %167 = vmatprep.subr.mxu0 0.0
  %168 = vmatpush1.msra.mxu0 0.0
  %169 = vmatprep.subr.mxu0 0.0
  %170 = vmatpush1.msra.mxu0 0.0
  %171 = vmatprep.subr.mxu0 0.0
  %172 = vmatpush1.msra.mxu0 0.0
  %173 = vmatprep.subr.mxu0 0.0
  %174 = vmatpush1.msra.mxu0 0.0
  %175 = vmatprep.subr.mxu0 0.0
  %176 = vmatpush1.msra.mxu0 0.0
  %177 = vmatprep.subr.mxu0 0.0
  %178 = vmatpush1.msra.mxu0 0.0
  %179 = vmatprep.subr.mxu0 0.0
  %180 = vmatpush1.msra.mxu0 0.0
  %181 = vmatprep.subr.mxu0 0.0
  %182 = vmatpush1.msra.mxu0 0.0
  %183 = vmatprep.subr.mxu0 0.0
  %184 = vmatpush1.msra.mxu0 0.0
  %185 = vmatprep.subr.mxu0 0.0
  %186 = vmatpush1.msra.mxu0 0.0
  %187 = vmatprep.subr.mxu0 0.0
  %188 = vmatpush1.msra.mxu0 0.0
  %189 = vmatprep.subr.mxu0 0.0
  %190 = vmatpush1.msra.mxu0 0.0
  %191 = vmatprep.subr.mxu0 0.0
  %192 = vmatpush1.msra.mxu0 0.0
  %193 = vmatprep.subr.mxu0 0.0
  %194 = vmatpush1.msra.mxu0 0.0
  %195 = vmatprep.subr.mxu0 0.0
  %196 = vmatpush1.msra.mxu0 0.0
  %197 = vmatprep.subr.mxu0 0.0
  %198 = vmatpush1.msra.mxu0 0.0
  %199 = vmatprep.subr.mxu0 0.0
  %200 = vmatpush1.msra.mxu0 0.0
  %201 = vmatprep.subr.mxu0 0.0
  %202 = vmatpush1.msra.mxu0 0.0
  %203 = vmatprep.subr.mxu0 0.0
  %204 = vmatpush1.msra.mxu0 0.0
  %205 = vmatprep.subr.mxu0 0.0
  %206 = vmatpush1.msra.mxu0 0.0
  %207 = vmatprep.subr.mxu0 0.0
  %208 = vmatpush1.msra.mxu0 0.0
  %209 = vmatprep.subr.mxu0 0.0
  %210 = vmatpush1.msra.mxu0 0.0
  %211 = vmatprep.mubr.f32.mxu0 0.0
  %212 = vmatmul.mubr.f32.gmra.mrb[0].mxu0 %v61
  %v213 = vpop.f32.mrb[0].mxu0
  %v214 = vadd.f32 %v57, %v213
  %v215 = vpop.f32.mrb[0].mxu0
  %216 = vmatprep.mubr.f32.mxu0 0.0
  %217 = vmatmul.mubr.f32.gmra.mrb[0].mxu0 %v64
  %v218 = vpop.f32.mrb[0].mxu0
  %v219 = vadd.f32 %v57, %v218
  %v220 = vpop.f32.mrb[0].mxu0
  %221 = vmatprep.mubr.f32.mxu0 0.0
  %222 = vmatmul.mubr.f32.gmra.mrb[0].mxu0 %v67
  %v223 = vpop.f32.mrb[0].mxu0
  %v224 = vadd.f32 %v57, %v223
  %v225 = vpop.f32.mrb[0].mxu0
  %226 = vmatprep.mubr.f32.mxu0 0.0
  %227 = vmatmul.mubr.f32.gmra.mrb[0].mxu0 %v70
  %v228 = vpop.f32.mrb[0].mxu0
  %v229 = vadd.f32 %v57, %v228
  %v230 = vpop.f32.mrb[0].mxu0
  %231 = vmatprep.mubr.f32.mxu0 0.0
  %232 = vmatmul.mubr.f32.gmra.mrb[0].mxu0 %v73
  %v233 = vpop.f32.mrb[0].mxu0
  %v234 = vadd.f32 %v57, %v233
  %v235 = vpop.f32.mrb[0].mxu0
  %236 = vmatprep.mubr.f32.mxu0 0.0
  %237 = vmatmul.mubr.f32.gmra.mrb[0].mxu0 %v76
  %v238 = vpop.f32.mrb[0].mxu0
  %v239 = vadd.f32 %v57, %v238
  %v240 = vpop.f32.mrb[0].mxu0
  %241 = vmatprep.mubr.f32.mxu0 0.0
  %242 = vmatmul.mubr.f32.gmra.mrb[0].mxu0 %v79
  %v243 = vpop.f32.mrb[0].mxu0
  %v244 = vadd.f32 %v57, %v243
  %v245 = vpop.f32.mrb[0].mxu0
  %246 = vmatprep.mubr.f32.mxu0 0.0
  %247 = vmatmul.mubr.f32.gmra.mrb[0].mxu0 %v82
  %v248 = vpop.f32.mrb[0].mxu0
  %v249 = vadd.f32 %v57, %v248
  %v250 = vpop.f32.mrb[0].mxu0
  %251 = vmatprep.mubr.f32.mxu0 0.0
  %252 = vmatmul.mubr.f32.gmra.mrb[0].mxu0 %v85
  %v253 = vpop.f32.mrb[0].mxu0
  %v254 = vadd.f32 %v57, %v253
  %v255 = vpop.f32.mrb[0].mxu0
  %256 = vmatprep.mubr.f32.mxu0 0.0
  %257 = vmatmul.mubr.f32.gmra.mrb[0].mxu0 %v88
  %v258 = vpop.f32.mrb[0].mxu0
  %v259 = vadd.f32 %v57, %v258
  %v260 = vpop.f32.mrb[0].mxu0
  %261 = vmatprep.mubr.f32.mxu0 0.0
  %262 = vmatmul.mubr.f32.gmra.mrb[0].mxu0 %v91
  %v263 = vpop.f32.mrb[0].mxu0
  %v264 = vadd.f32 %v57, %v263
  %v265 = vpop.f32.mrb[0].mxu0
  %266 = vmatprep.mubr.f32.mxu0 0.0
  %267 = vmatmul.mubr.f32.gmra.mrb[0].mxu0 %v94
  %v268 = vpop.f32.mrb[0].mxu0
  %v269 = vadd.f32 %v57, %v268
  %v270 = vpop.f32.mrb[0].mxu0
  %271 = vmatprep.mubr.f32.mxu0 0.0
  %272 = vmatmul.mubr.f32.gmra.mrb[0].mxu0 %v97
  %v273 = vpop.f32.mrb[0].mxu0
  %v274 = vadd.f32 %v57, %v273
  %v275 = vpop.f32.mrb[0].mxu0
  %276 = vmatprep.mubr.f32.mxu0 0.0
  %277 = vmatmul.mubr.f32.gmra.mrb[0].mxu0 %v100
  %v278 = vpop.f32.mrb[0].mxu0
  %v279 = vadd.f32 %v57, %v278
  %v280 = vpop.f32.mrb[0].mxu0
  %281 = vmatprep.mubr.f32.mxu0 0.0
  %282 = vmatmul.mubr.f32.gmra.mrb[0].mxu0 %v103
  %v283 = vpop.f32.mrb[0].mxu0
  %v284 = vadd.f32 %v57, %v283
  %v285 = vpop.f32.mrb[0].mxu0
  %286 = vmatprep.mubr.f32.mxu0 0.0
  %287 = vmatmul.mubr.f32.gmra.mrb[0].mxu0 %v106
  %v288 = vpop.f32.mrb[0].mxu0
  %v289 = vadd.f32 %v57, %v288
  %v290 = vpop.f32.mrb[0].mxu0
  %291 = vmatprep.mubr.f32.mxu0 0.0
  %292 = vmatmul.mubr.f32.gmra.mrb[0].mxu0 %v109
  %v293 = vpop.f32.mrb[0].mxu0
  %v294 = vadd.f32 %v57, %v293
  %v295 = vpop.f32.mrb[0].mxu0
  %296 = vmatprep.mubr.f32.mxu0 0.0
  %297 = vmatmul.mubr.f32.gmra.mrb[0].mxu0 %v112
  %v298 = vpop.f32.mrb[0].mxu0
  %v299 = vadd.f32 %v57, %v298
  %v300 = vpop.f32.mrb[0].mxu0
  %301 = vmatprep.mubr.f32.mxu0 0.0
  %302 = vmatmul.mubr.f32.gmra.mrb[0].mxu0 %v115
  %v303 = vpop.f32.mrb[0].mxu0
  %v304 = vadd.f32 %v57, %v303
  %v305 = vpop.f32.mrb[0].mxu0
  %306 = vmatprep.mubr.f32.mxu0 0.0
  %307 = vmatmul.mubr.f32.gmra.mrb[0].mxu0 %v118
  %v308 = vpop.f32.mrb[0].mxu0
  %v309 = vadd.f32 %v57, %v308
  %v310 = vpop.f32.mrb[0].mxu0
  %311 = vmatprep.mubr.f32.mxu0 0.0
  %312 = vmatmul.mubr.f32.gmra.mrb[0].mxu0 %v121
  %v313 = vpop.f32.mrb[0].mxu0
  %v314 = vadd.f32 %v57, %v313
  %v315 = vpop.f32.mrb[0].mxu0
  %316 = vmatprep.mubr.f32.mxu0 0.0
  %317 = vmatmul.mubr.f32.gmra.mrb[0].mxu0 %v124
  %v318 = vpop.f32.mrb[0].mxu0
  %v319 = vadd.f32 %v57, %v318
  %v320 = vpop.f32.mrb[0].mxu0
  %321 = vmatprep.mubr.f32.mxu0 0.0
  %322 = vmatmul.mubr.f32.gmra.mrb[0].mxu0 %v127
  %v323 = vpop.f32.mrb[0].mxu0
  %v324 = vadd.f32 %v57, %v323
  %v325 = vpop.f32.mrb[0].mxu0
  %326 = vmatprep.mubr.f32.mxu0 0.0
  %327 = vmatmul.mubr.f32.gmra.mrb[0].mxu0 %v130
  %v328 = vpop.f32.mrb[0].mxu0
  %v329 = vadd.f32 %v57, %v328
  %v330 = vpop.f32.mrb[0].mxu0
  %331 = vmatprep.mubr.f32.mxu0 0.0
  %332 = vmatmul.mubr.f32.gmra.mrb[0].mxu0 %v133
  %v333 = vpop.f32.mrb[0].mxu0
  %v334 = vadd.f32 %v57, %v333
  %v335 = vpop.f32.mrb[0].mxu0
  %336 = vmatprep.mubr.f32.mxu0 0.0
  %337 = vmatmul.mubr.f32.gmra.mrb[0].mxu0 %v136
  %v338 = vpop.f32.mrb[0].mxu0
  %v339 = vadd.f32 %v57, %v338
  %v340 = vpop.f32.mrb[0].mxu0
  %341 = vmatprep.mubr.f32.mxu0 0.0
  %342 = vmatmul.mubr.f32.gmra.mrb[0].mxu0 %v139
  %v343 = vpop.f32.mrb[0].mxu0
  %v344 = vadd.f32 %v57, %v343
  %v345 = vpop.f32.mrb[0].mxu0
  %346 = vmatprep.mubr.f32.mxu0 0.0
  %347 = vmatmul.mubr.f32.gmra.mrb[0].mxu0 %v142
  %v348 = vpop.f32.mrb[0].mxu0
  %v349 = vadd.f32 %v57, %v348
  %v350 = vpop.f32.mrb[0].mxu0
  %351 = vmatprep.mubr.f32.mxu0 0.0
  %352 = vmatmul.mubr.f32.gmra.mrb[0].mxu0 %v145
  %v353 = vpop.f32.mrb[0].mxu0
  %v354 = vadd.f32 %v57, %v353
  %v355 = vpop.f32.mrb[0].mxu0
  %356 = vdwg.mxu0
  %v357 = vmax.f32 %v214, 0.0
  %v358 = vmax.f32 %v219, 0.0
  %v359 = vmax.f32 %v224, 0.0
  %v360 = vmax.f32 %v229, 0.0
  %v361 = vmax.f32 %v234, 0.0
  %v362 = vmax.f32 %v239, 0.0
  %v363 = vmax.f32 %v244, 0.0
  %v364 = vmax.f32 %v249, 0.0
  %v365 = vmax.f32 %v254, 0.0
  %v366 = vmax.f32 %v259, 0.0
  %v367 = vmax.f32 %v264, 0.0
  %v368 = vmax.f32 %v269, 0.0
  %v369 = vmax.f32 %v274, 0.0
  %v370 = vmax.f32 %v279, 0.0
  %v371 = vmax.f32 %v284, 0.0
  %v372 = vmax.f32 %v289, 0.0
  %v373 = vmax.f32 %v294, 0.0
  %v374 = vmax.f32 %v299, 0.0
  %v375 = vmax.f32 %v304, 0.0
  %v376 = vmax.f32 %v309, 0.0
  %v377 = vmax.f32 %v314, 0.0
  %v378 = vmax.f32 %v319, 0.0
  %v379 = vmax.f32 %v324, 0.0
  %v380 = vmax.f32 %v329, 0.0
  %v381 = vmax.f32 %v334, 0.0
  %v382 = vmax.f32 %v339, 0.0
  %v383 = vmax.f32 %v344, 0.0
  %v384 = vmax.f32 %v349, 0.0
  %v385 = vmax.f32 %v354, 0.0
  %386 = vst [vmem:[%s3] sm:$0xff] %v357
  %387 = vst [vmem:[%s3 + $0x8] sm:$0xff] %v358
  %388 = vst [vmem:[%s3 + $0x10] sm:$0xff] %v359
  %389 = vst [vmem:[%s3 + $0x18] sm:$0xff] %v360
  %390 = vst [vmem:[%s3 + $0x20] sm:$0xff] %v361
  %391 = vst [vmem:[%s3 + $0x28] sm:$0xff] %v362
  %392 = vst [vmem:[%s3 + $0x30] sm:$0xff] %v363
  %393 = vst [vmem:[%s3 + $0x38] sm:$0xff] %v364
  %394 = vst [vmem:[%s3 + $0x40] sm:$0xff] %v365
  %395 = vst [vmem:[%s3 + $0x48] sm:$0xff] %v366
  %396 = vst [vmem:[%s3 + $0x50] sm:$0xff] %v367
  %397 = vst [vmem:[%s3 + $0x58] sm:$0xff] %v368
  %398 = vst [vmem:[%s3 + $0x60] sm:$0xff] %v369
  %399 = vst [vmem:[%s3 + $0x68] sm:$0xff] %v370
  %400 = vst [vmem:[%s3 + $0x70] sm:$0xff] %v371
  %401 = vst [vmem:[%s3 + $0x78] sm:$0xff] %v372
  %402 = vst [vmem:[%s3 + $0x80] sm:$0xff] %v373
  %403 = vst [vmem:[%s3 + $0x88] sm:$0xff] %v374
  %404 = vst [vmem:[%s3 + $0x90] sm:$0xff] %v375
  %405 = vst [vmem:[%s3 + $0x98] sm:$0xff] %v376
  %406 = vst [vmem:[%s3 + $0xa0] sm:$0xff] %v377
  %407 = vst [vmem:[%s3 + $0xa8] sm:$0xff] %v378
  %408 = vst [vmem:[%s3 + $0xb0] sm:$0xff] %v379
  %409 = vst [vmem:[%s3 + $0xb8] sm:$0xff] %v380
  %410 = vst [vmem:[%s3 + $0xc0] sm:$0xff] %v381
  %411 = vst [vmem:[%s3 + $0xc8] sm:$0xff] %v382
  %412 = vst [vmem:[%s3 + $0xd0] sm:$0xff] %v383
  %413 = vst [vmem:[%s3 + $0xd8] sm:$0xff] %v384
  %414 = vst [vmem:[%s3 + $0xe0] sm:$0xff] %v385
  // Predicated region
  $region14: #{inception_features.9} parent=0 // pred_check
    _
  $region15: #{inception_features.9} parent=0 // pred_check_branch
    %416 = sbr.rel (0) target = $region17
  $region16: #{inception_features.9} parent=0 // pred_region
    _
  $region17: #{inception_features.9} parent=0 // pred_fallthru
    _
  // Predicated region
  $region18: #{inception_features.9} parent=0 // pred_check
    _
  $region19: #{inception_features.9} parent=0 // pred_check_branch
    %418 = sbr.rel (0) target = $region21
  $region20: #{inception_features.9} parent=0 // pred_region
    _
  $region21: #{inception_features.9} parent=0 // pred_fallthru
    _

// kernel: inception_features.10
$region0: #{inception_features.10}
  #allocation0 [shape = 'u32[]', space=smem, size = 0x4, offset = 0x4, fixed_abs, tag = 'smem constant byte address 0x4 - core index']
  #allocation1 [shape = 'u32[144,128]{1,0:T(1,128)}', space=vmem, size = 0x12000, scoped, tag = 'internal scratch']
  %s0 = inlined_call_operand.vmem [shape: f32[56,16], index: 0, kind: input, shape index: {}]
  %s1 = inlined_call_operand.vmem [shape: f32[16,128], index: 1, kind: input, shape index: {}]
  %s2 = inlined_call_operand.vmem [shape: f32[1,128], index: 2, kind: input, shape index: {}]
  %s3 = inlined_call_operand.vmem [shape: f32[56,128], index: 3, kind: output, shape index: {}]
  %s4 = sld [smem:[#allocation0]]
  $region22: #{inception_features.10} parent=0
    _
  %s6 = ssub.s32 1, %s4
  %s7 = scalar_select 0, %s6, %s4
  // Predicated region
  $region2: #{inception_features.10} parent=0 // pred_check
    _
  $region3: #{inception_features.10} parent=0 // pred_check_branch
    %9 = sbr.rel (0) target = $region5
  $region4: #{inception_features.10} parent=0 // pred_region
    _
  $region5: #{inception_features.10} parent=0 // pred_fallthru
    _
  // Predicated region
  $region6: #{inception_features.10} parent=0 // pred_check
    _
  $region7: #{inception_features.10} parent=0 // pred_check_branch
    %11 = sbr.rel (0) target = $region9
  $region8: #{inception_features.10} parent=0 // pred_region
    _
  $region9: #{inception_features.10} parent=0 // pred_fallthru
    _
  // Predicated region
  $region10: #{inception_features.10} parent=0 // pred_check
    _
  $region11: #{inception_features.10} parent=0 // pred_check_branch
    %13 = sbr.rel (0) target = $region13
  $region12: #{inception_features.10} parent=0 // pred_region
    _
  $region13: #{inception_features.10} parent=0 // pred_fallthru
    _
  %v14 = vld [vmem:[%s0] sm:$0xff]
  %v15 = vld [vmem:[%s0 + $0x8] sm:$0xff]
  %v16 = vld [vmem:[%s0 + $0x10] sm:$0xff]
  %v17 = vld [vmem:[%s0 + $0x18] sm:$0xff]
  %v18 = vld [vmem:[%s0 + $0x20] sm:$0xff]
  %v19 = vld [vmem:[%s0 + $0x28] sm:$0xff]
  %v20 = vld [vmem:[%s0 + $0x30] sm:$0xff]
  %v21 = vld [vmem:[%s1] sm:$0xff]
  %v22 = vld [vmem:[%s1 + $0x8] sm:$0xff]
  %v23 = vld [vmem:[%s2] sm:$0x1]
  %v25 = vlaneseq
  %v26 = vshrl.u32 %v25, 7
  %v27 = vsub.s32 0, %v26
  %v28 = vrot.slane %v23, %v27
  %vm30 = vcmask 130048
  %v32 = vsel %vm30, %v14, 0
  %v35 = vsel %vm30, %v15, 0
  %v38 = vsel %vm30, %v16, 0
  %v41 = vsel %vm30, %v17, 0
  %v44 = vsel %vm30, %v18, 0
  %v47 = vsel %vm30, %v19, 0
  %v50 = vsel %vm30, %v20, 0
  %52 = vmatprep.subr.mxu0 0.0
  %53 = vmatpush1.msra.mxu0 %v21
  %54 = vmatprep.subr.mxu0 0.0
  %55 = vmatpush1.msra.mxu0 %v22
  %56 = vmatprep.subr.mxu0 0.0
  %57 = vmatpush1.msra.mxu0 0.0
  %58 = vmatprep.subr.mxu0 0.0
  %59 = vmatpush1.msra.mxu0 0.0
  %60 = vmatprep.subr.mxu0 0.0
  %61 = vmatpush1.msra.mxu0 0.0
  %62 = vmatprep.subr.mxu0 0.0
  %63 = vmatpush1.msra.mxu0 0.0
  %64 = vmatprep.subr.mxu0 0.0
  %65 = vmatpush1.msra.mxu0 0.0
  %66 = vmatprep.subr.mxu0 0.0
  %67 = vmatpush1.msra.mxu0 0.0
  %68 = vmatprep.subr.mxu0 0.0
  %69 = vmatpush1.msra.mxu0 0.0
  %70 = vmatprep.subr.mxu0 0.0
  %71 = vmatpush1.msra.mxu0 0.0
  %72 = vmatprep.subr.mxu0 0.0
  %73 = vmatpush1.msra.mxu0 0.0
  %74 = vmatprep.subr.mxu0 0.0
  %75 = vmatpush1.msra.mxu0 0.0
  %76 = vmatprep.subr.mxu0 0.0
  %77 = vmatpush1.msra.mxu0 0.0
  %78 = vmatprep.subr.mxu0 0.0
  %79 = vmatpush1.msra.mxu0 0.0
  %80 = vmatprep.subr.mxu0 0.0
  %81 = vmatpush1.msra.mxu0 0.0
  %82 = vmatprep.subr.mxu0 0.0
  %83 = vmatpush1.msra.mxu0 0.0
  %84 = vmatprep.subr.mxu0 0.0
  %85 = vmatpush1.msra.mxu0 0.0
  %86 = vmatprep.subr.mxu0 0.0
  %87 = vmatpush1.msra.mxu0 0.0
  %88 = vmatprep.subr.mxu0 0.0
  %89 = vmatpush1.msra.mxu0 0.0
  %90 = vmatprep.subr.mxu0 0.0
  %91 = vmatpush1.msra.mxu0 0.0
  %92 = vmatprep.subr.mxu0 0.0
  %93 = vmatpush1.msra.mxu0 0.0
  %94 = vmatprep.subr.mxu0 0.0
  %95 = vmatpush1.msra.mxu0 0.0
  %96 = vmatprep.subr.mxu0 0.0
  %97 = vmatpush1.msra.mxu0 0.0
  %98 = vmatprep.subr.mxu0 0.0
  %99 = vmatpush1.msra.mxu0 0.0
  %100 = vmatprep.subr.mxu0 0.0
  %101 = vmatpush1.msra.mxu0 0.0
  %102 = vmatprep.subr.mxu0 0.0
  %103 = vmatpush1.msra.mxu0 0.0
  %104 = vmatprep.subr.mxu0 0.0
  %105 = vmatpush1.msra.mxu0 0.0
  %106 = vmatprep.subr.mxu0 0.0
  %107 = vmatpush1.msra.mxu0 0.0
  %108 = vmatprep.subr.mxu0 0.0
  %109 = vmatpush1.msra.mxu0 0.0
  %110 = vmatprep.subr.mxu0 0.0
  %111 = vmatpush1.msra.mxu0 0.0
  %112 = vmatprep.subr.mxu0 0.0
  %113 = vmatpush1.msra.mxu0 0.0
  %114 = vmatprep.subr.mxu0 0.0
  %115 = vmatpush1.msra.mxu0 0.0
  %116 = vmatprep.mubr.f32.mxu0 0.0
  %117 = vmatmul.mubr.f32.gmra.mrb[0].mxu0 %v32
  %v118 = vpop.f32.mrb[0].mxu0
  %v119 = vadd.f32 %v28, %v118
  %v120 = vpop.f32.mrb[0].mxu0
  %121 = vmatprep.mubr.f32.mxu0 0.0
  %122 = vmatmul.mubr.f32.gmra.mrb[0].mxu0 %v35
  %v123 = vpop.f32.mrb[0].mxu0
  %v124 = vadd.f32 %v28, %v123
  %v125 = vpop.f32.mrb[0].mxu0
  %126 = vmatprep.mubr.f32.mxu0 0.0
  %127 = vmatmul.mubr.f32.gmra.mrb[0].mxu0 %v38
  %v128 = vpop.f32.mrb[0].mxu0
  %v129 = vadd.f32 %v28, %v128
  %v130 = vpop.f32.mrb[0].mxu0
  %131 = vmatprep.mubr.f32.mxu0 0.0
  %132 = vmatmul.mubr.f32.gmra.mrb[0].mxu0 %v41
  %v133 = vpop.f32.mrb[0].mxu0
  %v134 = vadd.f32 %v28, %v133
  %v135 = vpop.f32.mrb[0].mxu0
  %136 = vmatprep.mubr.f32.mxu0 0.0
  %137 = vmatmul.mubr.f32.gmra.mrb[0].mxu0 %v44
  %v138 = vpop.f32.mrb[0].mxu0
  %v139 = vadd.f32 %v28, %v138
  %v140 = vpop.f32.mrb[0].mxu0
  %141 = vmatprep.mubr.f32.mxu0 0.0
  %142 = vmatmul.mubr.f32.gmra.mrb[0].mxu0 %v47
  %v143 = vpop.f32.mrb[0].mxu0
  %v144 = vadd.f32 %v28, %v143
  %v145 = vpop.f32.mrb[0].mxu0
  %146 = vmatprep.mubr.f32.mxu0 0.0
  %147 = vmatmul.mubr.f32.gmra.mrb[0].mxu0 %v50
  %v148 = vpop.f32.mrb[0].mxu0
  %v149 = vadd.f32 %v28, %v148
  %v150 = vpop.f32.mrb[0].mxu0
  %151 = vdwg.mxu0
  %v152 = vmax.f32 %v119, 0.0
  %v153 = vmax.f32 %v124, 0.0
  %v154 = vmax.f32 %v129, 0.0
  %v155 = vmax.f32 %v134, 0.0
  %v156 = vmax.f32 %v139, 0.0
  %v157 = vmax.f32 %v144, 0.0
  %v158 = vmax.f32 %v149, 0.0
  %159 = vst [vmem:[%s3] sm:$0xff] %v152
  %160 = vst [vmem:[%s3 + $0x8] sm:$0xff] %v153
  %161 = vst [vmem:[%s3 + $0x10] sm:$0xff] %v154
  %162 = vst [vmem:[%s3 + $0x18] sm:$0xff] %v155
  %163 = vst [vmem:[%s3 + $0x20] sm:$0xff] %v156
  %164 = vst [vmem:[%s3 + $0x28] sm:$0xff] %v157
  %165 = vst [vmem:[%s3 + $0x30] sm:$0xff] %v158
  // Predicated region
  $region14: #{inception_features.10} parent=0 // pred_check
    _
  $region15: #{inception_features.10} parent=0 // pred_check_branch
    %167 = sbr.rel (0) target = $region17
  $region16: #{inception_features.10} parent=0 // pred_region
    _
  $region17: #{inception_features.10} parent=0 // pred_fallthru
    _
  // Predicated region
  $region18: #{inception_features.10} parent=0 // pred_check
    _
  $region19: #{inception_features.10} parent=0 // pred_check_branch
    %169 = sbr.rel (0) target = $region21
  $region20: #{inception_features.10} parent=0 // pred_region
    _
  $region21: #{inception_features.10} parent=0 // pred_fallthru
    _

// kernel: inception_features.11
$region0: #{inception_features.11}
  #allocation0 [shape = 'u32[]', space=smem, size = 0x4, offset = 0x4, fixed_abs, tag = 'smem constant byte address 0x4 - core index']
  #allocation1 [shape = 'u32[144,128]{1,0:T(1,128)}', space=vmem, size = 0x12000, scoped, tag = 'internal scratch']
  %s0 = inlined_call_operand.vmem [shape: f32[56,150], index: 0, kind: input, shape index: {}]
  %s1 = inlined_call_operand.vmem [shape: f32[150,128], index: 1, kind: input, shape index: {}]
  %s2 = inlined_call_operand.vmem [shape: f32[1,128], index: 2, kind: input, shape index: {}]
  %s3 = inlined_call_operand.vmem [shape: f32[56,128], index: 3, kind: output, shape index: {}]
  %s4 = sld [smem:[#allocation0]]
  $region22: #{inception_features.11} parent=0
    _
  %s6 = ssub.s32 1, %s4
  %s7 = scalar_select 0, %s6, %s4
  // Predicated region
  $region2: #{inception_features.11} parent=0 // pred_check
    _
  $region3: #{inception_features.11} parent=0 // pred_check_branch
    %9 = sbr.rel (0) target = $region5
  $region4: #{inception_features.11} parent=0 // pred_region
    _
  $region5: #{inception_features.11} parent=0 // pred_fallthru
    _
  // Predicated region
  $region6: #{inception_features.11} parent=0 // pred_check
    _
  $region7: #{inception_features.11} parent=0 // pred_check_branch
    %11 = sbr.rel (0) target = $region9
  $region8: #{inception_features.11} parent=0 // pred_region
    _
  $region9: #{inception_features.11} parent=0 // pred_fallthru
    _
  // Predicated region
  $region10: #{inception_features.11} parent=0 // pred_check
    _
  $region11: #{inception_features.11} parent=0 // pred_check_branch
    %13 = sbr.rel (0) target = $region13
  $region12: #{inception_features.11} parent=0 // pred_region
    _
  $region13: #{inception_features.11} parent=0 // pred_fallthru
    _
  %v14 = vld [vmem:[%s0] sm:$0xff]
  %v15 = vld [vmem:[%s0 + $0x8] sm:$0xff]
  %v16 = vld [vmem:[%s0 + $0x10] sm:$0xff]
  %v17 = vld [vmem:[%s0 + $0x18] sm:$0xff]
  %v18 = vld [vmem:[%s0 + $0x20] sm:$0xff]
  %v19 = vld [vmem:[%s0 + $0x28] sm:$0xff]
  %v20 = vld [vmem:[%s0 + $0x30] sm:$0xff]
  %v21 = vld [vmem:[%s0 + $0x38] sm:$0xff]
  %v22 = vld [vmem:[%s0 + $0x40] sm:$0xff]
  %v23 = vld [vmem:[%s0 + $0x48] sm:$0xff]
  %v24 = vld [vmem:[%s0 + $0x50] sm:$0xff]
  %v25 = vld [vmem:[%s0 + $0x58] sm:$0xff]
  %v26 = vld [vmem:[%s0 + $0x60] sm:$0xff]
  %v27 = vld [vmem:[%s0 + $0x68] sm:$0xff]
  %v28 = vld [vmem:[%s1] sm:$0xff]
  %v29 = vld [vmem:[%s1 + $0x8] sm:$0xff]
  %v30 = vld [vmem:[%s1 + $0x10] sm:$0xff]
  %v31 = vld [vmem:[%s1 + $0x18] sm:$0xff]
  %v32 = vld [vmem:[%s1 + $0x20] sm:$0xff]
  %v33 = vld [vmem:[%s1 + $0x28] sm:$0xff]
  %v34 = vld [vmem:[%s1 + $0x30] sm:$0xff]
  %v35 = vld [vmem:[%s1 + $0x38] sm:$0xff]
  %v36 = vld [vmem:[%s1 + $0x40] sm:$0xff]
  %v37 = vld [vmem:[%s1 + $0x48] sm:$0xff]
  %v38 = vld [vmem:[%s1 + $0x50] sm:$0xff]
  %v39 = vld [vmem:[%s1 + $0x58] sm:$0xff]
  %v40 = vld [vmem:[%s1 + $0x60] sm:$0xff]
  %v41 = vld [vmem:[%s1 + $0x68] sm:$0xff]
  %v42 = vld [vmem:[%s1 + $0x70] sm:$0xff]
  %v43 = vld [vmem:[%s1 + $0x78] sm:$0xff]
  %v44 = vld [vmem:[%s1 + $0x80] sm:$0xff]
  %v45 = vld [vmem:[%s1 + $0x88] sm:$0xff]
  %v46 = vld [vmem:[%s1 + $0x90] sm:$0x3f]
  %v47 = vld [vmem:[%s2] sm:$0x1]
  %v49 = vlaneseq
  %v50 = vshrl.u32 %v49, 7
  %v51 = vsub.s32 0, %v50
  %v52 = vrot.slane %v47, %v51
  %vm54 = vcmask 179200
  %v56 = vsel %vm54, %v15, 0
  %v59 = vsel %vm54, %v17, 0
  %v62 = vsel %vm54, %v19, 0
  %v65 = vsel %vm54, %v21, 0
  %v68 = vsel %vm54, %v23, 0
  %v71 = vsel %vm54, %v25, 0
  %v74 = vsel %vm54, %v27, 0
  %vm76 = vcmask 1045504
  %v78 = vsel %vm76, %v46, 0
  %80 = vmatprep.subr.mxu0 0.0
  %81 = vmatpush1.msra.mxu0 %v28
  %82 = vmatprep.subr.mxu0 0.0
  %83 = vmatpush1.msra.mxu0 %v29
  %84 = vmatprep.subr.mxu0 0.0
  %85 = vmatpush1.msra.mxu0 %v30
  %86 = vmatprep.subr.mxu0 0.0
  %87 = vmatpush1.msra.mxu0 %v31
  %88 = vmatprep.subr.mxu0 0.0
  %89 = vmatpush1.msra.mxu0 %v32
  %90 = vmatprep.subr.mxu0 0.0
  %91 = vmatpush1.msra.mxu0 %v33
  %92 = vmatprep.subr.mxu0 0.0
  %93 = vmatpush1.msra.mxu0 %v34
  %94 = vmatprep.subr.mxu0 0.0
  %95 = vmatpush1.msra.mxu0 %v35
  %96 = vmatprep.subr.mxu0 0.0
  %97 = vmatpush1.msra.mxu0 %v36
  %98 = vmatprep.subr.mxu0 0.0
  %99 = vmatpush1.msra.mxu0 %v37
  %100 = vmatprep.subr.mxu0 0.0
  %101 = vmatpush1.msra.mxu0 %v38
  %102 = vmatprep.subr.mxu0 0.0
  %103 = vmatpush1.msra.mxu0 %v39
  %104 = vmatprep.subr.mxu0 0.0
  %105 = vmatpush1.msra.mxu0 %v40
  %106 = vmatprep.subr.mxu0 0.0
  %107 = vmatpush1.msra.mxu0 %v41
  %108 = vmatprep.subr.mxu0 0.0
  %109 = vmatpush1.msra.mxu0 %v42
  %110 = vmatprep.subr.mxu0 0.0
  %111 = vmatpush1.msra.mxu0 %v43
  %112 = vmatprep.subr.mxu0 0.0
  %113 = vmatpush1.msra.mxu0 %v44
  %114 = vmatprep.subr.mxu0 0.0
  %115 = vmatpush1.msra.mxu0 %v45
  %116 = vmatprep.subr.mxu0 0.0
  %117 = vmatpush1.msra.mxu0 %v78
  %118 = vmatprep.subr.mxu0 0.0
  %119 = vmatpush1.msra.mxu0 0.0
  %120 = vmatprep.subr.mxu0 0.0
  %121 = vmatpush1.msra.mxu0 0.0
  %122 = vmatprep.subr.mxu0 0.0
  %123 = vmatpush1.msra.mxu0 0.0
  %124 = vmatprep.subr.mxu0 0.0
  %125 = vmatpush1.msra.mxu0 0.0
  %126 = vmatprep.subr.mxu0 0.0
  %127 = vmatpush1.msra.mxu0 0.0
  %128 = vmatprep.subr.mxu0 0.0
  %129 = vmatpush1.msra.mxu0 0.0
  %130 = vmatprep.subr.mxu0 0.0
  %131 = vmatpush1.msra.mxu0 0.0
  %132 = vmatprep.subr.mxu0 0.0
  %133 = vmatpush1.msra.mxu0 0.0
  %134 = vmatprep.subr.mxu0 0.0
  %135 = vmatpush1.msra.mxu0 0.0
  %136 = vmatprep.subr.mxu0 0.0
  %137 = vmatpush1.msra.mxu0 0.0
  %138 = vmatprep.subr.mxu0 0.0
  %139 = vmatpush1.msra.mxu0 0.0
  %140 = vmatprep.subr.mxu0 0.0
  %141 = vmatpush1.msra.mxu0 0.0
  %142 = vmatprep.subr.mxu0 0.0
  %143 = vmatpush1.msra.mxu0 0.0
  %144 = vmatprep.mubr.f32.mxu0 %v56
  %145 = vmatmul.mubr.f32.gmra.mrb[0].mxu0 %v14
  %v146 = vpop.f32.mrb[0].mxu0
  %v147 = vadd.f32 %v52, %v146
  %v148 = vpop.f32.mrb[0].mxu0
  %149 = vmatprep.mubr.f32.mxu0 %v59
  %150 = vmatmul.mubr.f32.gmra.mrb[0].mxu0 %v16
  %v151 = vpop.f32.mrb[0].mxu0
  %v152 = vadd.f32 %v52, %v151
  %v153 = vpop.f32.mrb[0].mxu0
  %154 = vmatprep.mubr.f32.mxu0 %v62
  %155 = vmatmul.mubr.f32.gmra.mrb[0].mxu0 %v18
  %v156 = vpop.f32.mrb[0].mxu0
  %v157 = vadd.f32 %v52, %v156
  %v158 = vpop.f32.mrb[0].mxu0
  %159 = vmatprep.mubr.f32.mxu0 %v65
  %160 = vmatmul.mubr.f32.gmra.mrb[0].mxu0 %v20
  %v161 = vpop.f32.mrb[0].mxu0
  %v162 = vadd.f32 %v52, %v161
  %v163 = vpop.f32.mrb[0].mxu0
  %164 = vmatprep.mubr.f32.mxu0 %v68
  %165 = vmatmul.mubr.f32.gmra.mrb[0].mxu0 %v22
  %v166 = vpop.f32.mrb[0].mxu0
  %v167 = vadd.f32 %v52, %v166
  %v168 = vpop.f32.mrb[0].mxu0
  %169 = vmatprep.mubr.f32.mxu0 %v71
  %170 = vmatmul.mubr.f32.gmra.mrb[0].mxu0 %v24
  %v171 = vpop.f32.mrb[0].mxu0
  %v172 = vadd.f32 %v52, %v171
  %v173 = vpop.f32.mrb[0].mxu0
  %174 = vmatprep.mubr.f32.mxu0 %v74
  %175 = vmatmul.mubr.f32.gmra.mrb[0].mxu0 %v26
  %v176 = vpop.f32.mrb[0].mxu0
  %v177 = vadd.f32 %v52, %v176
  %v178 = vpop.f32.mrb[0].mxu0
  %179 = vdwg.mxu0
  %v180 = vmax.f32 %v147, 0.0
  %v181 = vmax.f32 %v152, 0.0
  %v182 = vmax.f32 %v157, 0.0
  %v183 = vmax.f32 %v162, 0.0
  %v184 = vmax.f32 %v167, 0.0
  %v185 = vmax.f32 %v172, 0.0
  %v186 = vmax.f32 %v177, 0.0
  %187 = vst [vmem:[%s3] sm:$0xff] %v180
  %188 = vst [vmem:[%s3 + $0x8] sm:$0xff] %v181
  %189 = vst [vmem:[%s3 + $0x10] sm:$0xff] %v182
  %190 = vst [vmem:[%s3 + $0x18] sm:$0xff] %v183
  %191 = vst [vmem:[%s3 + $0x20] sm:$0xff] %v184
  %192 = vst [vmem:[%s3 + $0x28] sm:$0xff] %v185
  %193 = vst [vmem:[%s3 + $0x30] sm:$0xff] %v186
  // Predicated region
  $region14: #{inception_features.11} parent=0 // pred_check
    _
  $region15: #{inception_features.11} parent=0 // pred_check_branch
    %195 = sbr.rel (0) target = $region17
  $region16: #{inception_features.11} parent=0 // pred_region
    _
  $region17: #{inception_features.11} parent=0 // pred_fallthru
    _
  // Predicated region
  $region18: #{inception_features.11} parent=0 // pred_check
    _
  $region19: #{inception_features.11} parent=0 // pred_check_branch
    %197 = sbr.rel (0) target = $region21
  $region20: #{inception_features.11} parent=0 // pred_region
    _
  $region21: #{inception_features.11} parent=0 // pred_fallthru
    _

// kernel: inception_features.12
$region0: #{inception_features.12}
  #allocation0 [shape = 'u32[]', space=smem, size = 0x4, offset = 0x4, fixed_abs, tag = 'smem constant byte address 0x4 - core index']
  #allocation1 [shape = 'u32[144,128]{1,0:T(1,128)}', space=vmem, size = 0x12000, scoped, tag = 'internal scratch']
  %s0 = inlined_call_operand.vmem [shape: f32[56,72], index: 0, kind: input, shape index: {}]
  %s1 = inlined_call_operand.vmem [shape: f32[72,128], index: 1, kind: input, shape index: {}]
  %s2 = inlined_call_operand.vmem [shape: f32[1,128], index: 2, kind: input, shape index: {}]
  %s3 = inlined_call_operand.vmem [shape: f32[56,128], index: 3, kind: output, shape index: {}]
  %s4 = sld [smem:[#allocation0]]
  $region22: #{inception_features.12} parent=0
    _
  %s6 = ssub.s32 1, %s4
  %s7 = scalar_select 0, %s6, %s4
  // Predicated region
  $region2: #{inception_features.12} parent=0 // pred_check
    _
  $region3: #{inception_features.12} parent=0 // pred_check_branch
    %9 = sbr.rel (0) target = $region5
  $region4: #{inception_features.12} parent=0 // pred_region
    _
  $region5: #{inception_features.12} parent=0 // pred_fallthru
    _
  // Predicated region
  $region6: #{inception_features.12} parent=0 // pred_check
    _
  $region7: #{inception_features.12} parent=0 // pred_check_branch
    %11 = sbr.rel (0) target = $region9
  $region8: #{inception_features.12} parent=0 // pred_region
    _
  $region9: #{inception_features.12} parent=0 // pred_fallthru
    _
  // Predicated region
  $region10: #{inception_features.12} parent=0 // pred_check
    _
  $region11: #{inception_features.12} parent=0 // pred_check_branch
    %13 = sbr.rel (0) target = $region13
  $region12: #{inception_features.12} parent=0 // pred_region
    _
  $region13: #{inception_features.12} parent=0 // pred_fallthru
    _
  %v14 = vld [vmem:[%s0] sm:$0xff]
  %v15 = vld [vmem:[%s0 + $0x8] sm:$0xff]
  %v16 = vld [vmem:[%s0 + $0x10] sm:$0xff]
  %v17 = vld [vmem:[%s0 + $0x18] sm:$0xff]
  %v18 = vld [vmem:[%s0 + $0x20] sm:$0xff]
  %v19 = vld [vmem:[%s0 + $0x28] sm:$0xff]
  %v20 = vld [vmem:[%s0 + $0x30] sm:$0xff]
  %v21 = vld [vmem:[%s1] sm:$0xff]
  %v22 = vld [vmem:[%s1 + $0x8] sm:$0xff]
  %v23 = vld [vmem:[%s1 + $0x10] sm:$0xff]
  %v24 = vld [vmem:[%s1 + $0x18] sm:$0xff]
  %v25 = vld [vmem:[%s1 + $0x20] sm:$0xff]
  %v26 = vld [vmem:[%s1 + $0x28] sm:$0xff]
  %v27 = vld [vmem:[%s1 + $0x30] sm:$0xff]
  %v28 = vld [vmem:[%s1 + $0x38] sm:$0xff]
  %v29 = vld [vmem:[%s1 + $0x40] sm:$0xff]
  %v30 = vld [vmem:[%s2] sm:$0x1]
  %v32 = vlaneseq
  %v33 = vshrl.u32 %v32, 7
  %v34 = vsub.s32 0, %v33
  %v35 = vrot.slane %v30, %v34
  %vm37 = vcmask 588800
  %v39 = vsel %vm37, %v14, 0
  %v42 = vsel %vm37, %v15, 0
  %v45 = vsel %vm37, %v16, 0
  %v48 = vsel %vm37, %v17, 0
  %v51 = vsel %vm37, %v18, 0
  %v54 = vsel %vm37, %v19, 0
  %v57 = vsel %vm37, %v20, 0
  %59 = vmatprep.subr.mxu0 0.0
  %60 = vmatpush1.msra.mxu0 %v21
  %61 = vmatprep.subr.mxu0 0.0
  %62 = vmatpush1.msra.mxu0 %v22
  %63 = vmatprep.subr.mxu0 0.0
  %64 = vmatpush1.msra.mxu0 %v23
  %65 = vmatprep.subr.mxu0 0.0
  %66 = vmatpush1.msra.mxu0 %v24
  %67 = vmatprep.subr.mxu0 0.0
  %68 = vmatpush1.msra.mxu0 %v25
  %69 = vmatprep.subr.mxu0 0.0
  %70 = vmatpush1.msra.mxu0 %v26
  %71 = vmatprep.subr.mxu0 0.0
  %72 = vmatpush1.msra.mxu0 %v27
  %73 = vmatprep.subr.mxu0 0.0
  %74 = vmatpush1.msra.mxu0 %v28
  %75 = vmatprep.subr.mxu0 0.0
  %76 = vmatpush1.msra.mxu0 %v29
  %77 = vmatprep.subr.mxu0 0.0
  %78 = vmatpush1.msra.mxu0 0.0
  %79 = vmatprep.subr.mxu0 0.0
  %80 = vmatpush1.msra.mxu0 0.0
  %81 = vmatprep.subr.mxu0 0.0
  %82 = vmatpush1.msra.mxu0 0.0
  %83 = vmatprep.subr.mxu0 0.0
  %84 = vmatpush1.msra.mxu0 0.0
  %85 = vmatprep.subr.mxu0 0.0
  %86 = vmatpush1.msra.mxu0 0.0
  %87 = vmatprep.subr.mxu0 0.0
  %88 = vmatpush1.msra.mxu0 0.0
  %89 = vmatprep.subr.mxu0 0.0
  %90 = vmatpush1.msra.mxu0 0.0
  %91 = vmatprep.subr.mxu0 0.0
  %92 = vmatpush1.msra.mxu0 0.0
  %93 = vmatprep.subr.mxu0 0.0
  %94 = vmatpush1.msra.mxu0 0.0
  %95 = vmatprep.subr.mxu0 0.0
  %96 = vmatpush1.msra.mxu0 0.0
  %97 = vmatprep.subr.mxu0 0.0
  %98 = vmatpush1.msra.mxu0 0.0
  %99 = vmatprep.subr.mxu0 0.0
  %100 = vmatpush1.msra.mxu0 0.0
  %101 = vmatprep.subr.mxu0 0.0
  %102 = vmatpush1.msra.mxu0 0.0
  %103 = vmatprep.subr.mxu0 0.0
  %104 = vmatpush1.msra.mxu0 0.0
  %105 = vmatprep.subr.mxu0 0.0
  %106 = vmatpush1.msra.mxu0 0.0
  %107 = vmatprep.subr.mxu0 0.0
  %108 = vmatpush1.msra.mxu0 0.0
  %109 = vmatprep.subr.mxu0 0.0
  %110 = vmatpush1.msra.mxu0 0.0
  %111 = vmatprep.subr.mxu0 0.0
  %112 = vmatpush1.msra.mxu0 0.0
  %113 = vmatprep.subr.mxu0 0.0
  %114 = vmatpush1.msra.mxu0 0.0
  %115 = vmatprep.subr.mxu0 0.0
  %116 = vmatpush1.msra.mxu0 0.0
  %117 = vmatprep.subr.mxu0 0.0
  %118 = vmatpush1.msra.mxu0 0.0
  %119 = vmatprep.subr.mxu0 0.0
  %120 = vmatpush1.msra.mxu0 0.0
  %121 = vmatprep.subr.mxu0 0.0
  %122 = vmatpush1.msra.mxu0 0.0
  %123 = vmatprep.mubr.f32.mxu0 0.0
  %124 = vmatmul.mubr.f32.gmra.mrb[0].mxu0 %v39
  %v125 = vpop.f32.mrb[0].mxu0
  %v126 = vadd.f32 %v35, %v125
  %v127 = vpop.f32.mrb[0].mxu0
  %128 = vmatprep.mubr.f32.mxu0 0.0
  %129 = vmatmul.mubr.f32.gmra.mrb[0].mxu0 %v42
  %v130 = vpop.f32.mrb[0].mxu0
  %v131 = vadd.f32 %v35, %v130
  %v132 = vpop.f32.mrb[0].mxu0
  %133 = vmatprep.mubr.f32.mxu0 0.0
  %134 = vmatmul.mubr.f32.gmra.mrb[0].mxu0 %v45
  %v135 = vpop.f32.mrb[0].mxu0
  %v136 = vadd.f32 %v35, %v135
  %v137 = vpop.f32.mrb[0].mxu0
  %138 = vmatprep.mubr.f32.mxu0 0.0
  %139 = vmatmul.mubr.f32.gmra.mrb[0].mxu0 %v48
  %v140 = vpop.f32.mrb[0].mxu0
  %v141 = vadd.f32 %v35, %v140
  %v142 = vpop.f32.mrb[0].mxu0
  %143 = vmatprep.mubr.f32.mxu0 0.0
  %144 = vmatmul.mubr.f32.gmra.mrb[0].mxu0 %v51
  %v145 = vpop.f32.mrb[0].mxu0
  %v146 = vadd.f32 %v35, %v145
  %v147 = vpop.f32.mrb[0].mxu0
  %148 = vmatprep.mubr.f32.mxu0 0.0
  %149 = vmatmul.mubr.f32.gmra.mrb[0].mxu0 %v54
  %v150 = vpop.f32.mrb[0].mxu0
  %v151 = vadd.f32 %v35, %v150
  %v152 = vpop.f32.mrb[0].mxu0
  %153 = vmatprep.mubr.f32.mxu0 0.0
  %154 = vmatmul.mubr.f32.gmra.mrb[0].mxu0 %v57
  %v155 = vpop.f32.mrb[0].mxu0
  %v156 = vadd.f32 %v35, %v155
  %v157 = vpop.f32.mrb[0].mxu0
  %158 = vdwg.mxu0
  %v159 = vmax.f32 %v126, 0.0
  %v160 = vmax.f32 %v131, 0.0
  %v161 = vmax.f32 %v136, 0.0
  %v162 = vmax.f32 %v141, 0.0
  %v163 = vmax.f32 %v146, 0.0
  %v164 = vmax.f32 %v151, 0.0
  %v165 = vmax.f32 %v156, 0.0
  %166 = vst [vmem:[%s3] sm:$0xff] %v159
  %167 = vst [vmem:[%s3 + $0x8] sm:$0xff] %v160
  %168 = vst [vmem:[%s3 + $0x10] sm:$0xff] %v161
  %169 = vst [vmem:[%s3 + $0x18] sm:$0xff] %v162
  %170 = vst [vmem:[%s3 + $0x20] sm:$0xff] %v163
  %171 = vst [vmem:[%s3 + $0x28] sm:$0xff] %v164
  %172 = vst [vmem:[%s3 + $0x30] sm:$0xff] %v165
  // Predicated region
  $region14: #{inception_features.12} parent=0 // pred_check
    _
  $region15: #{inception_features.12} parent=0 // pred_check_branch
    %174 = sbr.rel (0) target = $region17
  $region16: #{inception_features.12} parent=0 // pred_region
    _
  $region17: #{inception_features.12} parent=0 // pred_fallthru
    _
  // Predicated region
  $region18: #{inception_features.12} parent=0 // pred_check
    _
  $region19: #{inception_features.12} parent=0 // pred_check_branch
    %176 = sbr.rel (0) target = $region21
  $region20: #{inception_features.12} parent=0 // pred_region
    _
  $region21: #{inception_features.12} parent=0 // pred_fallthru
    _

// kernel: inception_features.13
$region0: #{inception_features.13}
  #allocation0 [shape = 'u32[]', space=smem, size = 0x4, offset = 0x4, fixed_abs, tag = 'smem constant byte address 0x4 - core index']
  #allocation1 [shape = 'u32[144,128]{1,0:T(1,128)}', space=vmem, size = 0x12000, scoped, tag = 'internal scratch']
  %s0 = inlined_call_operand.vmem [shape: f32[56,108], index: 0, kind: input, shape index: {}]
  %s1 = inlined_call_operand.vmem [shape: f32[108,128], index: 1, kind: input, shape index: {}]
  %s2 = inlined_call_operand.vmem [shape: f32[1,128], index: 2, kind: input, shape index: {}]
  %s3 = inlined_call_operand.vmem [shape: f32[56,128], index: 3, kind: output, shape index: {}]
  %s4 = sld [smem:[#allocation0]]
  $region22: #{inception_features.13} parent=0
    _
  %s6 = ssub.s32 1, %s4
  %s7 = scalar_select 0, %s6, %s4
  // Predicated region
  $region2: #{inception_features.13} parent=0 // pred_check
    _
  $region3: #{inception_features.13} parent=0 // pred_check_branch
    %9 = sbr.rel (0) target = $region5
  $region4: #{inception_features.13} parent=0 // pred_region
    _
  $region5: #{inception_features.13} parent=0 // pred_fallthru
    _
  // Predicated region
  $region6: #{inception_features.13} parent=0 // pred_check
    _
  $region7: #{inception_features.13} parent=0 // pred_check_branch
    %11 = sbr.rel (0) target = $region9
  $region8: #{inception_features.13} parent=0 // pred_region
    _
  $region9: #{inception_features.13} parent=0 // pred_fallthru
    _
  // Predicated region
  $region10: #{inception_features.13} parent=0 // pred_check
    _
  $region11: #{inception_features.13} parent=0 // pred_check_branch
    %13 = sbr.rel (0) target = $region13
  $region12: #{inception_features.13} parent=0 // pred_region
    _
  $region13: #{inception_features.13} parent=0 // pred_fallthru
    _
  %v14 = vld [vmem:[%s0] sm:$0xff]
  %v15 = vld [vmem:[%s0 + $0x8] sm:$0xff]
  %v16 = vld [vmem:[%s0 + $0x10] sm:$0xff]
  %v17 = vld [vmem:[%s0 + $0x18] sm:$0xff]
  %v18 = vld [vmem:[%s0 + $0x20] sm:$0xff]
  %v19 = vld [vmem:[%s0 + $0x28] sm:$0xff]
  %v20 = vld [vmem:[%s0 + $0x30] sm:$0xff]
  %v21 = vld [vmem:[%s1] sm:$0xff]
  %v22 = vld [vmem:[%s1 + $0x8] sm:$0xff]
  %v23 = vld [vmem:[%s1 + $0x10] sm:$0xff]
  %v24 = vld [vmem:[%s1 + $0x18] sm:$0xff]
  %v25 = vld [vmem:[%s1 + $0x20] sm:$0xff]
  %v26 = vld [vmem:[%s1 + $0x28] sm:$0xff]
  %v27 = vld [vmem:[%s1 + $0x30] sm:$0xff]
  %v28 = vld [vmem:[%s1 + $0x38] sm:$0xff]
  %v29 = vld [vmem:[%s1 + $0x40] sm:$0xff]
  %v30 = vld [vmem:[%s1 + $0x48] sm:$0xff]
  %v31 = vld [vmem:[%s1 + $0x50] sm:$0xff]
  %v32 = vld [vmem:[%s1 + $0x58] sm:$0xff]
  %v33 = vld [vmem:[%s1 + $0x60] sm:$0xff]
  %v34 = vld [vmem:[%s1 + $0x68] sm:$0xf]
  %v35 = vld [vmem:[%s2] sm:$0x1]
  %v37 = vlaneseq
  %v38 = vshrl.u32 %v37, 7
  %v39 = vsub.s32 0, %v38
  %v40 = vrot.slane %v35, %v39
  %vm42 = vcmask 883712
  %v44 = vsel %vm42, %v14, 0
  %v47 = vsel %vm42, %v15, 0
  %v50 = vsel %vm42, %v16, 0
  %v53 = vsel %vm42, %v17, 0
  %v56 = vsel %vm42, %v18, 0
  %v59 = vsel %vm42, %v19, 0
  %v62 = vsel %vm42, %v20, 0
  %vm64 = vcmask 1043456
  %v66 = vsel %vm64, %v34, 0
  %68 = vmatprep.subr.mxu0 0.0
  %69 = vmatpush1.msra.mxu0 %v21
  %70 = vmatprep.subr.mxu0 0.0
  %71 = vmatpush1.msra.mxu0 %v22
  %72 = vmatprep.subr.mxu0 0.0
  %73 = vmatpush1.msra.mxu0 %v23
  %74 = vmatprep.subr.mxu0 0.0
  %75 = vmatpush1.msra.mxu0 %v24
  %76 = vmatprep.subr.mxu0 0.0
  %77 = vmatpush1.msra.mxu0 %v25
  %78 = vmatprep.subr.mxu0 0.0
  %79 = vmatpush1.msra.mxu0 %v26
  %80 = vmatprep.subr.mxu0 0.0
  %81 = vmatpush1.msra.mxu0 %v27
  %82 = vmatprep.subr.mxu0 0.0
  %83 = vmatpush1.msra.mxu0 %v28
  %84 = vmatprep.subr.mxu0 0.0
  %85 = vmatpush1.msra.mxu0 %v29
  %86 = vmatprep.subr.mxu0 0.0
  %87 = vmatpush1.msra.mxu0 %v30
  %88 = vmatprep.subr.mxu0 0.0
  %89 = vmatpush1.msra.mxu0 %v31
  %90 = vmatprep.subr.mxu0 0.0
  %91 = vmatpush1.msra.mxu0 %v32
  %92 = vmatprep.subr.mxu0 0.0
  %93 = vmatpush1.msra.mxu0 %v33
  %94 = vmatprep.subr.mxu0 0.0
  %95 = vmatpush1.msra.mxu0 %v66
  %96 = vmatprep.subr.mxu0 0.0
  %97 = vmatpush1.msra.mxu0 0.0
  %98 = vmatprep.subr.mxu0 0.0
  %99 = vmatpush1.msra.mxu0 0.0
  %100 = vmatprep.subr.mxu0 0.0
  %101 = vmatpush1.msra.mxu0 0.0
  %102 = vmatprep.subr.mxu0 0.0
  %103 = vmatpush1.msra.mxu0 0.0
  %104 = vmatprep.subr.mxu0 0.0
  %105 = vmatpush1.msra.mxu0 0.0
  %106 = vmatprep.subr.mxu0 0.0
  %107 = vmatpush1.msra.mxu0 0.0
  %108 = vmatprep.subr.mxu0 0.0
  %109 = vmatpush1.msra.mxu0 0.0
  %110 = vmatprep.subr.mxu0 0.0
  %111 = vmatpush1.msra.mxu0 0.0
  %112 = vmatprep.subr.mxu0 0.0
  %113 = vmatpush1.msra.mxu0 0.0
  %114 = vmatprep.subr.mxu0 0.0
  %115 = vmatpush1.msra.mxu0 0.0
  %116 = vmatprep.subr.mxu0 0.0
  %117 = vmatpush1.msra.mxu0 0.0
  %118 = vmatprep.subr.mxu0 0.0
  %119 = vmatpush1.msra.mxu0 0.0
  %120 = vmatprep.subr.mxu0 0.0
  %121 = vmatpush1.msra.mxu0 0.0
  %122 = vmatprep.subr.mxu0 0.0
  %123 = vmatpush1.msra.mxu0 0.0
  %124 = vmatprep.subr.mxu0 0.0
  %125 = vmatpush1.msra.mxu0 0.0
  %126 = vmatprep.subr.mxu0 0.0
  %127 = vmatpush1.msra.mxu0 0.0
  %128 = vmatprep.subr.mxu0 0.0
  %129 = vmatpush1.msra.mxu0 0.0
  %130 = vmatprep.subr.mxu0 0.0
  %131 = vmatpush1.msra.mxu0 0.0
  %132 = vmatprep.mubr.f32.mxu0 0.0
  %133 = vmatmul.mubr.f32.gmra.mrb[0].mxu0 %v44
  %v134 = vpop.f32.mrb[0].mxu0
  %v135 = vadd.f32 %v40, %v134
  %v136 = vpop.f32.mrb[0].mxu0
  %137 = vmatprep.mubr.f32.mxu0 0.0
  %138 = vmatmul.mubr.f32.gmra.mrb[0].mxu0 %v47
  %v139 = vpop.f32.mrb[0].mxu0
  %v140 = vadd.f32 %v40, %v139
  %v141 = vpop.f32.mrb[0].mxu0
  %142 = vmatprep.mubr.f32.mxu0 0.0
  %143 = vmatmul.mubr.f32.gmra.mrb[0].mxu0 %v50
  %v144 = vpop.f32.mrb[0].mxu0
  %v145 = vadd.f32 %v40, %v144
  %v146 = vpop.f32.mrb[0].mxu0
  %147 = vmatprep.mubr.f32.mxu0 0.0
  %148 = vmatmul.mubr.f32.gmra.mrb[0].mxu0 %v53
  %v149 = vpop.f32.mrb[0].mxu0
  %v150 = vadd.f32 %v40, %v149
  %v151 = vpop.f32.mrb[0].mxu0
  %152 = vmatprep.mubr.f32.mxu0 0.0
  %153 = vmatmul.mubr.f32.gmra.mrb[0].mxu0 %v56
  %v154 = vpop.f32.mrb[0].mxu0
  %v155 = vadd.f32 %v40, %v154
  %v156 = vpop.f32.mrb[0].mxu0
  %157 = vmatprep.mubr.f32.mxu0 0.0
  %158 = vmatmul.mubr.f32.gmra.mrb[0].mxu0 %v59
  %v159 = vpop.f32.mrb[0].mxu0
  %v160 = vadd.f32 %v40, %v159
  %v161 = vpop.f32.mrb[0].mxu0
  %162 = vmatprep.mubr.f32.mxu0 0.0
  %163 = vmatmul.mubr.f32.gmra.mrb[0].mxu0 %v62
  %v164 = vpop.f32.mrb[0].mxu0
  %v165 = vadd.f32 %v40, %v164
  %v166 = vpop.f32.mrb[0].mxu0
  %167 = vdwg.mxu0
  %v168 = vmax.f32 %v135, 0.0
  %v169 = vmax.f32 %v140, 0.0
  %v170 = vmax.f32 %v145, 0.0
  %v171 = vmax.f32 %v150, 0.0
  %v172 = vmax.f32 %v155, 0.0
  %v173 = vmax.f32 %v160, 0.0
  %v174 = vmax.f32 %v165, 0.0
  %175 = vst [vmem:[%s3] sm:$0xff] %v168
  %176 = vst [vmem:[%s3 + $0x8] sm:$0xff] %v169
  %177 = vst [vmem:[%s3 + $0x10] sm:$0xff] %v170
  %178 = vst [vmem:[%s3 + $0x18] sm:$0xff] %v171
  %179 = vst [vmem:[%s3 + $0x20] sm:$0xff] %v172
  %180 = vst [vmem:[%s3 + $0x28] sm:$0xff] %v173
  %181 = vst [vmem:[%s3 + $0x30] sm:$0xff] %v174
  // Predicated region
  $region14: #{inception_features.13} parent=0 // pred_check
    _
  $region15: #{inception_features.13} parent=0 // pred_check_branch
    %183 = sbr.rel (0) target = $region17
  $region16: #{inception_features.13} parent=0 // pred_region
    _
  $region17: #{inception_features.13} parent=0 // pred_fallthru
    _
  // Predicated region
  $region18: #{inception_features.13} parent=0 // pred_check
    _
  $region19: #{inception_features.13} parent=0 // pred_check_branch
    %185 = sbr.rel (0) target = $region21
  $region20: #{inception_features.13} parent=0 // pred_region
    _
  $region21: #{inception_features.13} parent=0 // pred_fallthru
    _

// kernel: inception_features.15
$region0: #{inception_features.15}
  #allocation0 [shape = 'u32[]', space=smem, size = 0x4, offset = 0x4, fixed_abs, tag = 'smem constant byte address 0x4 - core index']
  #allocation1 [shape = 'u32[144,128]{1,0:T(1,128)}', space=vmem, size = 0x12000, scoped, tag = 'internal scratch']
  %s0 = inlined_call_operand.vmem [shape: f32[56,32], index: 0, kind: input, shape index: {}]
  %s1 = inlined_call_operand.vmem [shape: f32[32,2048], index: 1, kind: input, shape index: {}]
  %s2 = inlined_call_operand.vmem [shape: f32[1,2048], index: 2, kind: input, shape index: {}]
  %s3 = inlined_call_operand.vmem [shape: f32[1,56], index: 3, kind: input, shape index: {}]
  %s4 = inlined_call_operand.hbm [shape: f32[1,2048], index: 4, kind: output, shape index: {}]
  %s5 = sld [smem:[#allocation0]]
  $region72: #{inception_features.15} parent=0
    _
  %s7 = ssub.s32 1, %s5
  %s8 = scalar_select 0, %s7, %s5
  $region1: #{inception_features.15} parent=0
    #allocation2 [shape = 'u8[262144]{0}', space=vmem, size = 0x40000, scoped, tag = 'input window, operand 1']
    #allocation3 [shape = 'u8[8192]{0}', space=vmem, size = 0x2000, scoped, tag = 'output window, operand 0']
    #allocation4 [shape = 's32[2]{0}', space=sflag, size = 0x8, scoped, tag = 'scoped memory for inception_features.15']
    %9 = vsyncpa [#allocation4], 0
    %s10 = scalar_lea.sflag [#allocation4], 1
    %11 = vsyncpa %s10, 0
    loop: start=0, step=1, limit=4
    $region2: #{inception_features.15} parent=1 // loop_pre_header
      _
    $region3: #{inception_features.15} parent=1 // loop_header
      %s13 = sphi 0, %s17
      %p14 = scmp.ge.s32.totalorder %s13, 4
      %s21 = sphi 0, %s21
      %s23 = sphi 0, %s21
      %s24 = sphi 0, %s23
      %s38 = sphi 0, %s24
      %s44 = sphi 0, %s46
      %s47 = sphi 0, %s44
      %s48 = sphi 0, %s47
      %s64 = sphi 0, %s48
      %s70 = sphi 0, %s72
      %s73 = sphi 0, %s70
      %s74 = sphi 0, %s73
      %s90 = sphi 0, %s74
      %s94 = sphi 0, %s94
      %s96 = sphi 0, %s94
      %s97 = sphi 0, %s96
      %s111 = sphi 0, %s97
      %s117 = sphi 0, %s119
      %s120 = sphi 0, %s117
      %s121 = sphi 0, %s120
      %s137 = sphi 0, %s121
    $region4: #{inception_features.15} parent=1 // loop_header_branch
      %16 = sbr.rel (%p14) target = $region8
    $region5: #{inception_features.15} parent=1 // loop_body
      %s18 = ssub.s32 %s13, 1
      %s19 = ssub.s32 %s13, 2
      %s20 = sadd.s32 %s13, 1
      %s22 = sadd.s32 %s21, 1
      %p25 = scmp.eq.s32.totalorder %s13, 1
      %p26 = scmp.ne.s32.totalorder %s21, %s23
      %p27 = scmp.eq.s32.totalorder %s13, 0
      %p28 = por %p26, %p27
      %p29 = scmp.ne.s32.totalorder %s21, %s23
      %p30 = scmp.eq.s32.totalorder %s18, 1
      %p31 = por %p29, %p30
      %p32 = scmp.ne.s32.totalorder %s23, %s24
      %p33 = scmp.eq.s32.totalorder %s18, 0
      %p34 = por %p32, %p33
      %p35 = scmp.ne.s32.totalorder %s23, %s24
      %p36 = scmp.eq.s32.totalorder %s19, 1
      %p37 = por %p35, %p36
      %p39 = scmp.ne.s32.totalorder %s24, %s38
      %p40 = scmp.eq.s32.totalorder %s19, 0
      %p41 = por %p39, %p40
      %s42 = ssub.s32 %s13, %s20
      %p43 = scmp.eq.s32.totalorder %s42, 0
      %s45 = sadd.s32 %s44, 1
      %s46 = scalar_select %p43, %s44, %s45
      %p49 = pneg %p43
      %p50 = scmp.eq.s32.totalorder %s13, 1
      %p51 = por %p49, %p50
      %p52 = scmp.ne.s32.totalorder %s44, %s47
      %p53 = scmp.eq.s32.totalorder %s13, 0
      %p54 = por %p52, %p53
      %p55 = scmp.ne.s32.totalorder %s44, %s47
      %p56 = scmp.eq.s32.totalorder %s18, 1
      %p57 = por %p55, %p56
      %p58 = scmp.ne.s32.totalorder %s47, %s48
      %p59 = scmp.eq.s32.totalorder %s18, 0
      %p60 = por %p58, %p59
      %p61 = scmp.ne.s32.totalorder %s47, %s48
      %p62 = scmp.eq.s32.totalorder %s19, 1
      %p63 = por %p61, %p62
      %p65 = scmp.ne.s32.totalorder %s48, %s64
      %p66 = scmp.eq.s32.totalorder %s19, 0
      %p67 = por %p65, %p66
      %s68 = ssub.s32 %s13, %s20
      %p69 = scmp.eq.s32.totalorder %s68, 0
      %s71 = sadd.s32 %s70, 1
      %s72 = scalar_select %p69, %s70, %s71
      %p75 = pneg %p69
      %p76 = scmp.eq.s32.totalorder %s13, 1
      %p77 = por %p75, %p76
      %p78 = scmp.ne.s32.totalorder %s70, %s73
      %p79 = scmp.eq.s32.totalorder %s13, 0
      %p80 = por %p78, %p79
      %p81 = scmp.ne.s32.totalorder %s70, %s73
      %p82 = scmp.eq.s32.totalorder %s18, 1
      %p83 = por %p81, %p82
      %p84 = scmp.ne.s32.totalorder %s73, %s74
      %p85 = scmp.eq.s32.totalorder %s18, 0
      %p86 = por %p84, %p85
      %p87 = scmp.ne.s32.totalorder %s73, %s74
      %p88 = scmp.eq.s32.totalorder %s19, 1
      %p89 = por %p87, %p88
      %p91 = scmp.ne.s32.totalorder %s74, %s90
      %p92 = scmp.eq.s32.totalorder %s19, 0
      %p93 = por %p91, %p92
      %s95 = sadd.s32 %s94, 1
      %p98 = scmp.eq.s32.totalorder %s13, 1
      %p99 = scmp.ne.s32.totalorder %s94, %s96
      %p100 = scmp.eq.s32.totalorder %s13, 0
      %p101 = por %p99, %p100
      %p102 = scmp.ne.s32.totalorder %s94, %s96
      %p103 = scmp.eq.s32.totalorder %s18, 1
      %p104 = por %p102, %p103
      %p105 = scmp.ne.s32.totalorder %s96, %s97
      %p106 = scmp.eq.s32.totalorder %s18, 0
      %p107 = por %p105, %p106
      %p108 = scmp.ne.s32.totalorder %s96, %s97
      %p109 = scmp.eq.s32.totalorder %s19, 1
      %p110 = por %p108, %p109
      %p112 = scmp.ne.s32.totalorder %s97, %s111
      %p113 = scmp.eq.s32.totalorder %s19, 0
      %p114 = por %p112, %p113
      %s115 = ssub.s32 %s13, %s20
      %p116 = scmp.eq.s32.totalorder %s115, 0
      %s118 = sadd.s32 %s117, 1
      %s119 = scalar_select %p116, %s117, %s118
      %p122 = pneg %p116
      %p123 = scmp.eq.s32.totalorder %s13, 1
      %p124 = por %p122, %p123
      %p125 = scmp.ne.s32.totalorder %s117, %s120
      %p126 = scmp.eq.s32.totalorder %s13, 0
      %p127 = por %p125, %p126
      %p128 = scmp.ne.s32.totalorder %s117, %s120
      %p129 = scmp.eq.s32.totalorder %s18, 1
      %p130 = por %p128, %p129
      %p131 = scmp.ne.s32.totalorder %s120, %s121
      %p132 = scmp.eq.s32.totalorder %s18, 0
      %p133 = por %p131, %p132
      %p134 = scmp.ne.s32.totalorder %s120, %s121
      %p135 = scmp.eq.s32.totalorder %s19, 1
      %p136 = por %p134, %p135
      %p138 = scmp.ne.s32.totalorder %s121, %s137
      %p139 = scmp.eq.s32.totalorder %s19, 0
      %p140 = por %p138, %p139
      %p141 = scmp.le.s32.totalorder 1, %s13
      %p142 = scmp.lt.s32.totalorder %s13, 3
      %p143 = pnand %p141, %p142
      %p144 = pneg %p143
      // Predicated region
      $region9: #{inception_features.15} parent=5 // pred_check
        _
      $region10: #{inception_features.15} parent=5 // pred_check_branch
        %146 = sbr.rel (%p143) target = $region12
      $region11: #{inception_features.15} parent=5 // pred_region
        %s147 = ssub.s32 %s13, 1
        // Predicated region
        $region13: #{inception_features.15} parent=11 // pred_check
          %p148 = pneg %p34
        $region14: #{inception_features.15} parent=11 // pred_check_branch
          %150 = sbr.rel (%p148) target = $region16
        $region15: #{inception_features.15} parent=11 // pred_region
          _
        $region16: #{inception_features.15} parent=11 // pred_fallthru
          _
        // Predicated region
        $region17: #{inception_features.15} parent=11 // pred_check
          %p151 = pneg %p107
        $region18: #{inception_features.15} parent=11 // pred_check_branch
          %153 = sbr.rel (%p151) target = $region20
        $region19: #{inception_features.15} parent=11 // pred_region
          _
        $region20: #{inception_features.15} parent=11 // pred_fallthru
          _
      $region12: #{inception_features.15} parent=5 // pred_fallthru
        _
      %p154 = scmp.lt.s32.totalorder %s13, 2
      // Predicated region
      $region21: #{inception_features.15} parent=5 // pred_check
        %p155 = pneg %p154
      $region22: #{inception_features.15} parent=5 // pred_check_branch
        %157 = sbr.rel (%p155) target = $region24
      $region23: #{inception_features.15} parent=5 // pred_region
        // Predicated region
        $region25: #{inception_features.15} parent=23 // pred_check
          %p158 = pneg %p54
        $region26: #{inception_features.15} parent=23 // pred_check_branch
          %160 = sbr.rel (%p158) target = $region28
        $region27: #{inception_features.15} parent=23 // pred_region
          %s161 = sand.u32 %s44, 1
          %s162 = sand.u32 %s44, 1
          %s163 = smul.addr %s162, 256
          %s164 = scalar_lea.vmem [#allocation2], %s163
          %s165 = smul.u32 8, %s13
          %s166 = smul.addr %s165, 8
          %s167 = scalar_lea.vmem %s1, %s166
          // Predicated region
          $region29: #{inception_features.15} parent=27 // pred_check
            _
          $region30: #{inception_features.15} parent=27 // pred_check_branch
            %169 = sbr.rel (0) target = $region32
          $region31: #{inception_features.15} parent=27 // pred_region
            // Predicated region
            $region33: #{inception_features.15} parent=31 // pred_check
              _
            $region34: #{inception_features.15} parent=31 // pred_check_branch
              %171 = sbr.rel (0) target = $region36
            $region35: #{inception_features.15} parent=31 // pred_region
              loop: start=0, step=1, limit=1
              $region37: #{inception_features.15} parent=35 // loop_pre_header
                _
              $region38: #{inception_features.15} parent=35 // loop_header
                %s173 = sphi 0, %s177
                %p174 = scmp.ge.s32.totalorder %s173, 1
                %s178 = sphi %s167, %s167
                %s179 = sphi %s164, %s164
              $region39: #{inception_features.15} parent=35 // loop_header_branch
                %176 = sbr.rel (%p174) target = $region43
              $region40: #{inception_features.15} parent=35 // loop_body
                %v180 = vld [vmem:[%s178] sm:$0xff]
                %181 = vst [vmem:[%s179] sm:$0xff] %v180
                %v182 = vld [vmem:[%s178 + $0x8] sm:$0xff]
                %183 = vst [vmem:[%s179 + $0x8] sm:$0xff] %v182
                %v184 = vld [vmem:[%s178 + $0x10] sm:$0xff]
                %185 = vst [vmem:[%s179 + $0x10] sm:$0xff] %v184
                %v186 = vld [vmem:[%s178 + $0x18] sm:$0xff]
                %187 = vst [vmem:[%s179 + $0x18] sm:$0xff] %v186
                %v188 = vld [vmem:[%s178 + $0x20] sm:$0xff]
                %189 = vst [vmem:[%s179 + $0x20] sm:$0xff] %v188
                %v190 = vld [vmem:[%s178 + $0x28] sm:$0xff]
                %191 = vst [vmem:[%s179 + $0x28] sm:$0xff] %v190
                %v192 = vld [vmem:[%s178 + $0x30] sm:$0xff]
                %193 = vst [vmem:[%s179 + $0x30] sm:$0xff] %v192
                %v194 = vld [vmem:[%s178 + $0x38] sm:$0xff]
                %195 = vst [vmem:[%s179 + $0x38] sm:$0xff] %v194
                %v196 = vld [vmem:[%s178 + $0x80] sm:$0xff]
                %197 = vst [vmem:[%s179 + $0x40] sm:$0xff] %v196
                %v198 = vld [vmem:[%s178 + $0x88] sm:$0xff]
                %199 = vst [vmem:[%s179 + $0x48] sm:$0xff] %v198
                %v200 = vld [vmem:[%s178 + $0x90] sm:$0xff]
                %201 = vst [vmem:[%s179 + $0x50] sm:$0xff] %v200
                %v202 = vld [vmem:[%s178 + $0x98] sm:$0xff]
                %203 = vst [vmem:[%s179 + $0x58] sm:$0xff] %v202
                %v204 = vld [vmem:[%s178 + $0xa0] sm:$0xff]
                %205 = vst [vmem:[%s179 + $0x60] sm:$0xff] %v204
                %v206 = vld [vmem:[%s178 + $0xa8] sm:$0xff]
                %207 = vst [vmem:[%s179 + $0x68] sm:$0xff] %v206
                %v208 = vld [vmem:[%s178 + $0xb0] sm:$0xff]
                %209 = vst [vmem:[%s179 + $0x70] sm:$0xff] %v208
                %v210 = vld [vmem:[%s178 + $0xb8] sm:$0xff]
                %211 = vst [vmem:[%s179 + $0x78] sm:$0xff] %v210
                %v212 = vld [vmem:[%s178 + $0x100] sm:$0xff]
                %213 = vst [vmem:[%s179 + $0x80] sm:$0xff] %v212
                %v214 = vld [vmem:[%s178 + $0x108] sm:$0xff]
                %215 = vst [vmem:[%s179 + $0x88] sm:$0xff] %v214
                %v216 = vld [vmem:[%s178 + $0x110] sm:$0xff]
                %217 = vst [vmem:[%s179 + $0x90] sm:$0xff] %v216
                %v218 = vld [vmem:[%s178 + $0x118] sm:$0xff]
                %219 = vst [vmem:[%s179 + $0x98] sm:$0xff] %v218
                %v220 = vld [vmem:[%s178 + $0x120] sm:$0xff]
                %221 = vst [vmem:[%s179 + $0xa0] sm:$0xff] %v220
                %v222 = vld [vmem:[%s178 + $0x128] sm:$0xff]
                %223 = vst [vmem:[%s179 + $0xa8] sm:$0xff] %v222
                %v224 = vld [vmem:[%s178 + $0x130] sm:$0xff]
                %225 = vst [vmem:[%s179 + $0xb0] sm:$0xff] %v224
                %v226 = vld [vmem:[%s178 + $0x138] sm:$0xff]
                %227 = vst [vmem:[%s179 + $0xb8] sm:$0xff] %v226
                %v228 = vld [vmem:[%s178 + $0x180] sm:$0xff]
                %229 = vst [vmem:[%s179 + $0xc0] sm:$0xff] %v228
                %v230 = vld [vmem:[%s178 + $0x188] sm:$0xff]
                %231 = vst [vmem:[%s179 + $0xc8] sm:$0xff] %v230
                %v232 = vld [vmem:[%s178 + $0x190] sm:$0xff]
                %233 = vst [vmem:[%s179 + $0xd0] sm:$0xff] %v232
                %v234 = vld [vmem:[%s178 + $0x198] sm:$0xff]
                %235 = vst [vmem:[%s179 + $0xd8] sm:$0xff] %v234
                %v236 = vld [vmem:[%s178 + $0x1a0] sm:$0xff]
                %237 = vst [vmem:[%s179 + $0xe0] sm:$0xff] %v236
                %v238 = vld [vmem:[%s178 + $0x1a8] sm:$0xff]
                %239 = vst [vmem:[%s179 + $0xe8] sm:$0xff] %v238
                %v240 = vld [vmem:[%s178 + $0x1b0] sm:$0xff]
                %241 = vst [vmem:[%s179 + $0xf0] sm:$0xff] %v240
                %v242 = vld [vmem:[%s178 + $0x1b8] sm:$0xff]
                %243 = vst [vmem:[%s179 + $0xf8] sm:$0xff] %v242
              $region41: #{inception_features.15} parent=35 // loop_footer
                %s177 = sadd.s32 1, %s173
              $region42: #{inception_features.15} parent=35 // loop_footer_branch
                %172 = sbr.rel target = $region38
              $region43: #{inception_features.15} parent=35 // loop_exit
                _
            $region36: #{inception_features.15} parent=31 // pred_fallthru
              _
            // Predicated region
            $region44: #{inception_features.15} parent=31 // pred_check
              _
            $region45: #{inception_features.15} parent=31 // pred_check_branch
              %245 = sbr.rel target = $region47
            $region46: #{inception_features.15} parent=31 // pred_region
              _
            $region47: #{inception_features.15} parent=31 // pred_fallthru
              _
          $region32: #{inception_features.15} parent=27 // pred_fallthru
            _
          %246 = vnop
        $region28: #{inception_features.15} parent=23 // pred_fallthru
          _
        // Predicated region
        $region48: #{inception_features.15} parent=23 // pred_check
          %p247 = pneg %p80
        $region49: #{inception_features.15} parent=23 // pred_check_branch
          %249 = sbr.rel (%p247) target = $region51
        $region50: #{inception_features.15} parent=23 // pred_region
          %s250 = smul.u32 8, %s13
          %p251 = scmp.lt.s32.totalorder %s250, 15
          %s252 = scalar_select %p251, %s250, 15
          %s253 = scalar_lea.vmem %s2, %s252
          %s254 = smul.u32 8, %s13
        $region51: #{inception_features.15} parent=23 // pred_fallthru
          _
      $region24: #{inception_features.15} parent=5 // pred_fallthru
        _
      %p255 = scmp.le.s32.totalorder 1, %s13
      %p256 = scmp.lt.s32.totalorder %s13, 3
      %p257 = pnand %p255, %p256
      %p258 = pneg %p257
      // Predicated region
      $region52: #{inception_features.15} parent=5 // pred_check
        _
      $region53: #{inception_features.15} parent=5 // pred_check_branch
        %260 = sbr.rel (%p257) target = $region55
      $region54: #{inception_features.15} parent=5 // pred_region
        %s261 = ssub.s32 %s13, 1
        %s262 = sand.u32 %s47, 1
        %s263 = sand.u32 %s47, 1
        %s264 = smul.addr %s263, 256
        %s265 = scalar_lea.vmem [#allocation2], %s264
        // Predicated region
        $region56: #{inception_features.15} parent=54 // pred_check
          %p266 = pneg %p60
        $region57: #{inception_features.15} parent=54 // pred_check_branch
          %268 = sbr.rel (%p266) target = $region59
        $region58: #{inception_features.15} parent=54 // pred_region
          _
        $region59: #{inception_features.15} parent=54 // pred_fallthru
          _
        %p269 = pneg %p34
        %p270 = pneg %p31
        %s271 = sand.u32 %s47, 1
        %s272 = sand.u32 %s47, 1
        %s273 = smul.addr %s272, 256
        %s274 = scalar_lea.vmem [#allocation2], %s273
        %p275 = pneg %p60
        %p276 = pneg %p57
        %s277 = smul.u32 8, %s18
        %p278 = scmp.lt.s32.totalorder %s277, 15
        %s279 = scalar_select %p278, %s277, 15
        %s280 = scalar_lea.vmem %s2, %s279
        %p281 = pneg %p86
        %p282 = pneg %p83
        %p283 = pneg %p107
        %p284 = pneg %p104
        %p285 = pneg %p133
        %p286 = pneg %p130
        %s287 = sand.u32 %s120, 1
        %s288 = scalar_lea.sflag [#allocation4], %s287
        %s289 = sand.u32 %s120, 1
        %s290 = smul.addr %s289, 8
        %s291 = scalar_lea.vmem [#allocation3], %s290
        %s292 = smul.u32 8, %s18
        %s293 = smul.u32 8, %s18
        %p294 = scmp.lt.s32.totalorder %s293, 15
        %s295 = scalar_select %p294, %s293, 15
        %s296 = scalar_lea.vmem %s2, %s295
        %s297 = smul.u32 8, %s18
        %s298 = smul.u32 8, %s18
        %v299 = vld [vmem:[%s0] sm:$0xff]
        %v300 = vld [vmem:[%s0 + $0x8] sm:$0xff]
        %v301 = vld [vmem:[%s0 + $0x10] sm:$0xff]
        %v302 = vld [vmem:[%s0 + $0x18] sm:$0xff]
        %v303 = vld [vmem:[%s0 + $0x20] sm:$0xff]
        %v304 = vld [vmem:[%s0 + $0x28] sm:$0xff]
        %v305 = vld [vmem:[%s0 + $0x30] sm:$0xff]
        %v306 = vld [vmem:[%s265] sm:$0xff]
        %v307 = vld [vmem:[%s265 + $0x8] sm:$0xff]
        %v308 = vld [vmem:[%s265 + $0x10] sm:$0xff]
        %v309 = vld [vmem:[%s265 + $0x18] sm:$0xff]
        %v310 = vld [vmem:[%s265 + $0x20] sm:$0xff]
        %v311 = vld [vmem:[%s265 + $0x28] sm:$0xff]
        %v312 = vld [vmem:[%s265 + $0x30] sm:$0xff]
        %v313 = vld [vmem:[%s265 + $0x38] sm:$0xff]
        %v314 = vld [vmem:[%s265 + $0x40] sm:$0xff]
        %v315 = vld [vmem:[%s265 + $0x48] sm:$0xff]
        %v316 = vld [vmem:[%s265 + $0x50] sm:$0xff]
        %v317 = vld [vmem:[%s265 + $0x58] sm:$0xff]
        %v318 = vld [vmem:[%s265 + $0x60] sm:$0xff]
        %v319 = vld [vmem:[%s265 + $0x68] sm:$0xff]
        %v320 = vld [vmem:[%s265 + $0x70] sm:$0xff]
        %v321 = vld [vmem:[%s265 + $0x78] sm:$0xff]
        %v322 = vld [vmem:[%s265 + $0x80] sm:$0xff]
        %v323 = vld [vmem:[%s265 + $0x88] sm:$0xff]
        %v324 = vld [vmem:[%s265 + $0x90] sm:$0xff]
        %v325 = vld [vmem:[%s265 + $0x98] sm:$0xff]
        %v326 = vld [vmem:[%s265 + $0xa0] sm:$0xff]
        %v327 = vld [vmem:[%s265 + $0xa8] sm:$0xff]
        %v328 = vld [vmem:[%s265 + $0xb0] sm:$0xff]
        %v329 = vld [vmem:[%s265 + $0xb8] sm:$0xff]
        %v330 = vld [vmem:[%s265 + $0xc0] sm:$0xff]
        %v331 = vld [vmem:[%s265 + $0xc8] sm:$0xff]
        %v332 = vld [vmem:[%s265 + $0xd0] sm:$0xff]
        %v333 = vld [vmem:[%s265 + $0xd8] sm:$0xff]
        %v334 = vld [vmem:[%s265 + $0xe0] sm:$0xff]
        %v335 = vld [vmem:[%s265 + $0xe8] sm:$0xff]
        %v336 = vld [vmem:[%s265 + $0xf0] sm:$0xff]
        %v337 = vld [vmem:[%s265 + $0xf8] sm:$0xff]
        %v338 = vld [vmem:[%s296] sm:$0xff]
        %v340 = vlaneseq
        %v341 = vshrl.u32 %v340, 7
        %v342 = vsub.s32 0, %v341
        %v343 = vrot.slane %v338, %v342
        %v344 = vlaneseq
        %v345 = vshrl.u32 %v344, 7
        %v346 = vsub.s32 1, %v345
        %v347 = vrot.slane %v338, %v346
        %v348 = vlaneseq
        %v349 = vshrl.u32 %v348, 7
        %v350 = vsub.s32 2, %v349
        %v351 = vrot.slane %v338, %v350
        %v352 = vlaneseq
        %v353 = vshrl.u32 %v352, 7
        %v354 = vsub.s32 3, %v353
        %v355 = vrot.slane %v338, %v354
        %v356 = vlaneseq
        %v357 = vshrl.u32 %v356, 7
        %v358 = vsub.s32 4, %v357
        %v359 = vrot.slane %v338, %v358
        %v360 = vlaneseq
        %v361 = vshrl.u32 %v360, 7
        %v362 = vsub.s32 5, %v361
        %v363 = vrot.slane %v338, %v362
        %v364 = vlaneseq
        %v365 = vshrl.u32 %v364, 7
        %v366 = vsub.s32 6, %v365
        %v367 = vrot.slane %v338, %v366
        %v368 = vlaneseq
        %v369 = vshrl.u32 %v368, 7
        %v370 = vsub.s32 7, %v369
        %v371 = vrot.slane %v338, %v370
        %vm380 = vcmask 261120
        %v382 = vsel %vm380, %v299, 0
        %v385 = vsel %vm380, %v300, 0
        %v388 = vsel %vm380, %v301, 0
        %v391 = vsel %vm380, %v302, 0
        %v394 = vsel %vm380, %v303, 0
        %v397 = vsel %vm380, %v304, 0
        %v400 = vsel %vm380, %v305, 0
        %402 = vmatprep.subr.mxu0 %v307
        %403 = vmatpush1.msra.mxu0 %v306
        %404 = vmatprep.subr.mxu0 %v315
        %405 = vmatpush1.msra.mxu0 %v314
        %406 = vmatprep.subr.mxu0 %v323
        %407 = vmatpush1.msra.mxu0 %v322
        %408 = vmatprep.subr.mxu0 %v331
        %409 = vmatpush1.msra.mxu0 %v330
        %410 = vmatprep.subr.mxu0 0.0
        %411 = vmatpush1.msra.mxu0 0.0
        %412 = vmatprep.subr.mxu0 0.0
        %413 = vmatpush1.msra.mxu0 0.0
        %414 = vmatprep.subr.mxu0 0.0
        %415 = vmatpush1.msra.mxu0 0.0
        %416 = vmatprep.subr.mxu0 0.0
        %417 = vmatpush1.msra.mxu0 0.0
        %418 = vmatprep.subr.mxu0 0.0
        %419 = vmatpush1.msra.mxu0 0.0
        %420 = vmatprep.subr.mxu0 0.0
        %421 = vmatpush1.msra.mxu0 0.0
        %422 = vmatprep.subr.mxu0 0.0
        %423 = vmatpush1.msra.mxu0 0.0
        %424 = vmatprep.subr.mxu0 0.0
        %425 = vmatpush1.msra.mxu0 0.0
        %426 = vmatprep.subr.mxu0 0.0
        %427 = vmatpush1.msra.mxu0 0.0
        %428 = vmatprep.subr.mxu0 0.0
        %429 = vmatpush1.msra.mxu0 0.0
        %430 = vmatprep.subr.mxu0 0.0
        %431 = vmatpush1.msra.mxu0 0.0
        %432 = vmatprep.subr.mxu0 0.0
        %433 = vmatpush1.msra.mxu0 0.0
        %434 = vmatprep.subr.mxu0 0.0
        %435 = vmatpush1.msra.mxu0 0.0
        %436 = vmatprep.subr.mxu0 0.0
        %437 = vmatpush1.msra.mxu0 0.0
        %438 = vmatprep.subr.mxu0 0.0
        %439 = vmatpush1.msra.mxu0 0.0
        %440 = vmatprep.subr.mxu0 0.0
        %441 = vmatpush1.msra.mxu0 0.0
        %442 = vmatprep.subr.mxu0 0.0
        %443 = vmatpush1.msra.mxu0 0.0
        %444 = vmatprep.subr.mxu0 0.0
        %445 = vmatpush1.msra.mxu0 0.0
        %446 = vmatprep.subr.mxu0 0.0
        %447 = vmatpush1.msra.mxu0 0.0
        %448 = vmatprep.subr.mxu0 0.0
        %449 = vmatpush1.msra.mxu0 0.0
        %450 = vmatprep.subr.mxu0 0.0
        %451 = vmatpush1.msra.mxu0 0.0
        %452 = vmatprep.subr.mxu0 0.0
        %453 = vmatpush1.msra.mxu0 0.0
        %454 = vmatprep.subr.mxu0 0.0
        %455 = vmatpush1.msra.mxu0 0.0
        %456 = vmatprep.subr.mxu0 0.0
        %457 = vmatpush1.msra.mxu0 0.0
        %458 = vmatprep.subr.mxu0 0.0
        %459 = vmatpush1.msra.mxu0 0.0
        %460 = vmatprep.subr.mxu0 0.0
        %461 = vmatpush1.msra.mxu0 0.0
        %462 = vmatprep.subr.mxu0 0.0
        %463 = vmatpush1.msra.mxu0 0.0
        %464 = vmatprep.subr.mxu0 0.0
        %465 = vmatpush1.msra.mxu0 0.0
        %466 = vmatprep.mubr.f32.mxu0 0.0
        %467 = vmatmul.mubr.f32.gmra.mrb[0].mxu0 %v382
        %v468 = vpop.f32.mrb[0].mxu0
        %v469 = vadd.f32 %v343, %v468
        %v470 = vpop.f32.mrb[0].mxu0
        %v471 = vadd.f32 %v347, %v470
        %472 = vmatprep.mubr.f32.mxu0 0.0
        %473 = vmatmul.mubr.f32.gmra.mrb[0].mxu0 %v385
        %v474 = vpop.f32.mrb[0].mxu0
        %v475 = vadd.f32 %v343, %v474
        %v476 = vpop.f32.mrb[0].mxu0
        %v477 = vadd.f32 %v347, %v476
        %478 = vmatprep.mubr.f32.mxu0 0.0
        %479 = vmatmul.mubr.f32.gmra.mrb[0].mxu0 %v388
        %v480 = vpop.f32.mrb[0].mxu0
        %v481 = vadd.f32 %v343, %v480
        %v482 = vpop.f32.mrb[0].mxu0
        %v483 = vadd.f32 %v347, %v482
        %484 = vmatprep.mubr.f32.mxu0 0.0
        %485 = vmatmul.mubr.f32.gmra.mrb[0].mxu0 %v391
        %v486 = vpop.f32.mrb[0].mxu0
        %v487 = vadd.f32 %v343, %v486
        %v488 = vpop.f32.mrb[0].mxu0
        %v489 = vadd.f32 %v347, %v488
        %490 = vmatprep.mubr.f32.mxu0 0.0
        %491 = vmatmul.mubr.f32.gmra.mrb[0].mxu0 %v394
        %v492 = vpop.f32.mrb[0].mxu0
        %v493 = vadd.f32 %v343, %v492
        %v494 = vpop.f32.mrb[0].mxu0
        %v495 = vadd.f32 %v347, %v494
        %496 = vmatprep.mubr.f32.mxu0 0.0
        %497 = vmatmul.mubr.f32.gmra.mrb[0].mxu0 %v397
        %v498 = vpop.f32.mrb[0].mxu0
        %v499 = vadd.f32 %v343, %v498
        %v500 = vpop.f32.mrb[0].mxu0
        %v501 = vadd.f32 %v347, %v500
        %502 = vmatprep.mubr.f32.mxu0 0.0
        %503 = vmatmul.mubr.f32.gmra.mrb[0].mxu0 %v400
        %v504 = vpop.f32.mrb[0].mxu0
        %v505 = vadd.f32 %v343, %v504
        %v506 = vpop.f32.mrb[0].mxu0
        %v507 = vadd.f32 %v347, %v506
        %508 = vdwg.mxu0
        %509 = vmatprep.subr.mxu0 %v309
        %510 = vmatpush1.msra.mxu0 %v308
        %511 = vmatprep.subr.mxu0 %v317
        %512 = vmatpush1.msra.mxu0 %v316
        %513 = vmatprep.subr.mxu0 %v325
        %514 = vmatpush1.msra.mxu0 %v324
        %515 = vmatprep.subr.mxu0 %v333
        %516 = vmatpush1.msra.mxu0 %v332
        %517 = vmatprep.subr.mxu0 0.0
        %518 = vmatpush1.msra.mxu0 0.0
        %519 = vmatprep.subr.mxu0 0.0
        %520 = vmatpush1.msra.mxu0 0.0
        %521 = vmatprep.subr.mxu0 0.0
        %522 = vmatpush1.msra.mxu0 0.0
        %523 = vmatprep.subr.mxu0 0.0
        %524 = vmatpush1.msra.mxu0 0.0
        %525 = vmatprep.subr.mxu0 0.0
        %526 = vmatpush1.msra.mxu0 0.0
        %527 = vmatprep.subr.mxu0 0.0
        %528 = vmatpush1.msra.mxu0 0.0
        %529 = vmatprep.subr.mxu0 0.0
        %530 = vmatpush1.msra.mxu0 0.0
        %531 = vmatprep.subr.mxu0 0.0
        %532 = vmatpush1.msra.mxu0 0.0
        %533 = vmatprep.subr.mxu0 0.0
        %534 = vmatpush1.msra.mxu0 0.0
        %535 = vmatprep.subr.mxu0 0.0
        %536 = vmatpush1.msra.mxu0 0.0
        %537 = vmatprep.subr.mxu0 0.0
        %538 = vmatpush1.msra.mxu0 0.0
        %539 = vmatprep.subr.mxu0 0.0
        %540 = vmatpush1.msra.mxu0 0.0
        %541 = vmatprep.subr.mxu0 0.0
        %542 = vmatpush1.msra.mxu0 0.0
        %543 = vmatprep.subr.mxu0 0.0
        %544 = vmatpush1.msra.mxu0 0.0
        %545 = vmatprep.subr.mxu0 0.0
        %546 = vmatpush1.msra.mxu0 0.0
        %547 = vmatprep.subr.mxu0 0.0
        %548 = vmatpush1.msra.mxu0 0.0
        %549 = vmatprep.subr.mxu0 0.0
        %550 = vmatpush1.msra.mxu0 0.0
        %551 = vmatprep.subr.mxu0 0.0
        %552 = vmatpush1.msra.mxu0 0.0
        %553 = vmatprep.subr.mxu0 0.0
        %554 = vmatpush1.msra.mxu0 0.0
        %555 = vmatprep.subr.mxu0 0.0
        %556 = vmatpush1.msra.mxu0 0.0
        %557 = vmatprep.subr.mxu0 0.0
        %558 = vmatpush1.msra.mxu0 0.0
        %559 = vmatprep.subr.mxu0 0.0
        %560 = vmatpush1.msra.mxu0 0.0
        %561 = vmatprep.subr.mxu0 0.0
        %562 = vmatpush1.msra.mxu0 0.0
        %563 = vmatprep.subr.mxu0 0.0
        %564 = vmatpush1.msra.mxu0 0.0
        %565 = vmatprep.subr.mxu0 0.0
        %566 = vmatpush1.msra.mxu0 0.0
        %567 = vmatprep.subr.mxu0 0.0
        %568 = vmatpush1.msra.mxu0 0.0
        %569 = vmatprep.subr.mxu0 0.0
        %570 = vmatpush1.msra.mxu0 0.0
        %571 = vmatprep.subr.mxu0 0.0
        %572 = vmatpush1.msra.mxu0 0.0
        %573 = vmatprep.mubr.f32.mxu0 0.0
        %574 = vmatmul.mubr.f32.gmra.mrb[0].mxu0 %v382
        %v575 = vpop.f32.mrb[0].mxu0
        %v576 = vadd.f32 %v351, %v575
        %v577 = vpop.f32.mrb[0].mxu0
        %v578 = vadd.f32 %v355, %v577
        %579 = vmatprep.mubr.f32.mxu0 0.0
        %580 = vmatmul.mubr.f32.gmra.mrb[0].mxu0 %v385
        %v581 = vpop.f32.mrb[0].mxu0
        %v582 = vadd.f32 %v351, %v581
        %v583 = vpop.f32.mrb[0].mxu0
        %v584 = vadd.f32 %v355, %v583
        %585 = vmatprep.mubr.f32.mxu0 0.0
        %586 = vmatmul.mubr.f32.gmra.mrb[0].mxu0 %v388
        %v587 = vpop.f32.mrb[0].mxu0
        %v588 = vadd.f32 %v351, %v587
        %v589 = vpop.f32.mrb[0].mxu0
        %v590 = vadd.f32 %v355, %v589
        %591 = vmatprep.mubr.f32.mxu0 0.0
        %592 = vmatmul.mubr.f32.gmra.mrb[0].mxu0 %v391
        %v593 = vpop.f32.mrb[0].mxu0
        %v594 = vadd.f32 %v351, %v593
        %v595 = vpop.f32.mrb[0].mxu0
        %v596 = vadd.f32 %v355, %v595
        %597 = vmatprep.mubr.f32.mxu0 0.0
        %598 = vmatmul.mubr.f32.gmra.mrb[0].mxu0 %v394
        %v599 = vpop.f32.mrb[0].mxu0
        %v600 = vadd.f32 %v351, %v599
        %v601 = vpop.f32.mrb[0].mxu0
        %v602 = vadd.f32 %v355, %v601
        %603 = vmatprep.mubr.f32.mxu0 0.0
        %604 = vmatmul.mubr.f32.gmra.mrb[0].mxu0 %v397
        %v605 = vpop.f32.mrb[0].mxu0
        %v606 = vadd.f32 %v351, %v605
        %v607 = vpop.f32.mrb[0].mxu0
        %v608 = vadd.f32 %v355, %v607
        %609 = vmatprep.mubr.f32.mxu0 0.0
        %610 = vmatmul.mubr.f32.gmra.mrb[0].mxu0 %v400
        %v611 = vpop.f32.mrb[0].mxu0
        %v612 = vadd.f32 %v351, %v611
        %v613 = vpop.f32.mrb[0].mxu0
        %v614 = vadd.f32 %v355, %v613
        %615 = vdwg.mxu0
        %616 = vmatprep.subr.mxu0 %v311
        %617 = vmatpush1.msra.mxu0 %v310
        %618 = vmatprep.subr.mxu0 %v319
        %619 = vmatpush1.msra.mxu0 %v318
        %620 = vmatprep.subr.mxu0 %v327
        %621 = vmatpush1.msra.mxu0 %v326
        %622 = vmatprep.subr.mxu0 %v335
        %623 = vmatpush1.msra.mxu0 %v334
        %624 = vmatprep.subr.mxu0 0.0
        %625 = vmatpush1.msra.mxu0 0.0
        %626 = vmatprep.subr.mxu0 0.0
        %627 = vmatpush1.msra.mxu0 0.0
        %628 = vmatprep.subr.mxu0 0.0
        %629 = vmatpush1.msra.mxu0 0.0
        %630 = vmatprep.subr.mxu0 0.0
        %631 = vmatpush1.msra.mxu0 0.0
        %632 = vmatprep.subr.mxu0 0.0
        %633 = vmatpush1.msra.mxu0 0.0
        %634 = vmatprep.subr.mxu0 0.0
        %635 = vmatpush1.msra.mxu0 0.0
        %636 = vmatprep.subr.mxu0 0.0
        %637 = vmatpush1.msra.mxu0 0.0
        %638 = vmatprep.subr.mxu0 0.0
        %639 = vmatpush1.msra.mxu0 0.0
        %640 = vmatprep.subr.mxu0 0.0
        %641 = vmatpush1.msra.mxu0 0.0
        %642 = vmatprep.subr.mxu0 0.0
        %643 = vmatpush1.msra.mxu0 0.0
        %644 = vmatprep.subr.mxu0 0.0
        %645 = vmatpush1.msra.mxu0 0.0
        %646 = vmatprep.subr.mxu0 0.0
        %647 = vmatpush1.msra.mxu0 0.0
        %648 = vmatprep.subr.mxu0 0.0
        %649 = vmatpush1.msra.mxu0 0.0
        %650 = vmatprep.subr.mxu0 0.0
        %651 = vmatpush1.msra.mxu0 0.0
        %652 = vmatprep.subr.mxu0 0.0
        %653 = vmatpush1.msra.mxu0 0.0
        %654 = vmatprep.subr.mxu0 0.0
        %655 = vmatpush1.msra.mxu0 0.0
        %656 = vmatprep.subr.mxu0 0.0
        %657 = vmatpush1.msra.mxu0 0.0
        %658 = vmatprep.subr.mxu0 0.0
        %659 = vmatpush1.msra.mxu0 0.0
        %660 = vmatprep.subr.mxu0 0.0
        %661 = vmatpush1.msra.mxu0 0.0
        %662 = vmatprep.subr.mxu0 0.0
        %663 = vmatpush1.msra.mxu0 0.0
        %664 = vmatprep.subr.mxu0 0.0
        %665 = vmatpush1.msra.mxu0 0.0
        %666 = vmatprep.subr.mxu0 0.0
        %667 = vmatpush1.msra.mxu0 0.0
        %668 = vmatprep.subr.mxu0 0.0
        %669 = vmatpush1.msra.mxu0 0.0
        %670 = vmatprep.subr.mxu0 0.0
        %671 = vmatpush1.msra.mxu0 0.0
        %672 = vmatprep.subr.mxu0 0.0
        %673 = vmatpush1.msra.mxu0 0.0
        %674 = vmatprep.subr.mxu0 0.0
        %675 = vmatpush1.msra.mxu0 0.0
        %676 = vmatprep.subr.mxu0 0.0
        %677 = vmatpush1.msra.mxu0 0.0
        %678 = vmatprep.subr.mxu0 0.0
        %679 = vmatpush1.msra.mxu0 0.0
        %680 = vmatprep.mubr.f32.mxu0 0.0
        %681 = vmatmul.mubr.f32.gmra.mrb[0].mxu0 %v382
        %v682 = vpop.f32.mrb[0].mxu0
        %v683 = vadd.f32 %v359, %v682
        %v684 = vpop.f32.mrb[0].mxu0
        %v685 = vadd.f32 %v363, %v684
        %686 = vmatprep.mubr.f32.mxu0 0.0
        %687 = vmatmul.mubr.f32.gmra.mrb[0].mxu0 %v385
        %v688 = vpop.f32.mrb[0].mxu0
        %v689 = vadd.f32 %v359, %v688
        %v690 = vpop.f32.mrb[0].mxu0
        %v691 = vadd.f32 %v363, %v690
        %692 = vmatprep.mubr.f32.mxu0 0.0
        %693 = vmatmul.mubr.f32.gmra.mrb[0].mxu0 %v388
        %v694 = vpop.f32.mrb[0].mxu0
        %v695 = vadd.f32 %v359, %v694
        %v696 = vpop.f32.mrb[0].mxu0
        %v697 = vadd.f32 %v363, %v696
        %698 = vmatprep.mubr.f32.mxu0 0.0
        %699 = vmatmul.mubr.f32.gmra.mrb[0].mxu0 %v391
        %v700 = vpop.f32.mrb[0].mxu0
        %v701 = vadd.f32 %v359, %v700
        %v702 = vpop.f32.mrb[0].mxu0
        %v703 = vadd.f32 %v363, %v702
        %704 = vmatprep.mubr.f32.mxu0 0.0
        %705 = vmatmul.mubr.f32.gmra.mrb[0].mxu0 %v394
        %v706 = vpop.f32.mrb[0].mxu0
        %v707 = vadd.f32 %v359, %v706
        %v708 = vpop.f32.mrb[0].mxu0
        %v709 = vadd.f32 %v363, %v708
        %710 = vmatprep.mubr.f32.mxu0 0.0
        %711 = vmatmul.mubr.f32.gmra.mrb[0].mxu0 %v397
        %v712 = vpop.f32.mrb[0].mxu0
        %v713 = vadd.f32 %v359, %v712
        %v714 = vpop.f32.mrb[0].mxu0
        %v715 = vadd.f32 %v363, %v714
        %716 = vmatprep.mubr.f32.mxu0 0.0
        %717 = vmatmul.mubr.f32.gmra.mrb[0].mxu0 %v400
        %v718 = vpop.f32.mrb[0].mxu0
        %v719 = vadd.f32 %v359, %v718
        %v720 = vpop.f32.mrb[0].mxu0
        %v721 = vadd.f32 %v363, %v720
        %722 = vdwg.mxu0
        %723 = vmatprep.subr.mxu0 %v313
        %724 = vmatpush1.msra.mxu0 %v312
        %725 = vmatprep.subr.mxu0 %v321
        %726 = vmatpush1.msra.mxu0 %v320
        %727 = vmatprep.subr.mxu0 %v329
        %728 = vmatpush1.msra.mxu0 %v328
        %729 = vmatprep.subr.mxu0 %v337
        %730 = vmatpush1.msra.mxu0 %v336
        %731 = vmatprep.subr.mxu0 0.0
        %732 = vmatpush1.msra.mxu0 0.0
        %733 = vmatprep.subr.mxu0 0.0
        %734 = vmatpush1.msra.mxu0 0.0
        %735 = vmatprep.subr.mxu0 0.0
        %736 = vmatpush1.msra.mxu0 0.0
        %737 = vmatprep.subr.mxu0 0.0
        %738 = vmatpush1.msra.mxu0 0.0
        %739 = vmatprep.subr.mxu0 0.0
        %740 = vmatpush1.msra.mxu0 0.0
        %741 = vmatprep.subr.mxu0 0.0
        %742 = vmatpush1.msra.mxu0 0.0
        %743 = vmatprep.subr.mxu0 0.0
        %744 = vmatpush1.msra.mxu0 0.0
        %745 = vmatprep.subr.mxu0 0.0
        %746 = vmatpush1.msra.mxu0 0.0
        %747 = vmatprep.subr.mxu0 0.0
        %748 = vmatpush1.msra.mxu0 0.0
        %749 = vmatprep.subr.mxu0 0.0
        %750 = vmatpush1.msra.mxu0 0.0
        %751 = vmatprep.subr.mxu0 0.0
        %752 = vmatpush1.msra.mxu0 0.0
        %753 = vmatprep.subr.mxu0 0.0
        %754 = vmatpush1.msra.mxu0 0.0
        %755 = vmatprep.subr.mxu0 0.0
        %756 = vmatpush1.msra.mxu0 0.0
        %757 = vmatprep.subr.mxu0 0.0
        %758 = vmatpush1.msra.mxu0 0.0
        %759 = vmatprep.subr.mxu0 0.0
        %760 = vmatpush1.msra.mxu0 0.0
        %761 = vmatprep.subr.mxu0 0.0
        %762 = vmatpush1.msra.mxu0 0.0
        %763 = vmatprep.subr.mxu0 0.0
        %764 = vmatpush1.msra.mxu0 0.0
        %765 = vmatprep.subr.mxu0 0.0
        %766 = vmatpush1.msra.mxu0 0.0
        %767 = vmatprep.subr.mxu0 0.0
        %768 = vmatpush1.msra.mxu0 0.0
        %769 = vmatprep.subr.mxu0 0.0
        %770 = vmatpush1.msra.mxu0 0.0
        %771 = vmatprep.subr.mxu0 0.0
        %772 = vmatpush1.msra.mxu0 0.0
        %773 = vmatprep.subr.mxu0 0.0
        %774 = vmatpush1.msra.mxu0 0.0
        %775 = vmatprep.subr.mxu0 0.0
        %776 = vmatpush1.msra.mxu0 0.0
        %777 = vmatprep.subr.mxu0 0.0
        %778 = vmatpush1.msra.mxu0 0.0
        %779 = vmatprep.subr.mxu0 0.0
        %780 = vmatpush1.msra.mxu0 0.0
        %781 = vmatprep.subr.mxu0 0.0
        %782 = vmatpush1.msra.mxu0 0.0
        %783 = vmatprep.subr.mxu0 0.0
        %784 = vmatpush1.msra.mxu0 0.0
        %785 = vmatprep.subr.mxu0 0.0
        %786 = vmatpush1.msra.mxu0 0.0
        %787 = vmatprep.mubr.f32.mxu0 0.0
        %788 = vmatmul.mubr.f32.gmra.mrb[0].mxu0 %v382
        %v789 = vpop.f32.mrb[0].mxu0
        %v790 = vadd.f32 %v367, %v789
        %v791 = vpop.f32.mrb[0].mxu0
        %v792 = vadd.f32 %v371, %v791
        %793 = vmatprep.mubr.f32.mxu0 0.0
        %794 = vmatmul.mubr.f32.gmra.mrb[0].mxu0 %v385
        %v795 = vpop.f32.mrb[0].mxu0
        %v796 = vadd.f32 %v367, %v795
        %v797 = vpop.f32.mrb[0].mxu0
        %v798 = vadd.f32 %v371, %v797
        %799 = vmatprep.mubr.f32.mxu0 0.0
        %800 = vmatmul.mubr.f32.gmra.mrb[0].mxu0 %v388
        %v801 = vpop.f32.mrb[0].mxu0
        %v802 = vadd.f32 %v367, %v801
        %v803 = vpop.f32.mrb[0].mxu0
        %v804 = vadd.f32 %v371, %v803
        %805 = vmatprep.mubr.f32.mxu0 0.0
        %806 = vmatmul.mubr.f32.gmra.mrb[0].mxu0 %v391
        %v807 = vpop.f32.mrb[0].mxu0
        %v808 = vadd.f32 %v367, %v807
        %v809 = vpop.f32.mrb[0].mxu0
        %v810 = vadd.f32 %v371, %v809
        %811 = vmatprep.mubr.f32.mxu0 0.0
        %812 = vmatmul.mubr.f32.gmra.mrb[0].mxu0 %v394
        %v813 = vpop.f32.mrb[0].mxu0
        %v814 = vadd.f32 %v367, %v813
        %v815 = vpop.f32.mrb[0].mxu0
        %v816 = vadd.f32 %v371, %v815
        %817 = vmatprep.mubr.f32.mxu0 0.0
        %818 = vmatmul.mubr.f32.gmra.mrb[0].mxu0 %v397
        %v819 = vpop.f32.mrb[0].mxu0
        %v820 = vadd.f32 %v367, %v819
        %v821 = vpop.f32.mrb[0].mxu0
        %v822 = vadd.f32 %v371, %v821
        %823 = vmatprep.mubr.f32.mxu0 0.0
        %824 = vmatmul.mubr.f32.gmra.mrb[0].mxu0 %v400
        %v825 = vpop.f32.mrb[0].mxu0
        %v826 = vadd.f32 %v367, %v825
        %v827 = vpop.f32.mrb[0].mxu0
        %v828 = vadd.f32 %v371, %v827
        %829 = vdwg.mxu0
        %v830 = vmax.f32 %v469, 0.0
        %v831 = vmax.f32 %v471, 0.0
        %v832 = vmax.f32 %v576, 0.0
        %v833 = vmax.f32 %v578, 0.0
        %v834 = vmax.f32 %v683, 0.0
        %v835 = vmax.f32 %v685, 0.0
        %v836 = vmax.f32 %v790, 0.0
        %v837 = vmax.f32 %v792, 0.0
        %v838 = vmax.f32 %v475, 0.0
        %v839 = vmax.f32 %v477, 0.0
        %v840 = vmax.f32 %v582, 0.0
        %v841 = vmax.f32 %v584, 0.0
        %v842 = vmax.f32 %v689, 0.0
        %v843 = vmax.f32 %v691, 0.0
        %v844 = vmax.f32 %v796, 0.0
        %v845 = vmax.f32 %v798, 0.0
        %v846 = vmax.f32 %v481, 0.0
        %v847 = vmax.f32 %v483, 0.0
        %v848 = vmax.f32 %v588, 0.0
        %v849 = vmax.f32 %v590, 0.0
        %v850 = vmax.f32 %v695, 0.0
        %v851 = vmax.f32 %v697, 0.0
        %v852 = vmax.f32 %v802, 0.0
        %v853 = vmax.f32 %v804, 0.0
        %v854 = vmax.f32 %v487, 0.0
        %v855 = vmax.f32 %v489, 0.0
        %v856 = vmax.f32 %v594, 0.0
        %v857 = vmax.f32 %v596, 0.0
        %v858 = vmax.f32 %v701, 0.0
        %v859 = vmax.f32 %v703, 0.0
        %v860 = vmax.f32 %v808, 0.0
        %v861 = vmax.f32 %v810, 0.0
        %v862 = vmax.f32 %v493, 0.0
        %v863 = vmax.f32 %v495, 0.0
        %v864 = vmax.f32 %v600, 0.0
        %v865 = vmax.f32 %v602, 0.0
        %v866 = vmax.f32 %v707, 0.0
        %v867 = vmax.f32 %v709, 0.0
        %v868 = vmax.f32 %v814, 0.0
        %v869 = vmax.f32 %v816, 0.0
        %v870 = vmax.f32 %v499, 0.0
        %v871 = vmax.f32 %v501, 0.0
        %v872 = vmax.f32 %v606, 0.0
        %v873 = vmax.f32 %v608, 0.0
        %v874 = vmax.f32 %v713, 0.0
        %v875 = vmax.f32 %v715, 0.0
        %v876 = vmax.f32 %v820, 0.0
        %v877 = vmax.f32 %v822, 0.0
        %v878 = vmax.f32 %v505, 0.0
        %v879 = vmax.f32 %v507, 0.0
        %v880 = vmax.f32 %v612, 0.0
        %v881 = vmax.f32 %v614, 0.0
        %v882 = vmax.f32 %v719, 0.0
        %v883 = vmax.f32 %v721, 0.0
        %v884 = vmax.f32 %v826, 0.0
        %v885 = vmax.f32 %v828, 0.0
        %v886 = vld [vmem:[%s3] sm:$0x1]
        %vm887 = vcmask 457728
        %v889 = vsel %vm887, %v886, 0
        %891 = vmatprep.subr.mxu0 %v831
        %892 = vmatpush1.msra.mxu0 %v830
        %893 = vmatprep.subr.mxu0 %v839
        %894 = vmatpush1.msra.mxu0 %v838
        %895 = vmatprep.subr.mxu0 %v847
        %896 = vmatpush1.msra.mxu0 %v846
        %897 = vmatprep.subr.mxu0 %v855
        %898 = vmatpush1.msra.mxu0 %v854
        %899 = vmatprep.subr.mxu0 %v863
        %900 = vmatpush1.msra.mxu0 %v862
        %901 = vmatprep.subr.mxu0 %v871
        %902 = vmatpush1.msra.mxu0 %v870
        %903 = vmatprep.subr.mxu0 %v879
        %904 = vmatpush1.msra.mxu0 %v878
        %905 = vmatprep.subr.mxu0 0.0
        %906 = vmatpush1.msra.mxu0 0.0
        %907 = vmatprep.subr.mxu0 0.0
        %908 = vmatpush1.msra.mxu0 0.0
        %909 = vmatprep.subr.mxu0 0.0
        %910 = vmatpush1.msra.mxu0 0.0
        %911 = vmatprep.subr.mxu0 0.0
        %912 = vmatpush1.msra.mxu0 0.0
        %913 = vmatprep.subr.mxu0 0.0
        %914 = vmatpush1.msra.mxu0 0.0
        %915 = vmatprep.subr.mxu0 0.0
        %916 = vmatpush1.msra.mxu0 0.0
        %917 = vmatprep.subr.mxu0 0.0
        %918 = vmatpush1.msra.mxu0 0.0
        %919 = vmatprep.subr.mxu0 0.0
        %920 = vmatpush1.msra.mxu0 0.0
        %921 = vmatprep.subr.mxu0 0.0
        %922 = vmatpush1.msra.mxu0 0.0
        %923 = vmatprep.subr.mxu0 0.0
        %924 = vmatpush1.msra.mxu0 0.0
        %925 = vmatprep.subr.mxu0 0.0
        %926 = vmatpush1.msra.mxu0 0.0
        %927 = vmatprep.subr.mxu0 0.0
        %928 = vmatpush1.msra.mxu0 0.0
        %929 = vmatprep.subr.mxu0 0.0
        %930 = vmatpush1.msra.mxu0 0.0
        %931 = vmatprep.subr.mxu0 0.0
        %932 = vmatpush1.msra.mxu0 0.0
        %933 = vmatprep.subr.mxu0 0.0
        %934 = vmatpush1.msra.mxu0 0.0
        %935 = vmatprep.subr.mxu0 0.0
        %936 = vmatpush1.msra.mxu0 0.0
        %937 = vmatprep.subr.mxu0 0.0
        %938 = vmatpush1.msra.mxu0 0.0
        %939 = vmatprep.subr.mxu0 0.0
        %940 = vmatpush1.msra.mxu0 0.0
        %941 = vmatprep.subr.mxu0 0.0
        %942 = vmatpush1.msra.mxu0 0.0
        %943 = vmatprep.subr.mxu0 0.0
        %944 = vmatpush1.msra.mxu0 0.0
        %945 = vmatprep.subr.mxu0 0.0
        %946 = vmatpush1.msra.mxu0 0.0
        %947 = vmatprep.subr.mxu0 0.0
        %948 = vmatpush1.msra.mxu0 0.0
        %949 = vmatprep.subr.mxu0 0.0
        %950 = vmatpush1.msra.mxu0 0.0
        %951 = vmatprep.subr.mxu0 0.0
        %952 = vmatpush1.msra.mxu0 0.0
        %953 = vmatprep.subr.mxu0 0.0
        %954 = vmatpush1.msra.mxu0 0.0
        %955 = vmatprep.mubr.f32.mxu0 0.0
        %956 = vmatmul.mubr.f32.gmra.mrb[0].mxu0 %v889
        %v957 = vpop.f32.mrb[0].mxu0
        %v958 = vadd.f32 0.0, %v957
        %v959 = vpop.f32.mrb[0].mxu0
        %v960 = vadd.f32 0.0, %v959
        %961 = vdwg.mxu0
        %962 = vmatprep.subr.mxu0 %v833
        %963 = vmatpush1.msra.mxu0 %v832
        %964 = vmatprep.subr.mxu0 %v841
        %965 = vmatpush1.msra.mxu0 %v840
        %966 = vmatprep.subr.mxu0 %v849
        %967 = vmatpush1.msra.mxu0 %v848
        %968 = vmatprep.subr.mxu0 %v857
        %969 = vmatpush1.msra.mxu0 %v856
        %970 = vmatprep.subr.mxu0 %v865
        %971 = vmatpush1.msra.mxu0 %v864
        %972 = vmatprep.subr.mxu0 %v873
        %973 = vmatpush1.msra.mxu0 %v872
        %974 = vmatprep.subr.mxu0 %v881
        %975 = vmatpush1.msra.mxu0 %v880
        %976 = vmatprep.subr.mxu0 0.0
        %977 = vmatpush1.msra.mxu0 0.0
        %978 = vmatprep.subr.mxu0 0.0
        %979 = vmatpush1.msra.mxu0 0.0
        %980 = vmatprep.subr.mxu0 0.0
        %981 = vmatpush1.msra.mxu0 0.0
        %982 = vmatprep.subr.mxu0 0.0
        %983 = vmatpush1.msra.mxu0 0.0
        %984 = vmatprep.subr.mxu0 0.0
        %985 = vmatpush1.msra.mxu0 0.0
        %986 = vmatprep.subr.mxu0 0.0
        %987 = vmatpush1.msra.mxu0 0.0
        %988 = vmatprep.subr.mxu0 0.0
        %989 = vmatpush1.msra.mxu0 0.0
        %990 = vmatprep.subr.mxu0 0.0
        %991 = vmatpush1.msra.mxu0 0.0
        %992 = vmatprep.subr.mxu0 0.0
        %993 = vmatpush1.msra.mxu0 0.0
        %994 = vmatprep.subr.mxu0 0.0
        %995 = vmatpush1.msra.mxu0 0.0
        %996 = vmatprep.subr.mxu0 0.0
        %997 = vmatpush1.msra.mxu0 0.0
        %998 = vmatprep.subr.mxu0 0.0
        %999 = vmatpush1.msra.mxu0 0.0
        %1000 = vmatprep.subr.mxu0 0.0
        %1001 = vmatpush1.msra.mxu0 0.0
        %1002 = vmatprep.subr.mxu0 0.0
        %1003 = vmatpush1.msra.mxu0 0.0
        %1004 = vmatprep.subr.mxu0 0.0
        %1005 = vmatpush1.msra.mxu0 0.0
        %1006 = vmatprep.subr.mxu0 0.0
        %1007 = vmatpush1.msra.mxu0 0.0
        %1008 = vmatprep.subr.mxu0 0.0
        %1009 = vmatpush1.msra.mxu0 0.0
        %1010 = vmatprep.subr.mxu0 0.0
        %1011 = vmatpush1.msra.mxu0 0.0
        %1012 = vmatprep.subr.mxu0 0.0
        %1013 = vmatpush1.msra.mxu0 0.0
        %1014 = vmatprep.subr.mxu0 0.0
        %1015 = vmatpush1.msra.mxu0 0.0
        %1016 = vmatprep.subr.mxu0 0.0
        %1017 = vmatpush1.msra.mxu0 0.0
        %1018 = vmatprep.subr.mxu0 0.0
        %1019 = vmatpush1.msra.mxu0 0.0
        %1020 = vmatprep.subr.mxu0 0.0
        %1021 = vmatpush1.msra.mxu0 0.0
        %1022 = vmatprep.subr.mxu0 0.0
        %1023 = vmatpush1.msra.mxu0 0.0
        %1024 = vmatprep.subr.mxu0 0.0
        %1025 = vmatpush1.msra.mxu0 0.0
        %1026 = vmatprep.mubr.f32.mxu0 0.0
        %1027 = vmatmul.mubr.f32.gmra.mrb[0].mxu0 %v889
        %v1028 = vpop.f32.mrb[0].mxu0
        %v1029 = vadd.f32 0.0, %v1028
        %v1030 = vpop.f32.mrb[0].mxu0
        %v1031 = vadd.f32 0.0, %v1030
        %1032 = vdwg.mxu0
        %1033 = vmatprep.subr.mxu0 %v835
        %1034 = vmatpush1.msra.mxu0 %v834
        %1035 = vmatprep.subr.mxu0 %v843
        %1036 = vmatpush1.msra.mxu0 %v842
        %1037 = vmatprep.subr.mxu0 %v851
        %1038 = vmatpush1.msra.mxu0 %v850
        %1039 = vmatprep.subr.mxu0 %v859
        %1040 = vmatpush1.msra.mxu0 %v858
        %1041 = vmatprep.subr.mxu0 %v867
        %1042 = vmatpush1.msra.mxu0 %v866
        %1043 = vmatprep.subr.mxu0 %v875
        %1044 = vmatpush1.msra.mxu0 %v874
        %1045 = vmatprep.subr.mxu0 %v883
        %1046 = vmatpush1.msra.mxu0 %v882
        %1047 = vmatprep.subr.mxu0 0.0
        %1048 = vmatpush1.msra.mxu0 0.0
        %1049 = vmatprep.subr.mxu0 0.0
        %1050 = vmatpush1.msra.mxu0 0.0
        %1051 = vmatprep.subr.mxu0 0.0
        %1052 = vmatpush1.msra.mxu0 0.0
        %1053 = vmatprep.subr.mxu0 0.0
        %1054 = vmatpush1.msra.mxu0 0.0
        %1055 = vmatprep.subr.mxu0 0.0
        %1056 = vmatpush1.msra.mxu0 0.0
        %1057 = vmatprep.subr.mxu0 0.0
        %1058 = vmatpush1.msra.mxu0 0.0
        %1059 = vmatprep.subr.mxu0 0.0
        %1060 = vmatpush1.msra.mxu0 0.0
        %1061 = vmatprep.subr.mxu0 0.0
        %1062 = vmatpush1.msra.mxu0 0.0
        %1063 = vmatprep.subr.mxu0 0.0
        %1064 = vmatpush1.msra.mxu0 0.0
        %1065 = vmatprep.subr.mxu0 0.0
        %1066 = vmatpush1.msra.mxu0 0.0
        %1067 = vmatprep.subr.mxu0 0.0
        %1068 = vmatpush1.msra.mxu0 0.0
        %1069 = vmatprep.subr.mxu0 0.0
        %1070 = vmatpush1.msra.mxu0 0.0
        %1071 = vmatprep.subr.mxu0 0.0
        %1072 = vmatpush1.msra.mxu0 0.0
        %1073 = vmatprep.subr.mxu0 0.0
        %1074 = vmatpush1.msra.mxu0 0.0
        %1075 = vmatprep.subr.mxu0 0.0
        %1076 = vmatpush1.msra.mxu0 0.0
        %1077 = vmatprep.subr.mxu0 0.0
        %1078 = vmatpush1.msra.mxu0 0.0
        %1079 = vmatprep.subr.mxu0 0.0
        %1080 = vmatpush1.msra.mxu0 0.0
        %1081 = vmatprep.subr.mxu0 0.0
        %1082 = vmatpush1.msra.mxu0 0.0
        %1083 = vmatprep.subr.mxu0 0.0
        %1084 = vmatpush1.msra.mxu0 0.0
        %1085 = vmatprep.subr.mxu0 0.0
        %1086 = vmatpush1.msra.mxu0 0.0
        %1087 = vmatprep.subr.mxu0 0.0
        %1088 = vmatpush1.msra.mxu0 0.0
        %1089 = vmatprep.subr.mxu0 0.0
        %1090 = vmatpush1.msra.mxu0 0.0
        %1091 = vmatprep.subr.mxu0 0.0
        %1092 = vmatpush1.msra.mxu0 0.0
        %1093 = vmatprep.subr.mxu0 0.0
        %1094 = vmatpush1.msra.mxu0 0.0
        %1095 = vmatprep.subr.mxu0 0.0
        %1096 = vmatpush1.msra.mxu0 0.0
        %1097 = vmatprep.mubr.f32.mxu0 0.0
        %1098 = vmatmul.mubr.f32.gmra.mrb[0].mxu0 %v889
        %v1099 = vpop.f32.mrb[0].mxu0
        %v1100 = vadd.f32 0.0, %v1099
        %v1101 = vpop.f32.mrb[0].mxu0
        %v1102 = vadd.f32 0.0, %v1101
        %1103 = vdwg.mxu0
        %1104 = vmatprep.subr.mxu0 %v837
        %1105 = vmatpush1.msra.mxu0 %v836
        %1106 = vmatprep.subr.mxu0 %v845
        %1107 = vmatpush1.msra.mxu0 %v844
        %1108 = vmatprep.subr.mxu0 %v853
        %1109 = vmatpush1.msra.mxu0 %v852
        %1110 = vmatprep.subr.mxu0 %v861
        %1111 = vmatpush1.msra.mxu0 %v860
        %1112 = vmatprep.subr.mxu0 %v869
        %1113 = vmatpush1.msra.mxu0 %v868
        %1114 = vmatprep.subr.mxu0 %v877
        %1115 = vmatpush1.msra.mxu0 %v876
        %1116 = vmatprep.subr.mxu0 %v885
        %1117 = vmatpush1.msra.mxu0 %v884
        %1118 = vmatprep.subr.mxu0 0.0
        %1119 = vmatpush1.msra.mxu0 0.0
        %1120 = vmatprep.subr.mxu0 0.0
        %1121 = vmatpush1.msra.mxu0 0.0
        %1122 = vmatprep.subr.mxu0 0.0
        %1123 = vmatpush1.msra.mxu0 0.0
        %1124 = vmatprep.subr.mxu0 0.0
        %1125 = vmatpush1.msra.mxu0 0.0
        %1126 = vmatprep.subr.mxu0 0.0
        %1127 = vmatpush1.msra.mxu0 0.0
        %1128 = vmatprep.subr.mxu0 0.0
        %1129 = vmatpush1.msra.mxu0 0.0
        %1130 = vmatprep.subr.mxu0 0.0
        %1131 = vmatpush1.msra.mxu0 0.0
        %1132 = vmatprep.subr.mxu0 0.0
        %1133 = vmatpush1.msra.mxu0 0.0
        %1134 = vmatprep.subr.mxu0 0.0
        %1135 = vmatpush1.msra.mxu0 0.0
        %1136 = vmatprep.subr.mxu0 0.0
        %1137 = vmatpush1.msra.mxu0 0.0
        %1138 = vmatprep.subr.mxu0 0.0
        %1139 = vmatpush1.msra.mxu0 0.0
        %1140 = vmatprep.subr.mxu0 0.0
        %1141 = vmatpush1.msra.mxu0 0.0
        %1142 = vmatprep.subr.mxu0 0.0
        %1143 = vmatpush1.msra.mxu0 0.0
        %1144 = vmatprep.subr.mxu0 0.0
        %1145 = vmatpush1.msra.mxu0 0.0
        %1146 = vmatprep.subr.mxu0 0.0
        %1147 = vmatpush1.msra.mxu0 0.0
        %1148 = vmatprep.subr.mxu0 0.0
        %1149 = vmatpush1.msra.mxu0 0.0
        %1150 = vmatprep.subr.mxu0 0.0
        %1151 = vmatpush1.msra.mxu0 0.0
        %1152 = vmatprep.subr.mxu0 0.0
        %1153 = vmatpush1.msra.mxu0 0.0
        %1154 = vmatprep.subr.mxu0 0.0
        %1155 = vmatpush1.msra.mxu0 0.0
        %1156 = vmatprep.subr.mxu0 0.0
        %1157 = vmatpush1.msra.mxu0 0.0
        %1158 = vmatprep.subr.mxu0 0.0
        %1159 = vmatpush1.msra.mxu0 0.0
        %1160 = vmatprep.subr.mxu0 0.0
        %1161 = vmatpush1.msra.mxu0 0.0
        %1162 = vmatprep.subr.mxu0 0.0
        %1163 = vmatpush1.msra.mxu0 0.0
        %1164 = vmatprep.subr.mxu0 0.0
        %1165 = vmatpush1.msra.mxu0 0.0
        %1166 = vmatprep.subr.mxu0 0.0
        %1167 = vmatpush1.msra.mxu0 0.0
        %1168 = vmatprep.mubr.f32.mxu0 0.0
        %1169 = vmatmul.mubr.f32.gmra.mrb[0].mxu0 %v889
        %v1170 = vpop.f32.mrb[0].mxu0
        %v1171 = vadd.f32 0.0, %v1170
        %v1172 = vpop.f32.mrb[0].mxu0
        %v1173 = vadd.f32 0.0, %v1172
        %1174 = vdwg.mxu0
        %v1183 = vcombine.low %v958, %v960
        %v1184 = vcombine.low %v1029, %v1031
        %v1185 = vcombine.low %v1100, %v1102
        %v1186 = vcombine.low %v1171, %v1173
        %v1188 = vunpack.c.l.s4 1966171168
        %v1189 = vunpack.c.0.s8 %v1188
        %v1190 = vlaneseq
        %v1191 = vshrl.u32 %v1190, 7
        %v1192 = vsub.s32 %v1189, %v1191
        %v1193 = vrot.slane %v1183, %v1192
        %v1195 = vunpack.c.l.s4 1966171168
        %v1196 = vunpack.c.0.s8 %v1195
        %v1197 = vlaneseq
        %v1198 = vshrl.u32 %v1197, 7
        %v1199 = vsub.s32 %v1196, %v1198
        %v1200 = vrot.slane %v1184, %v1199
        %v1202 = vunpack.c.l.s4 1966171168
        %v1203 = vunpack.c.0.s8 %v1202
        %v1204 = vlaneseq
        %v1205 = vshrl.u32 %v1204, 7
        %v1206 = vsub.s32 %v1203, %v1205
        %v1207 = vrot.slane %v1185, %v1206
        %v1209 = vunpack.c.l.s4 1966171168
        %v1210 = vunpack.c.0.s8 %v1209
        %v1211 = vlaneseq
        %v1212 = vshrl.u32 %v1211, 7
        %v1213 = vsub.s32 %v1210, %v1212
        %v1214 = vrot.slane %v1186, %v1213
        %v1215 = vcombine.low %v1193, %v1200
        %v1216 = vcombine.low %v1207, %v1214
        %v1218 = vunpack.c.l.s4 1966171168
        %v1219 = vunpack.c.0.s8 %v1218
        %v1220 = vlaneseq
        %v1221 = vshrl.u32 %v1220, 7
        %v1222 = vsub.s32 %v1219, %v1221
        %v1223 = vrot.slane %v1215, %v1222
        %v1225 = vunpack.c.l.s4 1966171168
        %v1226 = vunpack.c.0.s8 %v1225
        %v1227 = vlaneseq
        %v1228 = vshrl.u32 %v1227, 7
        %v1229 = vsub.s32 %v1226, %v1228
        %v1230 = vrot.slane %v1216, %v1229
        %v1231 = vcombine.low %v1223, %v1230
        %1233 = vst [vmem:[%s291] sm:$0xff] %v1231
        %s1234 = sand.u32 %s120, 1
        %s1235 = scalar_lea.sflag [#allocation4], %s1234
        %s1236 = sand.u32 %s120, 1
        %s1237 = smul.addr %s1236, 8
        %s1238 = scalar_lea.vmem [#allocation3], %s1237
        // Predicated region
        $region60: #{inception_features.15} parent=54 // pred_check
          %p1239 = pneg %p130
        $region61: #{inception_features.15} parent=54 // pred_check_branch
          %1241 = sbr.rel (%p1239) target = $region63
        $region62: #{inception_features.15} parent=54 // pred_region
          %s1242 = smul.u32 8, %s18
          %s1244 = ssub.s32 128, 128
          %1245 = vsyncadd %s1235, %s1244
          %s1246 = smul.addr %s1242, 16
          %s1247 = scalar_lea.hbm %s4, %s1246
          %s1249 = sshll.u32 %s1238, 4
          %s1250 = int_to_ptr.vmem [resolvable:$true] %s1249
          %1252 = dma.vmem_to_hbm [thread:$0]  %s1250, 128, %s1247, %s1235
        $region63: #{inception_features.15} parent=54 // pred_fallthru
          _
      $region55: #{inception_features.15} parent=5 // pred_fallthru
        _
      %p1253 = scmp.le.s32.totalorder 2, %s13
      // Predicated region
      $region64: #{inception_features.15} parent=5 // pred_check
        %p1254 = pneg %p1253
      $region65: #{inception_features.15} parent=5 // pred_check_branch
        %1256 = sbr.rel (%p1254) target = $region67
      $region66: #{inception_features.15} parent=5 // pred_region
        %s1257 = ssub.s32 %s13, 2
        // Predicated region
        $region68: #{inception_features.15} parent=66 // pred_check
          %p1258 = pneg %p136
        $region69: #{inception_features.15} parent=66 // pred_check_branch
          %1260 = sbr.rel (%p1258) target = $region71
        $region70: #{inception_features.15} parent=66 // pred_region
          %s1261 = sand.u32 %s121, 1
          %s1262 = scalar_lea.sflag [#allocation4], %s1261
          %s1263 = sand.u32 %s121, 1
          %s1264 = smul.addr %s1263, 8
          %s1265 = scalar_lea.vmem [#allocation3], %s1264
          %1266 = dma.done %s1262, 128
        $region71: #{inception_features.15} parent=66 // pred_fallthru
          _
      $region67: #{inception_features.15} parent=5 // pred_fallthru
        _
    $region6: #{inception_features.15} parent=1 // loop_footer
      %s17 = sadd.s32 1, %s13
    $region7: #{inception_features.15} parent=1 // loop_footer_branch
      %12 = sbr.rel target = $region3
    $region8: #{inception_features.15} parent=1 // loop_exit
      _
    %1267 = vsyncpa [#allocation4], 1
    %s1268 = scalar_lea.sflag [#allocation4], 1
    %1269 = vsyncpa %s1268, 1

</llo_original>
